<compile_context>
chip_gen: v6e
topology: v6e:2x2x1
jax: 0.10.0
libtpu: 0.0.40
codegen_flags: <defaults>
</compile_context>

<pallas_src>
import jax
import jax.numpy as jnp
from jax import lax
from jax.experimental import pallas as pl
from jax.experimental.pallas import tpu as pltpu

EPS = 1e-5


# ---------------------------------------------------------------------------
# Pass 1: conv (9 shifted matmuls) + per-tile partial BN statistics
# ---------------------------------------------------------------------------
def _make_conv_stats_kernel(th, w, cin, kh, kw, cpad):
    def kernel(xp_ref, w_ref, y_ref, stats_ref):
        # xp_ref   : (Hp, Wp, Cin)      padded input rows for this batch element
        # w_ref    : (KH*KW, Cin, Cpad) reordered conv weights (resident)
        # y_ref    : (TH*W, Cpad)       pre-BN conv output tile (lane-dense)
        # stats_ref: (2, Cpad)          per-tile [sum, sum-of-squares]
        h0 = pl.program_id(1) * th
        acc = jnp.zeros((th * w, cpad), dtype=jnp.float32)
        for di in range(kh):          # static 3x3 -> unrolled at trace time
            for dj in range(kw):
                xs = xp_ref[pl.ds(h0 + di, th), pl.ds(dj, w), :]
                xs = xs.reshape(th * w, cin)        # collapse leading dims only
                acc = acc + jnp.dot(xs, w_ref[di * kw + dj],
                                    preferred_element_type=jnp.float32)
        y_ref[...] = acc
        stats_ref[pl.ds(0, 1), :] = jnp.sum(acc, axis=0, keepdims=True)
        stats_ref[pl.ds(1, 1), :] = jnp.sum(acc * acc, axis=0, keepdims=True)

    return kernel


# ---------------------------------------------------------------------------
# Pass 2: y * scale + shift, then ReLU  (scale/shift fold BN gamma/beta/stats)
# ---------------------------------------------------------------------------
def _bn_relu_kernel(y_ref, scale_ref, shift_ref, o_ref):
    o_ref[...] = jnp.maximum(y_ref[...] * scale_ref[...] + shift_ref[...], 0.0)


# ---------------------------------------------------------------------------
# Tiling helpers (static Python ints under jit)
# ---------------------------------------------------------------------------
def _pick_tile_h(h, w, max_rows=2048):
    # Largest divisor of H whose tile (TH*W rows) is sublane-aligned and small
    # enough to double-buffer comfortably in VMEM on every TPU generation.
    for th in range(h, 0, -1):
        if h % th == 0 and (th * w) % 8 == 0 and th * w <= max_rows:
            return th
    return h


def _pick_tile_m(m, max_rows=2048):
    for tm in range(min(m, max_rows), 0, -1):
        if m % tm == 0 and tm % 8 == 0:
            return tm
    return m


# ---------------------------------------------------------------------------
# Wrapper
# ---------------------------------------------------------------------------
@jax.jit
def conv_block_forward(x_nchw, weight_oihw, bias, gamma, beta):
    # NOTE: `bias` is intentionally unused in the kernels: a per-channel constant
    # added before training-mode BatchNorm is exactly removed by the mean
    # subtraction, so the forward output is unchanged.
    del bias

    n, cin, h, w = x_nchw.shape
    cout, _, kh, kw = weight_oihw.shape
    cpad = ((cout + 127) // 128) * 128          # lane-dense output channels

    # NHWC + 'SAME' spatial zero-padding (stride 1, kernel 3 -> pad 1).
    # TODO(synk): the surrounding model consumes NCHW, so the NCHW<->NHWC
    # transposes stay in the wrapper; fuse/drop them if the caller can use NHWC.
    x_nhwc = jnp.transpose(x_nchw, (0, 2, 3, 1))
    ph, pw = kh // 2, kw // 2
    xp = jnp.pad(x_nhwc, ((0, 0), (ph, ph), (pw, pw), (0, 0)))
    hp, wp = h + 2 * ph, w + 2 * pw

    # OIHW -> (kh*kw, Cin, Cpad), matching the (di, dj) loop order in the kernel.
    wmat = jnp.transpose(weight_oihw, (2, 3, 1, 0)).reshape(kh * kw, cin, cout)
    wmat = jnp.pad(wmat, ((0, 0), (0, 0), (0, cpad - cout)))

    th = _pick_tile_h(h, w)
    ht = h // th
    m = n * h * w
    rows = th * w                                 # rows per pass-1 tile

    conv_kernel = _make_conv_stats_kernel(th, w, cin, kh, kw, cpad)
    y_flat, stats = pl.pallas_call(
        conv_kernel,
        out_shape=(
            jax.ShapeDtypeStruct((m, cpad), jnp.float32),      # pre-BN conv out
            jax.ShapeDtypeStruct((n, ht, 2, cpad), jnp.float32),  # partial stats
        ),
        grid_spec=pltpu.PrefetchScalarGridSpec(
            num_scalar_prefetch=0,
            grid=(n, ht),
            in_specs=[
                # one padded batch element, resident across the H-tile axis
                pl.BlockSpec((None, hp, wp, cin), lambda b, hb: (b, 0, 0, 0)),
                # full reordered weights, resident across the whole grid
                pl.BlockSpec((kh * kw, cin, cpad), lambda b, hb: (0, 0, 0)),
            ],
            out_specs=[
                pl.BlockSpec((rows, cpad), lambda b, hb: (b * ht + hb, 0)),
                pl.BlockSpec((None, None, 2, cpad), lambda b, hb: (b, hb, 0, 0)),
            ],
        ),
        compiler_params=pltpu.CompilerParams(
            dimension_semantics=("parallel", "parallel")),
    )(xp, wmat)

    # Tiny cross-tile BN reduction (N*HT x 128 floats) in plain JAX.
    csum = jnp.sum(stats[:, :, 0, :], axis=(0, 1))
    csumsq = jnp.sum(stats[:, :, 1, :], axis=(0, 1))
    mean = csum / m
    var = jnp.maximum(csumsq / m - mean * mean, 0.0)   # biased batch variance
    inv = lax.rsqrt(var + EPS)
    g_pad = jnp.pad(gamma, (0, cpad - cout))
    b_pad = jnp.pad(beta, (0, cpad - cout))
    scale = (g_pad * inv).reshape(1, cpad)
    shift = (b_pad - mean * g_pad * inv).reshape(1, cpad)

    tm2 = _pick_tile_m(m)
    out_flat = pl.pallas_call(
        _bn_relu_kernel,
        out_shape=jax.ShapeDtypeStruct((m, cpad), jnp.float32),
        grid_spec=pltpu.PrefetchScalarGridSpec(
            num_scalar_prefetch=0,
            grid=(m // tm2,),
            in_specs=[
                pl.BlockSpec((tm2, cpad), lambda i: (i, 0)),
                pl.BlockSpec((1, cpad), lambda i: (0, 0)),
                pl.BlockSpec((1, cpad), lambda i: (0, 0)),
            ],
            out_specs=pl.BlockSpec((tm2, cpad), lambda i: (i, 0)),
        ),
        compiler_params=pltpu.CompilerParams(
            dimension_semantics=("parallel",)),
    )(y_flat, scale, shift)

    out = out_flat[:, :cout].reshape(n, h, w, cout)
    return jnp.transpose(out, (0, 3, 1, 2))


# ---------------------------------------------------------------------------
# Pure-JAX reference (matches the PyTorch module's forward semantics)
# ---------------------------------------------------------------------------
def _reference(x_nchw, weight_oihw, bias, gamma, beta):
    y = lax.conv_general_dilated(
        x_nchw, weight_oihw, window_strides=(1, 1), padding="SAME",
        dimension_numbers=("NCHW", "OIHW", "NCHW"))
    y = y + bias[None, :, None, None]
    mean = jnp.mean(y, axis=(0, 2, 3), keepdims=True)
    var = jnp.mean((y - mean) ** 2, axis=(0, 2, 3), keepdims=True)
    y = (y - mean) * lax.rsqrt(var + EPS)
    y = y * gamma[None, :, None, None] + beta[None, :, None, None]
    return jnp.maximum(y, 0.0)


if __name__ == "__main__":
    # Small shapes consistent with the module: N=2, C_in=4, H=W=16, C_out=8, k=3
    N, C_IN, H, W = 2, 4, 16, 16
    C_OUT, KH, KW = 8, 3, 3

    key = jax.random.PRNGKey(0)
    kx, kw_, kb, kg, kbeta = jax.random.split(key, 5)
    x = jax.random.normal(kx, (N, C_IN, H, W), dtype=jnp.float32)
    weight = 0.1 * jax.random.normal(kw_, (C_OUT, C_IN, KH, KW), dtype=jnp.float32)
    bias = 0.05 * jax.random.normal(kb, (C_OUT,), dtype=jnp.float32)
    gamma = 1.0 + 0.1 * jax.random.normal(kg, (C_OUT,), dtype=jnp.float32)
    beta = 0.1 * jax.random.normal(kbeta, (C_OUT,), dtype=jnp.float32)

    out = conv_block_forward(x, weight, bias, gamma, beta)
    out = jax.block_until_ready(out)

    ref = _reference(x, weight, bias, gamma, beta)
    assert out.shape == (N, C_OUT, H, W), out.shape
    assert jnp.allclose(out, ref, atol=1e-4, rtol=1e-4), float(
        jnp.max(jnp.abs(out - ref)))

    print("KERNEL_OK")
</pallas_src>

<mosaic_0001>
module attributes {stable_mosaic.version = 11 : i64} {
  func.func @kernel(%arg0: i32, %arg1: i32, %arg2: memref<1x18x18x4xf32, #tpu.memory_space<vmem>>, %arg3: memref<9x4x128xf32, #tpu.memory_space<vmem>>, %arg4: memref<256x128xf32, #tpu.memory_space<vmem>>, %arg5: memref<1x1x2x128xf32, #tpu.memory_space<vmem>>) attributes {dimension_semantics = [#tpu.dimension_semantics<parallel>, #tpu.dimension_semantics<parallel>], iteration_bounds = array<i64: 2, 1>, scalar_prefetch = 0 : i64, scratch_operands = 0 : i64, tpu.core_type = #tpu.core_type<tc>, window_params = [{transform_indices = @transform_0, window_bounds = array<i64: 1, 18, 18, 4>}, {pipeline_mode = #tpu.pipeline_mode<synchronous>, transform_indices = @transform_1, window_bounds = array<i64: 9, 4, 128>}, {transform_indices = @transform_2, window_bounds = array<i64: 256, 128>}, {transform_indices = @transform_3, window_bounds = array<i64: 1, 1, 2, 128>}]} {
    %c16_i32 = arith.constant 16 : i32
    %0 = arith.muli %arg1, %c16_i32 : i32
    %cst = arith.constant 0.000000e+00 : f32
    %1 = vector.broadcast %cst : f32 to vector<256x128xf32>
    %c0_i32 = arith.constant 0 : i32
    %2 = arith.addi %0, %c0_i32 : i32
    %c0 = arith.constant 0 : index
    %3 = arith.index_cast %2 : i32 to index
    %c0_0 = arith.constant 0 : index
    %c0_1 = arith.constant 0 : index
    %4 = vector.load %arg2[%c0, %3, %c0_0, %c0_1] : memref<1x18x18x4xf32, #tpu.memory_space<vmem>>, vector<1x16x16x4xf32>
    %5 = vector.shape_cast %4 : vector<1x16x16x4xf32> to vector<16x16x4xf32>
    %6 = vector.shape_cast %5 : vector<16x16x4xf32> to vector<256x4xf32>
    %c0_2 = arith.constant 0 : index
    %c0_3 = arith.constant 0 : index
    %c0_4 = arith.constant 0 : index
    %7 = vector.load %arg3[%c0_2, %c0_3, %c0_4] : memref<9x4x128xf32, #tpu.memory_space<vmem>>, vector<1x4x128xf32>
    %8 = vector.shape_cast %7 : vector<1x4x128xf32> to vector<4x128xf32>
    %cst_5 = arith.constant dense<0.000000e+00> : vector<256x128xf32>
    %9 = tpu.matmul %6, %8, %cst_5 {dimension_numbers = #tpu.dot_dimension_numbers<[1], [0], [0], [1], [0, 0, 1, 1], [], []>} : vector<256x4xf32>, vector<4x128xf32>, vector<256x128xf32> -> vector<256x128xf32>
    %10 = arith.addf %1, %9 : vector<256x128xf32>
    %c0_i32_6 = arith.constant 0 : i32
    %11 = arith.addi %0, %c0_i32_6 : i32
    %c0_7 = arith.constant 0 : index
    %12 = arith.index_cast %11 : i32 to index
    %c1 = arith.constant 1 : index
    %c0_8 = arith.constant 0 : index
    %13 = vector.load %arg2[%c0_7, %12, %c1, %c0_8] : memref<1x18x18x4xf32, #tpu.memory_space<vmem>>, vector<1x16x16x4xf32>
    %14 = vector.shape_cast %13 : vector<1x16x16x4xf32> to vector<16x16x4xf32>
    %15 = vector.shape_cast %14 : vector<16x16x4xf32> to vector<256x4xf32>
    %c1_9 = arith.constant 1 : index
    %c0_10 = arith.constant 0 : index
    %c0_11 = arith.constant 0 : index
    %16 = vector.load %arg3[%c1_9, %c0_10, %c0_11] : memref<9x4x128xf32, #tpu.memory_space<vmem>>, vector<1x4x128xf32>
    %17 = vector.shape_cast %16 : vector<1x4x128xf32> to vector<4x128xf32>
    %cst_12 = arith.constant dense<0.000000e+00> : vector<256x128xf32>
    %18 = tpu.matmul %15, %17, %cst_12 {dimension_numbers = #tpu.dot_dimension_numbers<[1], [0], [0], [1], [0, 0, 1, 1], [], []>} : vector<256x4xf32>, vector<4x128xf32>, vector<256x128xf32> -> vector<256x128xf32>
    %19 = arith.addf %10, %18 : vector<256x128xf32>
    %c0_i32_13 = arith.constant 0 : i32
    %20 = arith.addi %0, %c0_i32_13 : i32
    %c0_14 = arith.constant 0 : index
    %21 = arith.index_cast %20 : i32 to index
    %c2 = arith.constant 2 : index
    %c0_15 = arith.constant 0 : index
    %22 = vector.load %arg2[%c0_14, %21, %c2, %c0_15] : memref<1x18x18x4xf32, #tpu.memory_space<vmem>>, vector<1x16x16x4xf32>
    %23 = vector.shape_cast %22 : vector<1x16x16x4xf32> to vector<16x16x4xf32>
    %24 = vector.shape_cast %23 : vector<16x16x4xf32> to vector<256x4xf32>
    %c2_16 = arith.constant 2 : index
    %c0_17 = arith.constant 0 : index
    %c0_18 = arith.constant 0 : index
    %25 = vector.load %arg3[%c2_16, %c0_17, %c0_18] : memref<9x4x128xf32, #tpu.memory_space<vmem>>, vector<1x4x128xf32>
    %26 = vector.shape_cast %25 : vector<1x4x128xf32> to vector<4x128xf32>
    %cst_19 = arith.constant dense<0.000000e+00> : vector<256x128xf32>
    %27 = tpu.matmul %24, %26, %cst_19 {dimension_numbers = #tpu.dot_dimension_numbers<[1], [0], [0], [1], [0, 0, 1, 1], [], []>} : vector<256x4xf32>, vector<4x128xf32>, vector<256x128xf32> -> vector<256x128xf32>
    %28 = arith.addf %19, %27 : vector<256x128xf32>
    %c1_i32 = arith.constant 1 : i32
    %29 = arith.addi %0, %c1_i32 : i32
    %c0_20 = arith.constant 0 : index
    %30 = arith.index_cast %29 : i32 to index
    %c0_21 = arith.constant 0 : index
    %c0_22 = arith.constant 0 : index
    %31 = vector.load %arg2[%c0_20, %30, %c0_21, %c0_22] : memref<1x18x18x4xf32, #tpu.memory_space<vmem>>, vector<1x16x16x4xf32>
    %32 = vector.shape_cast %31 : vector<1x16x16x4xf32> to vector<16x16x4xf32>
    %33 = vector.shape_cast %32 : vector<16x16x4xf32> to vector<256x4xf32>
    %c3 = arith.constant 3 : index
    %c0_23 = arith.constant 0 : index
    %c0_24 = arith.constant 0 : index
    %34 = vector.load %arg3[%c3, %c0_23, %c0_24] : memref<9x4x128xf32, #tpu.memory_space<vmem>>, vector<1x4x128xf32>
    %35 = vector.shape_cast %34 : vector<1x4x128xf32> to vector<4x128xf32>
    %cst_25 = arith.constant dense<0.000000e+00> : vector<256x128xf32>
    %36 = tpu.matmul %33, %35, %cst_25 {dimension_numbers = #tpu.dot_dimension_numbers<[1], [0], [0], [1], [0, 0, 1, 1], [], []>} : vector<256x4xf32>, vector<4x128xf32>, vector<256x128xf32> -> vector<256x128xf32>
    %37 = arith.addf %28, %36 : vector<256x128xf32>
    %c1_i32_26 = arith.constant 1 : i32
    %38 = arith.addi %0, %c1_i32_26 : i32
    %c0_27 = arith.constant 0 : index
    %39 = arith.index_cast %38 : i32 to index
    %c1_28 = arith.constant 1 : index
    %c0_29 = arith.constant 0 : index
    %40 = vector.load %arg2[%c0_27, %39, %c1_28, %c0_29] : memref<1x18x18x4xf32, #tpu.memory_space<vmem>>, vector<1x16x16x4xf32>
    %41 = vector.shape_cast %40 : vector<1x16x16x4xf32> to vector<16x16x4xf32>
    %42 = vector.shape_cast %41 : vector<16x16x4xf32> to vector<256x4xf32>
    %c4 = arith.constant 4 : index
    %c0_30 = arith.constant 0 : index
    %c0_31 = arith.constant 0 : index
    %43 = vector.load %arg3[%c4, %c0_30, %c0_31] : memref<9x4x128xf32, #tpu.memory_space<vmem>>, vector<1x4x128xf32>
    %44 = vector.shape_cast %43 : vector<1x4x128xf32> to vector<4x128xf32>
    %cst_32 = arith.constant dense<0.000000e+00> : vector<256x128xf32>
    %45 = tpu.matmul %42, %44, %cst_32 {dimension_numbers = #tpu.dot_dimension_numbers<[1], [0], [0], [1], [0, 0, 1, 1], [], []>} : vector<256x4xf32>, vector<4x128xf32>, vector<256x128xf32> -> vector<256x128xf32>
    %46 = arith.addf %37, %45 : vector<256x128xf32>
    %c1_i32_33 = arith.constant 1 : i32
    %47 = arith.addi %0, %c1_i32_33 : i32
    %c0_34 = arith.constant 0 : index
    %48 = arith.index_cast %47 : i32 to index
    %c2_35 = arith.constant 2 : index
    %c0_36 = arith.constant 0 : index
    %49 = vector.load %arg2[%c0_34, %48, %c2_35, %c0_36] : memref<1x18x18x4xf32, #tpu.memory_space<vmem>>, vector<1x16x16x4xf32>
    %50 = vector.shape_cast %49 : vector<1x16x16x4xf32> to vector<16x16x4xf32>
    %51 = vector.shape_cast %50 : vector<16x16x4xf32> to vector<256x4xf32>
    %c5 = arith.constant 5 : index
    %c0_37 = arith.constant 0 : index
    %c0_38 = arith.constant 0 : index
    %52 = vector.load %arg3[%c5, %c0_37, %c0_38] : memref<9x4x128xf32, #tpu.memory_space<vmem>>, vector<1x4x128xf32>
    %53 = vector.shape_cast %52 : vector<1x4x128xf32> to vector<4x128xf32>
    %cst_39 = arith.constant dense<0.000000e+00> : vector<256x128xf32>
    %54 = tpu.matmul %51, %53, %cst_39 {dimension_numbers = #tpu.dot_dimension_numbers<[1], [0], [0], [1], [0, 0, 1, 1], [], []>} : vector<256x4xf32>, vector<4x128xf32>, vector<256x128xf32> -> vector<256x128xf32>
    %55 = arith.addf %46, %54 : vector<256x128xf32>
    %c2_i32 = arith.constant 2 : i32
    %56 = arith.addi %0, %c2_i32 : i32
    %c0_40 = arith.constant 0 : index
    %57 = arith.index_cast %56 : i32 to index
    %c0_41 = arith.constant 0 : index
    %c0_42 = arith.constant 0 : index
    %58 = vector.load %arg2[%c0_40, %57, %c0_41, %c0_42] : memref<1x18x18x4xf32, #tpu.memory_space<vmem>>, vector<1x16x16x4xf32>
    %59 = vector.shape_cast %58 : vector<1x16x16x4xf32> to vector<16x16x4xf32>
    %60 = vector.shape_cast %59 : vector<16x16x4xf32> to vector<256x4xf32>
    %c6 = arith.constant 6 : index
    %c0_43 = arith.constant 0 : index
    %c0_44 = arith.constant 0 : index
    %61 = vector.load %arg3[%c6, %c0_43, %c0_44] : memref<9x4x128xf32, #tpu.memory_space<vmem>>, vector<1x4x128xf32>
    %62 = vector.shape_cast %61 : vector<1x4x128xf32> to vector<4x128xf32>
    %cst_45 = arith.constant dense<0.000000e+00> : vector<256x128xf32>
    %63 = tpu.matmul %60, %62, %cst_45 {dimension_numbers = #tpu.dot_dimension_numbers<[1], [0], [0], [1], [0, 0, 1, 1], [], []>} : vector<256x4xf32>, vector<4x128xf32>, vector<256x128xf32> -> vector<256x128xf32>
    %64 = arith.addf %55, %63 : vector<256x128xf32>
    %c2_i32_46 = arith.constant 2 : i32
    %65 = arith.addi %0, %c2_i32_46 : i32
    %c0_47 = arith.constant 0 : index
    %66 = arith.index_cast %65 : i32 to index
    %c1_48 = arith.constant 1 : index
    %c0_49 = arith.constant 0 : index
    %67 = vector.load %arg2[%c0_47, %66, %c1_48, %c0_49] : memref<1x18x18x4xf32, #tpu.memory_space<vmem>>, vector<1x16x16x4xf32>
    %68 = vector.shape_cast %67 : vector<1x16x16x4xf32> to vector<16x16x4xf32>
    %69 = vector.shape_cast %68 : vector<16x16x4xf32> to vector<256x4xf32>
    %c7 = arith.constant 7 : index
    %c0_50 = arith.constant 0 : index
    %c0_51 = arith.constant 0 : index
    %70 = vector.load %arg3[%c7, %c0_50, %c0_51] : memref<9x4x128xf32, #tpu.memory_space<vmem>>, vector<1x4x128xf32>
    %71 = vector.shape_cast %70 : vector<1x4x128xf32> to vector<4x128xf32>
    %cst_52 = arith.constant dense<0.000000e+00> : vector<256x128xf32>
    %72 = tpu.matmul %69, %71, %cst_52 {dimension_numbers = #tpu.dot_dimension_numbers<[1], [0], [0], [1], [0, 0, 1, 1], [], []>} : vector<256x4xf32>, vector<4x128xf32>, vector<256x128xf32> -> vector<256x128xf32>
    %73 = arith.addf %64, %72 : vector<256x128xf32>
    %c2_i32_53 = arith.constant 2 : i32
    %74 = arith.addi %0, %c2_i32_53 : i32
    %c0_54 = arith.constant 0 : index
    %75 = arith.index_cast %74 : i32 to index
    %c2_55 = arith.constant 2 : index
    %c0_56 = arith.constant 0 : index
    %76 = vector.load %arg2[%c0_54, %75, %c2_55, %c0_56] : memref<1x18x18x4xf32, #tpu.memory_space<vmem>>, vector<1x16x16x4xf32>
    %77 = vector.shape_cast %76 : vector<1x16x16x4xf32> to vector<16x16x4xf32>
    %78 = vector.shape_cast %77 : vector<16x16x4xf32> to vector<256x4xf32>
    %c8 = arith.constant 8 : index
    %c0_57 = arith.constant 0 : index
    %c0_58 = arith.constant 0 : index
    %79 = vector.load %arg3[%c8, %c0_57, %c0_58] : memref<9x4x128xf32, #tpu.memory_space<vmem>>, vector<1x4x128xf32>
    %80 = vector.shape_cast %79 : vector<1x4x128xf32> to vector<4x128xf32>
    %cst_59 = arith.constant dense<0.000000e+00> : vector<256x128xf32>
    %81 = tpu.matmul %78, %80, %cst_59 {dimension_numbers = #tpu.dot_dimension_numbers<[1], [0], [0], [1], [0, 0, 1, 1], [], []>} : vector<256x4xf32>, vector<4x128xf32>, vector<256x128xf32> -> vector<256x128xf32>
    %82 = arith.addf %73, %81 : vector<256x128xf32>
    %c0_60 = arith.constant 0 : index
    %c0_61 = arith.constant 0 : index
    %83 = vector.load %arg4[%c0_60, %c0_61] : memref<256x128xf32, #tpu.memory_space<vmem>>, vector<256x128xf32>
    tpu.vector_store %arg4[%c0_60, %c0_61], %82 {strides = array<i32>} : memref<256x128xf32, #tpu.memory_space<vmem>>, vector<256x128xf32>,
    %cst_62 = arith.constant dense<0.000000e+00> : vector<128xf32>
    %84 = vector.multi_reduction <add>, %82, %cst_62 [0] : vector<256x128xf32> to vector<128xf32>
    %85 = vector.shape_cast %84 : vector<128xf32> to vector<1x128xf32>
    %c0_63 = arith.constant 0 : index
    %c0_64 = arith.constant 0 : index
    %c0_65 = arith.constant 0 : index
    %c0_66 = arith.constant 0 : index
    %86 = vector.load %arg5[%c0_63, %c0_64, %c0_65, %c0_66] : memref<1x1x2x128xf32, #tpu.memory_space<vmem>>, vector<1x1x1x128xf32>
    %87 = vector.shape_cast %86 : vector<1x1x1x128xf32> to vector<1x128xf32>
    %88 = vector.shape_cast %85 : vector<1x128xf32> to vector<1x1x1x128xf32>
    tpu.vector_store %arg5[%c0_63, %c0_64, %c0_65, %c0_66], %88 {strides = array<i32>} : memref<1x1x2x128xf32, #tpu.memory_space<vmem>>, vector<1x1x1x128xf32>,
    %89 = arith.mulf %82, %82 : vector<256x128xf32>
    %cst_67 = arith.constant dense<0.000000e+00> : vector<128xf32>
    %90 = vector.multi_reduction <add>, %89, %cst_67 [0] : vector<256x128xf32> to vector<128xf32>
    %91 = vector.shape_cast %90 : vector<128xf32> to vector<1x128xf32>
    %c0_68 = arith.constant 0 : index
    %c0_69 = arith.constant 0 : index
    %c1_70 = arith.constant 1 : index
    %c0_71 = arith.constant 0 : index
    %92 = vector.load %arg5[%c0_68, %c0_69, %c1_70, %c0_71] : memref<1x1x2x128xf32, #tpu.memory_space<vmem>>, vector<1x1x1x128xf32>
    %93 = vector.shape_cast %92 : vector<1x1x1x128xf32> to vector<1x128xf32>
    %94 = vector.shape_cast %91 : vector<1x128xf32> to vector<1x1x1x128xf32>
    tpu.vector_store %arg5[%c0_68, %c0_69, %c1_70, %c0_71], %94 {strides = array<i32>} : memref<1x1x2x128xf32, #tpu.memory_space<vmem>>, vector<1x1x1x128xf32>,
    return
  }
  func.func @transform_0(%arg0: i32, %arg1: i32) -> (i32, i32, i32, i32) {
    %c0_i32 = arith.constant 0 : i32
    %c0_i32_0 = arith.constant 0 : i32
    %c0_i32_1 = arith.constant 0 : i32
    %c0_i32_2 = arith.constant 0 : i32
    return %arg0, %c0_i32, %c0_i32_0, %c0_i32_1 : i32, i32, i32, i32
  }
  func.func @transform_1(%arg0: i32, %arg1: i32) -> (i32, i32, i32) {
    %c0_i32 = arith.constant 0 : i32
    %c0_i32_0 = arith.constant 0 : i32
    %c0_i32_1 = arith.constant 0 : i32
    %c0_i32_2 = arith.constant 0 : i32
    return %c0_i32, %c0_i32_0, %c0_i32_1 : i32, i32, i32
  }
  func.func @transform_2(%arg0: i32, %arg1: i32) -> (i32, i32) {
    %c1_i32 = arith.constant 1 : i32
    %0 = arith.muli %arg0, %c1_i32 : i32
    %1 = arith.addi %0, %arg1 : i32
    %c0_i32 = arith.constant 0 : i32
    %c0_i32_0 = arith.constant 0 : i32
    return %1, %c0_i32 : i32, i32
  }
  func.func @transform_3(%arg0: i32, %arg1: i32) -> (i32, i32, i32, i32) {
    %c0_i32 = arith.constant 0 : i32
    %c0_i32_0 = arith.constant 0 : i32
    %c0_i32_1 = arith.constant 0 : i32
    return %arg0, %arg1, %c0_i32, %c0_i32_0 : i32, i32, i32, i32
  }
}

module attributes {stable_mosaic.version = 11 : i64} {
  func.func @_bn_relu_kernel(%arg0: i32, %arg1: memref<512x128xf32, #tpu.memory_space<vmem>>, %arg2: memref<1x128xf32, #tpu.memory_space<vmem>>, %arg3: memref<1x128xf32, #tpu.memory_space<vmem>>, %arg4: memref<512x128xf32, #tpu.memory_space<vmem>>) attributes {dimension_semantics = [#tpu.dimension_semantics<parallel>], iteration_bounds = array<i64: 1>, scalar_prefetch = 0 : i64, scratch_operands = 0 : i64, tpu.core_type = #tpu.core_type<tc>, window_params = [{transform_indices = @transform_0, window_bounds = array<i64: 512, 128>}, {pipeline_mode = #tpu.pipeline_mode<synchronous>, transform_indices = @transform_1, window_bounds = array<i64: 1, 128>}, {pipeline_mode = #tpu.pipeline_mode<synchronous>, transform_indices = @transform_2, window_bounds = array<i64: 1, 128>}, {transform_indices = @transform_3, window_bounds = array<i64: 512, 128>}]} {
    %c0 = arith.constant 0 : index
    %c0_0 = arith.constant 0 : index
    %0 = vector.load %arg1[%c0, %c0_0] : memref<512x128xf32, #tpu.memory_space<vmem>>, vector<512x128xf32>
    %c0_1 = arith.constant 0 : index
    %c0_2 = arith.constant 0 : index
    %1 = vector.load %arg2[%c0_1, %c0_2] : memref<1x128xf32, #tpu.memory_space<vmem>>, vector<1x128xf32>
    %2 = vector.broadcast %1 : vector<1x128xf32> to vector<512x128xf32>
    %3 = arith.mulf %0, %2 : vector<512x128xf32>
    %c0_3 = arith.constant 0 : index
    %c0_4 = arith.constant 0 : index
    %4 = vector.load %arg3[%c0_3, %c0_4] : memref<1x128xf32, #tpu.memory_space<vmem>>, vector<1x128xf32>
    %5 = vector.broadcast %4 : vector<1x128xf32> to vector<512x128xf32>
    %6 = arith.addf %3, %5 : vector<512x128xf32>
    %cst = arith.constant 0.000000e+00 : f32
    %7 = vector.broadcast %cst : f32 to vector<512x128xf32>
    %8 = arith.maximumf %6, %7 : vector<512x128xf32>
    %c0_5 = arith.constant 0 : index
    %c0_6 = arith.constant 0 : index
    %9 = vector.load %arg4[%c0_5, %c0_6] : memref<512x128xf32, #tpu.memory_space<vmem>>, vector<512x128xf32>
    tpu.vector_store %arg4[%c0_5, %c0_6], %8 {strides = array<i32>} : memref<512x128xf32, #tpu.memory_space<vmem>>, vector<512x128xf32>,
    return
  }
  func.func @transform_0(%arg0: i32) -> (i32, i32) {
    %c0_i32 = arith.constant 0 : i32
    %c0_i32_0 = arith.constant 0 : i32
    return %arg0, %c0_i32 : i32, i32
  }
  func.func @transform_1(%arg0: i32) -> (i32, i32) {
    %c0_i32 = arith.constant 0 : i32
    %c0_i32_0 = arith.constant 0 : i32
    %c0_i32_1 = arith.constant 0 : i32
    return %c0_i32, %c0_i32_0 : i32, i32
  }
  func.func @transform_2(%arg0: i32) -> (i32, i32) {
    %c0_i32 = arith.constant 0 : i32
    %c0_i32_0 = arith.constant 0 : i32
    %c0_i32_1 = arith.constant 0 : i32
    return %c0_i32, %c0_i32_0 : i32, i32
  }
  func.func @transform_3(%arg0: i32) -> (i32, i32) {
    %c0_i32 = arith.constant 0 : i32
    %c0_i32_0 = arith.constant 0 : i32
    return %arg0, %c0_i32 : i32, i32
  }
}

</mosaic_0001>

<llo_original>
// kernel: conv_block_forward.3
$region0: #{conv_block_forward.3}
  #allocation0 [shape = 'u32[]', space=smem, size = 0x4, offset = 0x4, fixed_abs, tag = 'smem constant byte address 0x4 - core index']
  #allocation1 [shape = 'u32[144,128]{1,0:T(1,128)}', space=vmem, size = 0x12000, scoped, tag = 'internal scratch']
  %s0 = inlined_call_operand.vmem [shape: f32[512,128], index: 0, kind: input, shape index: {}]
  %s1 = inlined_call_operand.vmem [shape: f32[1,128], index: 1, kind: input, shape index: {}]
  %s2 = inlined_call_operand.vmem [shape: f32[1,128], index: 2, kind: input, shape index: {}]
  %s3 = inlined_call_operand.vmem [shape: f32[512,128], index: 3, kind: output, shape index: {}]
  %s4 = sld [smem:[#allocation0]]
  $region22: #{conv_block_forward.3} parent=0
    _
  %s6 = ssub.s32 1, %s4
  %s7 = scalar_select 0, %s6, %s4
  // Predicated region
  $region2: #{conv_block_forward.3} parent=0 // pred_check
    _
  $region3: #{conv_block_forward.3} parent=0 // pred_check_branch
    %9 = sbr.rel (0) target = $region5
  $region4: #{conv_block_forward.3} parent=0 // pred_region
    _
  $region5: #{conv_block_forward.3} parent=0 // pred_fallthru
    _
  // Predicated region
  $region6: #{conv_block_forward.3} parent=0 // pred_check
    _
  $region7: #{conv_block_forward.3} parent=0 // pred_check_branch
    %11 = sbr.rel (0) target = $region9
  $region8: #{conv_block_forward.3} parent=0 // pred_region
    _
  $region9: #{conv_block_forward.3} parent=0 // pred_fallthru
    _
  // Predicated region
  $region10: #{conv_block_forward.3} parent=0 // pred_check
    _
  $region11: #{conv_block_forward.3} parent=0 // pred_check_branch
    %13 = sbr.rel (0) target = $region13
  $region12: #{conv_block_forward.3} parent=0 // pred_region
    _
  $region13: #{conv_block_forward.3} parent=0 // pred_fallthru
    _
  %v14 = vld [vmem:[%s0] sm:$0xff]
  %v15 = vld [vmem:[%s0 + $0x8] sm:$0xff]
  %v16 = vld [vmem:[%s0 + $0x10] sm:$0xff]
  %v17 = vld [vmem:[%s0 + $0x18] sm:$0xff]
  %v18 = vld [vmem:[%s0 + $0x20] sm:$0xff]
  %v19 = vld [vmem:[%s0 + $0x28] sm:$0xff]
  %v20 = vld [vmem:[%s0 + $0x30] sm:$0xff]
  %v21 = vld [vmem:[%s0 + $0x38] sm:$0xff]
  %v22 = vld [vmem:[%s0 + $0x40] sm:$0xff]
  %v23 = vld [vmem:[%s0 + $0x48] sm:$0xff]
  %v24 = vld [vmem:[%s0 + $0x50] sm:$0xff]
  %v25 = vld [vmem:[%s0 + $0x58] sm:$0xff]
  %v26 = vld [vmem:[%s0 + $0x60] sm:$0xff]
  %v27 = vld [vmem:[%s0 + $0x68] sm:$0xff]
  %v28 = vld [vmem:[%s0 + $0x70] sm:$0xff]
  %v29 = vld [vmem:[%s0 + $0x78] sm:$0xff]
  %v30 = vld [vmem:[%s0 + $0x80] sm:$0xff]
  %v31 = vld [vmem:[%s0 + $0x88] sm:$0xff]
  %v32 = vld [vmem:[%s0 + $0x90] sm:$0xff]
  %v33 = vld [vmem:[%s0 + $0x98] sm:$0xff]
  %v34 = vld [vmem:[%s0 + $0xa0] sm:$0xff]
  %v35 = vld [vmem:[%s0 + $0xa8] sm:$0xff]
  %v36 = vld [vmem:[%s0 + $0xb0] sm:$0xff]
  %v37 = vld [vmem:[%s0 + $0xb8] sm:$0xff]
  %v38 = vld [vmem:[%s0 + $0xc0] sm:$0xff]
  %v39 = vld [vmem:[%s0 + $0xc8] sm:$0xff]
  %v40 = vld [vmem:[%s0 + $0xd0] sm:$0xff]
  %v41 = vld [vmem:[%s0 + $0xd8] sm:$0xff]
  %v42 = vld [vmem:[%s0 + $0xe0] sm:$0xff]
  %v43 = vld [vmem:[%s0 + $0xe8] sm:$0xff]
  %v44 = vld [vmem:[%s0 + $0xf0] sm:$0xff]
  %v45 = vld [vmem:[%s0 + $0xf8] sm:$0xff]
  %v46 = vld [vmem:[%s0 + $0x100] sm:$0xff]
  %v47 = vld [vmem:[%s0 + $0x108] sm:$0xff]
  %v48 = vld [vmem:[%s0 + $0x110] sm:$0xff]
  %v49 = vld [vmem:[%s0 + $0x118] sm:$0xff]
  %v50 = vld [vmem:[%s0 + $0x120] sm:$0xff]
  %v51 = vld [vmem:[%s0 + $0x128] sm:$0xff]
  %v52 = vld [vmem:[%s0 + $0x130] sm:$0xff]
  %v53 = vld [vmem:[%s0 + $0x138] sm:$0xff]
  %v54 = vld [vmem:[%s0 + $0x140] sm:$0xff]
  %v55 = vld [vmem:[%s0 + $0x148] sm:$0xff]
  %v56 = vld [vmem:[%s0 + $0x150] sm:$0xff]
  %v57 = vld [vmem:[%s0 + $0x158] sm:$0xff]
  %v58 = vld [vmem:[%s0 + $0x160] sm:$0xff]
  %v59 = vld [vmem:[%s0 + $0x168] sm:$0xff]
  %v60 = vld [vmem:[%s0 + $0x170] sm:$0xff]
  %v61 = vld [vmem:[%s0 + $0x178] sm:$0xff]
  %v62 = vld [vmem:[%s0 + $0x180] sm:$0xff]
  %v63 = vld [vmem:[%s0 + $0x188] sm:$0xff]
  %v64 = vld [vmem:[%s0 + $0x190] sm:$0xff]
  %v65 = vld [vmem:[%s0 + $0x198] sm:$0xff]
  %v66 = vld [vmem:[%s0 + $0x1a0] sm:$0xff]
  %v67 = vld [vmem:[%s0 + $0x1a8] sm:$0xff]
  %v68 = vld [vmem:[%s0 + $0x1b0] sm:$0xff]
  %v69 = vld [vmem:[%s0 + $0x1b8] sm:$0xff]
  %v70 = vld [vmem:[%s0 + $0x1c0] sm:$0xff]
  %v71 = vld [vmem:[%s0 + $0x1c8] sm:$0xff]
  %v72 = vld [vmem:[%s0 + $0x1d0] sm:$0xff]
  %v73 = vld [vmem:[%s0 + $0x1d8] sm:$0xff]
  %v74 = vld [vmem:[%s0 + $0x1e0] sm:$0xff]
  %v75 = vld [vmem:[%s0 + $0x1e8] sm:$0xff]
  %v76 = vld [vmem:[%s0 + $0x1f0] sm:$0xff]
  %v77 = vld [vmem:[%s0 + $0x1f8] sm:$0xff]
  %v78 = vld [vmem:[%s1] sm:$0x1]
  %v80 = vlaneseq
  %v81 = vshrl.u32 %v80, 7
  %v82 = vsub.s32 0, %v81
  %v83 = vrot.slane %v78, %v82
  %v85 = vmul.f32 %v14, %v83
  %v86 = vmul.f32 %v15, %v83
  %v87 = vmul.f32 %v16, %v83
  %v88 = vmul.f32 %v17, %v83
  %v89 = vmul.f32 %v18, %v83
  %v90 = vmul.f32 %v19, %v83
  %v91 = vmul.f32 %v20, %v83
  %v92 = vmul.f32 %v21, %v83
  %v93 = vmul.f32 %v22, %v83
  %v94 = vmul.f32 %v23, %v83
  %v95 = vmul.f32 %v24, %v83
  %v96 = vmul.f32 %v25, %v83
  %v97 = vmul.f32 %v26, %v83
  %v98 = vmul.f32 %v27, %v83
  %v99 = vmul.f32 %v28, %v83
  %v100 = vmul.f32 %v29, %v83
  %v101 = vmul.f32 %v30, %v83
  %v102 = vmul.f32 %v31, %v83
  %v103 = vmul.f32 %v32, %v83
  %v104 = vmul.f32 %v33, %v83
  %v105 = vmul.f32 %v34, %v83
  %v106 = vmul.f32 %v35, %v83
  %v107 = vmul.f32 %v36, %v83
  %v108 = vmul.f32 %v37, %v83
  %v109 = vmul.f32 %v38, %v83
  %v110 = vmul.f32 %v39, %v83
  %v111 = vmul.f32 %v40, %v83
  %v112 = vmul.f32 %v41, %v83
  %v113 = vmul.f32 %v42, %v83
  %v114 = vmul.f32 %v43, %v83
  %v115 = vmul.f32 %v44, %v83
  %v116 = vmul.f32 %v45, %v83
  %v117 = vmul.f32 %v46, %v83
  %v118 = vmul.f32 %v47, %v83
  %v119 = vmul.f32 %v48, %v83
  %v120 = vmul.f32 %v49, %v83
  %v121 = vmul.f32 %v50, %v83
  %v122 = vmul.f32 %v51, %v83
  %v123 = vmul.f32 %v52, %v83
  %v124 = vmul.f32 %v53, %v83
  %v125 = vmul.f32 %v54, %v83
  %v126 = vmul.f32 %v55, %v83
  %v127 = vmul.f32 %v56, %v83
  %v128 = vmul.f32 %v57, %v83
  %v129 = vmul.f32 %v58, %v83
  %v130 = vmul.f32 %v59, %v83
  %v131 = vmul.f32 %v60, %v83
  %v132 = vmul.f32 %v61, %v83
  %v133 = vmul.f32 %v62, %v83
  %v134 = vmul.f32 %v63, %v83
  %v135 = vmul.f32 %v64, %v83
  %v136 = vmul.f32 %v65, %v83
  %v137 = vmul.f32 %v66, %v83
  %v138 = vmul.f32 %v67, %v83
  %v139 = vmul.f32 %v68, %v83
  %v140 = vmul.f32 %v69, %v83
  %v141 = vmul.f32 %v70, %v83
  %v142 = vmul.f32 %v71, %v83
  %v143 = vmul.f32 %v72, %v83
  %v144 = vmul.f32 %v73, %v83
  %v145 = vmul.f32 %v74, %v83
  %v146 = vmul.f32 %v75, %v83
  %v147 = vmul.f32 %v76, %v83
  %v148 = vmul.f32 %v77, %v83
  %v149 = vld [vmem:[%s2] sm:$0x1]
  %v151 = vlaneseq
  %v152 = vshrl.u32 %v151, 7
  %v153 = vsub.s32 0, %v152
  %v154 = vrot.slane %v149, %v153
  %v156 = vadd.f32 %v85, %v154
  %v157 = vadd.f32 %v86, %v154
  %v158 = vadd.f32 %v87, %v154
  %v159 = vadd.f32 %v88, %v154
  %v160 = vadd.f32 %v89, %v154
  %v161 = vadd.f32 %v90, %v154
  %v162 = vadd.f32 %v91, %v154
  %v163 = vadd.f32 %v92, %v154
  %v164 = vadd.f32 %v93, %v154
  %v165 = vadd.f32 %v94, %v154
  %v166 = vadd.f32 %v95, %v154
  %v167 = vadd.f32 %v96, %v154
  %v168 = vadd.f32 %v97, %v154
  %v169 = vadd.f32 %v98, %v154
  %v170 = vadd.f32 %v99, %v154
  %v171 = vadd.f32 %v100, %v154
  %v172 = vadd.f32 %v101, %v154
  %v173 = vadd.f32 %v102, %v154
  %v174 = vadd.f32 %v103, %v154
  %v175 = vadd.f32 %v104, %v154
  %v176 = vadd.f32 %v105, %v154
  %v177 = vadd.f32 %v106, %v154
  %v178 = vadd.f32 %v107, %v154
  %v179 = vadd.f32 %v108, %v154
  %v180 = vadd.f32 %v109, %v154
  %v181 = vadd.f32 %v110, %v154
  %v182 = vadd.f32 %v111, %v154
  %v183 = vadd.f32 %v112, %v154
  %v184 = vadd.f32 %v113, %v154
  %v185 = vadd.f32 %v114, %v154
  %v186 = vadd.f32 %v115, %v154
  %v187 = vadd.f32 %v116, %v154
  %v188 = vadd.f32 %v117, %v154
  %v189 = vadd.f32 %v118, %v154
  %v190 = vadd.f32 %v119, %v154
  %v191 = vadd.f32 %v120, %v154
  %v192 = vadd.f32 %v121, %v154
  %v193 = vadd.f32 %v122, %v154
  %v194 = vadd.f32 %v123, %v154
  %v195 = vadd.f32 %v124, %v154
  %v196 = vadd.f32 %v125, %v154
  %v197 = vadd.f32 %v126, %v154
  %v198 = vadd.f32 %v127, %v154
  %v199 = vadd.f32 %v128, %v154
  %v200 = vadd.f32 %v129, %v154
  %v201 = vadd.f32 %v130, %v154
  %v202 = vadd.f32 %v131, %v154
  %v203 = vadd.f32 %v132, %v154
  %v204 = vadd.f32 %v133, %v154
  %v205 = vadd.f32 %v134, %v154
  %v206 = vadd.f32 %v135, %v154
  %v207 = vadd.f32 %v136, %v154
  %v208 = vadd.f32 %v137, %v154
  %v209 = vadd.f32 %v138, %v154
  %v210 = vadd.f32 %v139, %v154
  %v211 = vadd.f32 %v140, %v154
  %v212 = vadd.f32 %v141, %v154
  %v213 = vadd.f32 %v142, %v154
  %v214 = vadd.f32 %v143, %v154
  %v215 = vadd.f32 %v144, %v154
  %v216 = vadd.f32 %v145, %v154
  %v217 = vadd.f32 %v146, %v154
  %v218 = vadd.f32 %v147, %v154
  %v219 = vadd.f32 %v148, %v154
  %v220 = vmax.f32 %v156, 0.0
  %v221 = vmax.f32 %v157, 0.0
  %v222 = vmax.f32 %v158, 0.0
  %v223 = vmax.f32 %v159, 0.0
  %v224 = vmax.f32 %v160, 0.0
  %v225 = vmax.f32 %v161, 0.0
  %v226 = vmax.f32 %v162, 0.0
  %v227 = vmax.f32 %v163, 0.0
  %v228 = vmax.f32 %v164, 0.0
  %v229 = vmax.f32 %v165, 0.0
  %v230 = vmax.f32 %v166, 0.0
  %v231 = vmax.f32 %v167, 0.0
  %v232 = vmax.f32 %v168, 0.0
  %v233 = vmax.f32 %v169, 0.0
  %v234 = vmax.f32 %v170, 0.0
  %v235 = vmax.f32 %v171, 0.0
  %v236 = vmax.f32 %v172, 0.0
  %v237 = vmax.f32 %v173, 0.0
  %v238 = vmax.f32 %v174, 0.0
  %v239 = vmax.f32 %v175, 0.0
  %v240 = vmax.f32 %v176, 0.0
  %v241 = vmax.f32 %v177, 0.0
  %v242 = vmax.f32 %v178, 0.0
  %v243 = vmax.f32 %v179, 0.0
  %v244 = vmax.f32 %v180, 0.0
  %v245 = vmax.f32 %v181, 0.0
  %v246 = vmax.f32 %v182, 0.0
  %v247 = vmax.f32 %v183, 0.0
  %v248 = vmax.f32 %v184, 0.0
  %v249 = vmax.f32 %v185, 0.0
  %v250 = vmax.f32 %v186, 0.0
  %v251 = vmax.f32 %v187, 0.0
  %v252 = vmax.f32 %v188, 0.0
  %v253 = vmax.f32 %v189, 0.0
  %v254 = vmax.f32 %v190, 0.0
  %v255 = vmax.f32 %v191, 0.0
  %v256 = vmax.f32 %v192, 0.0
  %v257 = vmax.f32 %v193, 0.0
  %v258 = vmax.f32 %v194, 0.0
  %v259 = vmax.f32 %v195, 0.0
  %v260 = vmax.f32 %v196, 0.0
  %v261 = vmax.f32 %v197, 0.0
  %v262 = vmax.f32 %v198, 0.0
  %v263 = vmax.f32 %v199, 0.0
  %v264 = vmax.f32 %v200, 0.0
  %v265 = vmax.f32 %v201, 0.0
  %v266 = vmax.f32 %v202, 0.0
  %v267 = vmax.f32 %v203, 0.0
  %v268 = vmax.f32 %v204, 0.0
  %v269 = vmax.f32 %v205, 0.0
  %v270 = vmax.f32 %v206, 0.0
  %v271 = vmax.f32 %v207, 0.0
  %v272 = vmax.f32 %v208, 0.0
  %v273 = vmax.f32 %v209, 0.0
  %v274 = vmax.f32 %v210, 0.0
  %v275 = vmax.f32 %v211, 0.0
  %v276 = vmax.f32 %v212, 0.0
  %v277 = vmax.f32 %v213, 0.0
  %v278 = vmax.f32 %v214, 0.0
  %v279 = vmax.f32 %v215, 0.0
  %v280 = vmax.f32 %v216, 0.0
  %v281 = vmax.f32 %v217, 0.0
  %v282 = vmax.f32 %v218, 0.0
  %v283 = vmax.f32 %v219, 0.0
  %284 = vst [vmem:[%s3] sm:$0xff] %v220
  %285 = vst [vmem:[%s3 + $0x8] sm:$0xff] %v221
  %286 = vst [vmem:[%s3 + $0x10] sm:$0xff] %v222
  %287 = vst [vmem:[%s3 + $0x18] sm:$0xff] %v223
  %288 = vst [vmem:[%s3 + $0x20] sm:$0xff] %v224
  %289 = vst [vmem:[%s3 + $0x28] sm:$0xff] %v225
  %290 = vst [vmem:[%s3 + $0x30] sm:$0xff] %v226
  %291 = vst [vmem:[%s3 + $0x38] sm:$0xff] %v227
  %292 = vst [vmem:[%s3 + $0x40] sm:$0xff] %v228
  %293 = vst [vmem:[%s3 + $0x48] sm:$0xff] %v229
  %294 = vst [vmem:[%s3 + $0x50] sm:$0xff] %v230
  %295 = vst [vmem:[%s3 + $0x58] sm:$0xff] %v231
  %296 = vst [vmem:[%s3 + $0x60] sm:$0xff] %v232
  %297 = vst [vmem:[%s3 + $0x68] sm:$0xff] %v233
  %298 = vst [vmem:[%s3 + $0x70] sm:$0xff] %v234
  %299 = vst [vmem:[%s3 + $0x78] sm:$0xff] %v235
  %300 = vst [vmem:[%s3 + $0x80] sm:$0xff] %v236
  %301 = vst [vmem:[%s3 + $0x88] sm:$0xff] %v237
  %302 = vst [vmem:[%s3 + $0x90] sm:$0xff] %v238
  %303 = vst [vmem:[%s3 + $0x98] sm:$0xff] %v239
  %304 = vst [vmem:[%s3 + $0xa0] sm:$0xff] %v240
  %305 = vst [vmem:[%s3 + $0xa8] sm:$0xff] %v241
  %306 = vst [vmem:[%s3 + $0xb0] sm:$0xff] %v242
  %307 = vst [vmem:[%s3 + $0xb8] sm:$0xff] %v243
  %308 = vst [vmem:[%s3 + $0xc0] sm:$0xff] %v244
  %309 = vst [vmem:[%s3 + $0xc8] sm:$0xff] %v245
  %310 = vst [vmem:[%s3 + $0xd0] sm:$0xff] %v246
  %311 = vst [vmem:[%s3 + $0xd8] sm:$0xff] %v247
  %312 = vst [vmem:[%s3 + $0xe0] sm:$0xff] %v248
  %313 = vst [vmem:[%s3 + $0xe8] sm:$0xff] %v249
  %314 = vst [vmem:[%s3 + $0xf0] sm:$0xff] %v250
  %315 = vst [vmem:[%s3 + $0xf8] sm:$0xff] %v251
  %316 = vst [vmem:[%s3 + $0x100] sm:$0xff] %v252
  %317 = vst [vmem:[%s3 + $0x108] sm:$0xff] %v253
  %318 = vst [vmem:[%s3 + $0x110] sm:$0xff] %v254
  %319 = vst [vmem:[%s3 + $0x118] sm:$0xff] %v255
  %320 = vst [vmem:[%s3 + $0x120] sm:$0xff] %v256
  %321 = vst [vmem:[%s3 + $0x128] sm:$0xff] %v257
  %322 = vst [vmem:[%s3 + $0x130] sm:$0xff] %v258
  %323 = vst [vmem:[%s3 + $0x138] sm:$0xff] %v259
  %324 = vst [vmem:[%s3 + $0x140] sm:$0xff] %v260
  %325 = vst [vmem:[%s3 + $0x148] sm:$0xff] %v261
  %326 = vst [vmem:[%s3 + $0x150] sm:$0xff] %v262
  %327 = vst [vmem:[%s3 + $0x158] sm:$0xff] %v263
  %328 = vst [vmem:[%s3 + $0x160] sm:$0xff] %v264
  %329 = vst [vmem:[%s3 + $0x168] sm:$0xff] %v265
  %330 = vst [vmem:[%s3 + $0x170] sm:$0xff] %v266
  %331 = vst [vmem:[%s3 + $0x178] sm:$0xff] %v267
  %332 = vst [vmem:[%s3 + $0x180] sm:$0xff] %v268
  %333 = vst [vmem:[%s3 + $0x188] sm:$0xff] %v269
  %334 = vst [vmem:[%s3 + $0x190] sm:$0xff] %v270
  %335 = vst [vmem:[%s3 + $0x198] sm:$0xff] %v271
  %336 = vst [vmem:[%s3 + $0x1a0] sm:$0xff] %v272
  %337 = vst [vmem:[%s3 + $0x1a8] sm:$0xff] %v273
  %338 = vst [vmem:[%s3 + $0x1b0] sm:$0xff] %v274
  %339 = vst [vmem:[%s3 + $0x1b8] sm:$0xff] %v275
  %340 = vst [vmem:[%s3 + $0x1c0] sm:$0xff] %v276
  %341 = vst [vmem:[%s3 + $0x1c8] sm:$0xff] %v277
  %342 = vst [vmem:[%s3 + $0x1d0] sm:$0xff] %v278
  %343 = vst [vmem:[%s3 + $0x1d8] sm:$0xff] %v279
  %344 = vst [vmem:[%s3 + $0x1e0] sm:$0xff] %v280
  %345 = vst [vmem:[%s3 + $0x1e8] sm:$0xff] %v281
  %346 = vst [vmem:[%s3 + $0x1f0] sm:$0xff] %v282
  %347 = vst [vmem:[%s3 + $0x1f8] sm:$0xff] %v283
  // Predicated region
  $region14: #{conv_block_forward.3} parent=0 // pred_check
    _
  $region15: #{conv_block_forward.3} parent=0 // pred_check_branch
    %349 = sbr.rel (0) target = $region17
  $region16: #{conv_block_forward.3} parent=0 // pred_region
    _
  $region17: #{conv_block_forward.3} parent=0 // pred_fallthru
    _
  // Predicated region
  $region18: #{conv_block_forward.3} parent=0 // pred_check
    _
  $region19: #{conv_block_forward.3} parent=0 // pred_check_branch
    %351 = sbr.rel (0) target = $region21
  $region20: #{conv_block_forward.3} parent=0 // pred_region
    _
  $region21: #{conv_block_forward.3} parent=0 // pred_fallthru
    _

// kernel: conv_block_forward.2
$region0: #{conv_block_forward.2}
  #allocation0 [shape = 'u32[]', space=smem, size = 0x4, offset = 0x4, fixed_abs, tag = 'smem constant byte address 0x4 - core index']
  #allocation1 [shape = 'u32[144,128]{1,0:T(1,128)}', space=vmem, size = 0x12000, scoped, tag = 'internal scratch']
  %s0 = inlined_call_operand.vmem [shape: f32[2,18,18,4], index: 0, kind: input, shape index: {}]
  %s1 = inlined_call_operand.vmem [shape: f32[9,4,128], index: 1, kind: input, shape index: {}]
  %s2 = inlined_call_operand.vmem [shape: f32[512,128], index: 2, kind: output, shape index: {0}]
  %s3 = inlined_call_operand.vmem [shape: f32[2,1,2,128], index: 3, kind: output, shape index: {1}]
  %4 = xla_tuple %s2, %s3
  %s5 = sld [smem:[#allocation0]]
  $region49: #{conv_block_forward.2} parent=0
    _
  %s7 = ssub.s32 1, %s5
  %s8 = scalar_select 0, %s7, %s5
  loop: start=0, step=1, limit=4
  $region2: #{conv_block_forward.2} parent=0 // loop_pre_header
    _
  $region3: #{conv_block_forward.2} parent=0 // loop_header
    %s10 = sphi 0, %s14
    %p11 = scmp.ge.s32.totalorder %s10, 4
    %s17 = sphi 0, %s29
    %s18 = sphi 0, %s25
    %s19 = sphi 0, %s17
    %s20 = sphi 0, %s18
    %s21 = sphi 0, %s19
    %s22 = sphi 0, %s20
    %s32 = sphi 0, %s34
    %s35 = sphi 0, %s32
    %s36 = sphi 0, %s35
    %s52 = sphi 0, %s36
    %s56 = sphi 0, %s56
    %s58 = sphi 0, %s56
    %s59 = sphi 0, %s58
    %s73 = sphi 0, %s59
    %s81 = sphi 0, %s83
    %s84 = sphi 0, %s81
    %s85 = sphi 0, %s84
    %s101 = sphi 0, %s85
    %s109 = sphi 0, %s111
    %s112 = sphi 0, %s109
    %s113 = sphi 0, %s112
    %s129 = sphi 0, %s113
  $region4: #{conv_block_forward.2} parent=0 // loop_header_branch
    %13 = sbr.rel (%p11) target = $region8
  $region5: #{conv_block_forward.2} parent=0 // loop_body
    %s15 = ssub.s32 %s10, 1
    %s16 = ssub.s32 %s10, 2
    %s23 = sadd.s32 1, %s18
    %p24 = scmp.ge.s32.totalorder %s23, 1
    %s25 = scalar_select %p24, 0, %s23
    %s26 = sadd.s32 1, %s17
    %s27 = scalar_select %p24, %s26, %s17
    %p28 = scmp.ge.s32.totalorder %s27, 2
    %s29 = scalar_select %p28, 0, %s27
    %s30 = ssub.s32 %s17, %s29
    %p31 = scmp.eq.s32.totalorder %s30, 0
    %s33 = sadd.s32 %s32, 1
    %s34 = scalar_select %p31, %s32, %s33
    %p37 = pneg %p31
    %p38 = scmp.eq.s32.totalorder %s10, 1
    %p39 = por %p37, %p38
    %p40 = scmp.ne.s32.totalorder %s32, %s35
    %p41 = scmp.eq.s32.totalorder %s10, 0
    %p42 = por %p40, %p41
    %p43 = scmp.ne.s32.totalorder %s32, %s35
    %p44 = scmp.eq.s32.totalorder %s15, 1
    %p45 = por %p43, %p44
    %p46 = scmp.ne.s32.totalorder %s35, %s36
    %p47 = scmp.eq.s32.totalorder %s15, 0
    %p48 = por %p46, %p47
    %p49 = scmp.ne.s32.totalorder %s35, %s36
    %p50 = scmp.eq.s32.totalorder %s16, 1
    %p51 = por %p49, %p50
    %p53 = scmp.ne.s32.totalorder %s36, %s52
    %p54 = scmp.eq.s32.totalorder %s16, 0
    %p55 = por %p53, %p54
    %s57 = sadd.s32 %s56, 1
    %p60 = scmp.eq.s32.totalorder %s10, 1
    %p61 = scmp.ne.s32.totalorder %s56, %s58
    %p62 = scmp.eq.s32.totalorder %s10, 0
    %p63 = por %p61, %p62
    %p64 = scmp.ne.s32.totalorder %s56, %s58
    %p65 = scmp.eq.s32.totalorder %s15, 1
    %p66 = por %p64, %p65
    %p67 = scmp.ne.s32.totalorder %s58, %s59
    %p68 = scmp.eq.s32.totalorder %s15, 0
    %p69 = por %p67, %p68
    %p70 = scmp.ne.s32.totalorder %s58, %s59
    %p71 = scmp.eq.s32.totalorder %s16, 1
    %p72 = por %p70, %p71
    %p74 = scmp.ne.s32.totalorder %s59, %s73
    %p75 = scmp.eq.s32.totalorder %s16, 0
    %p76 = por %p74, %p75
    %s77 = sadd.s32 %s17, %s18
    %s78 = sadd.s32 %s29, %s25
    %s79 = ssub.s32 %s77, %s78
    %p80 = scmp.eq.s32.totalorder %s79, 0
    %s82 = sadd.s32 %s81, 1
    %s83 = scalar_select %p80, %s81, %s82
    %p86 = pneg %p80
    %p87 = scmp.eq.s32.totalorder %s10, 1
    %p88 = por %p86, %p87
    %p89 = scmp.ne.s32.totalorder %s81, %s84
    %p90 = scmp.eq.s32.totalorder %s10, 0
    %p91 = por %p89, %p90
    %p92 = scmp.ne.s32.totalorder %s81, %s84
    %p93 = scmp.eq.s32.totalorder %s15, 1
    %p94 = por %p92, %p93
    %p95 = scmp.ne.s32.totalorder %s84, %s85
    %p96 = scmp.eq.s32.totalorder %s15, 0
    %p97 = por %p95, %p96
    %p98 = scmp.ne.s32.totalorder %s84, %s85
    %p99 = scmp.eq.s32.totalorder %s16, 1
    %p100 = por %p98, %p99
    %p102 = scmp.ne.s32.totalorder %s85, %s101
    %p103 = scmp.eq.s32.totalorder %s16, 0
    %p104 = por %p102, %p103
    %s105 = ssub.s32 %s17, %s29
    %s106 = ssub.s32 %s18, %s25
    %s107 = sor.u32 %s105, %s106
    %p108 = scmp.eq.s32.totalorder %s107, 0
    %s110 = sadd.s32 %s109, 1
    %s111 = scalar_select %p108, %s109, %s110
    %p114 = pneg %p108
    %p115 = scmp.eq.s32.totalorder %s10, 1
    %p116 = por %p114, %p115
    %p117 = scmp.ne.s32.totalorder %s109, %s112
    %p118 = scmp.eq.s32.totalorder %s10, 0
    %p119 = por %p117, %p118
    %p120 = scmp.ne.s32.totalorder %s109, %s112
    %p121 = scmp.eq.s32.totalorder %s15, 1
    %p122 = por %p120, %p121
    %p123 = scmp.ne.s32.totalorder %s112, %s113
    %p124 = scmp.eq.s32.totalorder %s15, 0
    %p125 = por %p123, %p124
    %p126 = scmp.ne.s32.totalorder %s112, %s113
    %p127 = scmp.eq.s32.totalorder %s16, 1
    %p128 = por %p126, %p127
    %p130 = scmp.ne.s32.totalorder %s113, %s129
    %p131 = scmp.eq.s32.totalorder %s16, 0
    %p132 = por %p130, %p131
    %p133 = scmp.le.s32.totalorder 1, %s10
    %p134 = scmp.lt.s32.totalorder %s10, 3
    %p135 = pnand %p133, %p134
    %p136 = pneg %p135
    // Predicated region
    $region9: #{conv_block_forward.2} parent=5 // pred_check
      _
    $region10: #{conv_block_forward.2} parent=5 // pred_check_branch
      %138 = sbr.rel (%p135) target = $region12
    $region11: #{conv_block_forward.2} parent=5 // pred_region
      %s139 = ssub.s32 %s10, 1
      // Predicated region
      $region13: #{conv_block_forward.2} parent=11 // pred_check
        %p140 = pneg %p69
      $region14: #{conv_block_forward.2} parent=11 // pred_check_branch
        %142 = sbr.rel (%p140) target = $region16
      $region15: #{conv_block_forward.2} parent=11 // pred_region
        _
      $region16: #{conv_block_forward.2} parent=11 // pred_fallthru
        _
    $region12: #{conv_block_forward.2} parent=5 // pred_fallthru
      _
    %p143 = scmp.lt.s32.totalorder %s10, 2
    // Predicated region
    $region17: #{conv_block_forward.2} parent=5 // pred_check
      %p144 = pneg %p143
    $region18: #{conv_block_forward.2} parent=5 // pred_check_branch
      %146 = sbr.rel (%p144) target = $region20
    $region19: #{conv_block_forward.2} parent=5 // pred_region
      // Predicated region
      $region21: #{conv_block_forward.2} parent=19 // pred_check
        %p147 = pneg %p42
      $region22: #{conv_block_forward.2} parent=19 // pred_check_branch
        %149 = sbr.rel (%p147) target = $region24
      $region23: #{conv_block_forward.2} parent=19 // pred_region
        %p150 = scmp.lt.s32.totalorder %s17, 1
        %s151 = scalar_select %p150, %s17, 1
        %s152 = smul.addr %s151, 54
        %s153 = smul.addr %s152, 8
        %s154 = scalar_lea.vmem %s0, %s153
      $region24: #{conv_block_forward.2} parent=19 // pred_fallthru
        _
    $region20: #{conv_block_forward.2} parent=5 // pred_fallthru
      _
    %p155 = scmp.le.s32.totalorder 1, %s10
    %p156 = scmp.lt.s32.totalorder %s10, 3
    %p157 = pnand %p155, %p156
    %p158 = pneg %p157
    // Predicated region
    $region25: #{conv_block_forward.2} parent=5 // pred_check
      _
    $region26: #{conv_block_forward.2} parent=5 // pred_check_branch
      %160 = sbr.rel (%p157) target = $region28
    $region27: #{conv_block_forward.2} parent=5 // pred_region
      %s161 = ssub.s32 %s10, 1
      %p162 = scmp.lt.s32.totalorder %s19, 1
      %s163 = scalar_select %p162, %s19, 1
      %s164 = smul.addr %s163, 54
      %s165 = smul.addr %s164, 8
      %s166 = scalar_lea.vmem %s0, %s165
      %p167 = pneg %p48
      %p168 = pneg %p45
      %p169 = pneg %p69
      %p170 = pneg %p66
      %p171 = pneg %p97
      %p172 = pneg %p94
      %s173 = sadd.s32 %s19, %s20
      %s174 = smul.u32 32, %s173
      %p175 = scmp.lt.s32.totalorder %s174, 63
      %s176 = scalar_select %p175, %s174, 63
      %s177 = smul.addr %s176, 8
      %s178 = scalar_lea.vmem %s2, %s177
      %p179 = pneg %p125
      %p180 = pneg %p122
      %p181 = scmp.lt.s32.totalorder %s19, 1
      %s182 = scalar_select %p181, %s19, 1
      %p183 = scmp.lt.s32.totalorder %s20, 0
      %s184 = scalar_select %p183, %s20, 0
      %s185 = sadd.s32 %s184, %s182
      %s186 = smul.addr %s185, 2
      %s187 = scalar_lea.vmem %s3, %s186
      %p188 = scmp.lt.s32.totalorder %s19, 1
      %s189 = scalar_select %p188, %s19, 1
      %s190 = smul.addr %s189, 54
      %s191 = smul.addr %s190, 8
      %s192 = scalar_lea.vmem %s0, %s191
      %s193 = sadd.s32 %s19, %s20
      %s194 = smul.u32 32, %s193
      %p195 = scmp.lt.s32.totalorder %s194, 63
      %s196 = scalar_select %p195, %s194, 63
      %s197 = smul.addr %s196, 8
      %s198 = scalar_lea.vmem %s2, %s197
      %s199 = sadd.s32 %s19, %s20
      %s200 = smul.u32 32, %s199
      %p201 = scmp.lt.s32.totalorder %s19, 1
      %s202 = scalar_select %p201, %s19, 1
      %p203 = scmp.lt.s32.totalorder %s20, 0
      %s204 = scalar_select %p203, %s20, 0
      %s205 = sadd.s32 %s204, %s202
      %s206 = smul.addr %s205, 2
      %s207 = scalar_lea.vmem %s3, %s206
      %s208 = smul.u32 %s20, 16
      %s209 = smul.u32 %s208, 24
      %s210 = scalar_lea.vmem %s192, %s209
      %v211 = vld [vmem:[%s210] sm:$0xff]
      %v212 = vld [vmem:[%s210 + $0x8] sm:$0xff]
      %v213 = vld [vmem:[%s210 + $0x18] sm:$0xff]
      %v214 = vld [vmem:[%s210 + $0x20] sm:$0xff]
      %v215 = vld [vmem:[%s210 + $0x30] sm:$0xff]
      %v216 = vld [vmem:[%s210 + $0x38] sm:$0xff]
      %v217 = vld [vmem:[%s210 + $0x48] sm:$0xff]
      %v218 = vld [vmem:[%s210 + $0x50] sm:$0xff]
      %v219 = vld [vmem:[%s210 + $0x60] sm:$0xff]
      %v220 = vld [vmem:[%s210 + $0x68] sm:$0xff]
      %v221 = vld [vmem:[%s210 + $0x78] sm:$0xff]
      %v222 = vld [vmem:[%s210 + $0x80] sm:$0xff]
      %v223 = vld [vmem:[%s210 + $0x90] sm:$0xff]
      %v224 = vld [vmem:[%s210 + $0x98] sm:$0xff]
      %v225 = vld [vmem:[%s210 + $0xa8] sm:$0xff]
      %v226 = vld [vmem:[%s210 + $0xb0] sm:$0xff]
      %v227 = vld [vmem:[%s210 + $0xc0] sm:$0xff]
      %v228 = vld [vmem:[%s210 + $0xc8] sm:$0xff]
      %v229 = vld [vmem:[%s210 + $0xd8] sm:$0xff]
      %v230 = vld [vmem:[%s210 + $0xe0] sm:$0xff]
      %v231 = vld [vmem:[%s210 + $0xf0] sm:$0xff]
      %v232 = vld [vmem:[%s210 + $0xf8] sm:$0xff]
      %v233 = vld [vmem:[%s210 + $0x108] sm:$0xff]
      %v234 = vld [vmem:[%s210 + $0x110] sm:$0xff]
      %v235 = vld [vmem:[%s210 + $0x120] sm:$0xff]
      %v236 = vld [vmem:[%s210 + $0x128] sm:$0xff]
      %v237 = vld [vmem:[%s210 + $0x138] sm:$0xff]
      %v238 = vld [vmem:[%s210 + $0x140] sm:$0xff]
      %v239 = vld [vmem:[%s210 + $0x150] sm:$0xff]
      %v240 = vld [vmem:[%s210 + $0x158] sm:$0xff]
      %v241 = vld [vmem:[%s210 + $0x168] sm:$0xff]
      %v242 = vld [vmem:[%s210 + $0x170] sm:$0xff]
      %v243 = vld [vmem:[%s1] sm:$0xf]
      %v244 = vld [vmem:[%s210 + $0x1] sm:$0xff]
      %v245 = vld [vmem:[%s210 + $0x9] sm:$0xff]
      %v246 = vld [vmem:[%s210 + $0x19] sm:$0xff]
      %v247 = vld [vmem:[%s210 + $0x21] sm:$0xff]
      %v248 = vld [vmem:[%s210 + $0x31] sm:$0xff]
      %v249 = vld [vmem:[%s210 + $0x39] sm:$0xff]
      %v250 = vld [vmem:[%s210 + $0x49] sm:$0xff]
      %v251 = vld [vmem:[%s210 + $0x51] sm:$0xff]
      %v252 = vld [vmem:[%s210 + $0x61] sm:$0xff]
      %v253 = vld [vmem:[%s210 + $0x69] sm:$0xff]
      %v254 = vld [vmem:[%s210 + $0x79] sm:$0xff]
      %v255 = vld [vmem:[%s210 + $0x81] sm:$0xff]
      %v256 = vld [vmem:[%s210 + $0x91] sm:$0xff]
      %v257 = vld [vmem:[%s210 + $0x99] sm:$0xff]
      %v258 = vld [vmem:[%s210 + $0xa9] sm:$0xff]
      %v259 = vld [vmem:[%s210 + $0xb1] sm:$0xff]
      %v260 = vld [vmem:[%s210 + $0xc1] sm:$0xff]
      %v261 = vld [vmem:[%s210 + $0xc9] sm:$0xff]
      %v262 = vld [vmem:[%s210 + $0xd9] sm:$0xff]
      %v263 = vld [vmem:[%s210 + $0xe1] sm:$0xff]
      %v264 = vld [vmem:[%s210 + $0xf1] sm:$0xff]
      %v265 = vld [vmem:[%s210 + $0xf9] sm:$0xff]
      %v266 = vld [vmem:[%s210 + $0x109] sm:$0xff]
      %v267 = vld [vmem:[%s210 + $0x111] sm:$0xff]
      %v268 = vld [vmem:[%s210 + $0x121] sm:$0xff]
      %v269 = vld [vmem:[%s210 + $0x129] sm:$0xff]
      %v270 = vld [vmem:[%s210 + $0x139] sm:$0xff]
      %v271 = vld [vmem:[%s210 + $0x141] sm:$0xff]
      %v272 = vld [vmem:[%s210 + $0x151] sm:$0xff]
      %v273 = vld [vmem:[%s210 + $0x159] sm:$0xff]
      %v274 = vld [vmem:[%s210 + $0x169] sm:$0xff]
      %v275 = vld [vmem:[%s210 + $0x171] sm:$0xff]
      %s276 = scalar_lea.vmem %s1, 4
      %v277 = vld [vmem:[%s276] sm:$0xf]
      %vm278 = vcmask 31744
      %v280 = vsel %vm278, %v244, 0
      %v283 = vsel %vm278, %v245, 0
      %v286 = vsel %vm278, %v246, 0
      %v289 = vsel %vm278, %v247, 0
      %v292 = vsel %vm278, %v248, 0
      %v295 = vsel %vm278, %v249, 0
      %v298 = vsel %vm278, %v250, 0
      %v301 = vsel %vm278, %v251, 0
      %v304 = vsel %vm278, %v252, 0
      %v307 = vsel %vm278, %v253, 0
      %v310 = vsel %vm278, %v254, 0
      %v313 = vsel %vm278, %v255, 0
      %v316 = vsel %vm278, %v256, 0
      %v319 = vsel %vm278, %v257, 0
      %v322 = vsel %vm278, %v258, 0
      %v325 = vsel %vm278, %v259, 0
      %v328 = vsel %vm278, %v260, 0
      %v331 = vsel %vm278, %v261, 0
      %v334 = vsel %vm278, %v262, 0
      %v337 = vsel %vm278, %v263, 0
      %v340 = vsel %vm278, %v264, 0
      %v343 = vsel %vm278, %v265, 0
      %v346 = vsel %vm278, %v266, 0
      %v349 = vsel %vm278, %v267, 0
      %v352 = vsel %vm278, %v268, 0
      %v355 = vsel %vm278, %v269, 0
      %v358 = vsel %vm278, %v270, 0
      %v361 = vsel %vm278, %v271, 0
      %v364 = vsel %vm278, %v272, 0
      %v367 = vsel %vm278, %v273, 0
      %v370 = vsel %vm278, %v274, 0
      %v373 = vsel %vm278, %v275, 0
      %vm375 = vcmask 1043456
      %v377 = vsel %vm375, %v277, 0
      %379 = vmatprep.subr.mxu0 0.0
      %380 = vmatpush1.msra.mxu0 0.0
      %381 = vmatprep.subr.mxu0 0.0
      %382 = vmatpush1.msra.mxu0 0.0
      %383 = vmatprep.subr.mxu0 0.0
      %384 = vmatpush1.msra.mxu0 0.0
      %385 = vmatprep.subr.mxu0 0.0
      %386 = vmatpush1.msra.mxu0 0.0
      %387 = vmatprep.subr.mxu0 0.0
      %388 = vmatpush1.msra.mxu0 0.0
      %389 = vmatprep.subr.mxu0 0.0
      %390 = vmatpush1.msra.mxu0 0.0
      %391 = vmatprep.subr.mxu0 0.0
      %392 = vmatpush1.msra.mxu0 0.0
      %393 = vmatprep.subr.mxu0 0.0
      %394 = vmatpush1.msra.mxu0 0.0
      %395 = vmatprep.subr.mxu0 0.0
      %396 = vmatpush1.msra.mxu0 0.0
      %397 = vmatprep.subr.mxu0 0.0
      %398 = vmatpush1.msra.mxu0 0.0
      %399 = vmatprep.subr.mxu0 0.0
      %400 = vmatpush1.msra.mxu0 0.0
      %401 = vmatprep.subr.mxu0 0.0
      %402 = vmatpush1.msra.mxu0 0.0
      %403 = vmatprep.subr.mxu0 0.0
      %404 = vmatpush1.msra.mxu0 0.0
      %405 = vmatprep.subr.mxu0 0.0
      %406 = vmatpush1.msra.mxu0 0.0
      %407 = vmatprep.subr.mxu0 0.0
      %408 = vmatpush1.msra.mxu0 0.0
      %409 = vmatprep.subr.mxu0 0.0
      %410 = vmatpush1.msra.mxu0 %v377
      %411 = vmatprep.subr.mxu0 0.0
      %412 = vmatpush2.msra.mxu0 0.0
      %413 = vmatprep.subr.mxu0 0.0
      %414 = vmatpush2.msra.mxu0 0.0
      %415 = vmatprep.subr.mxu0 0.0
      %416 = vmatpush2.msra.mxu0 0.0
      %417 = vmatprep.subr.mxu0 0.0
      %418 = vmatpush2.msra.mxu0 0.0
      %419 = vmatprep.subr.mxu0 0.0
      %420 = vmatpush2.msra.mxu0 0.0
      %421 = vmatprep.subr.mxu0 0.0
      %422 = vmatpush2.msra.mxu0 0.0
      %423 = vmatprep.subr.mxu0 0.0
      %424 = vmatpush2.msra.mxu0 0.0
      %425 = vmatprep.subr.mxu0 0.0
      %426 = vmatpush2.msra.mxu0 0.0
      %427 = vmatprep.subr.mxu0 0.0
      %428 = vmatpush2.msra.mxu0 0.0
      %429 = vmatprep.subr.mxu0 0.0
      %430 = vmatpush2.msra.mxu0 0.0
      %431 = vmatprep.subr.mxu0 0.0
      %432 = vmatpush2.msra.mxu0 0.0
      %433 = vmatprep.subr.mxu0 0.0
      %434 = vmatpush2.msra.mxu0 0.0
      %435 = vmatprep.subr.mxu0 0.0
      %436 = vmatpush2.msra.mxu0 0.0
      %437 = vmatprep.subr.mxu0 0.0
      %438 = vmatpush2.msra.mxu0 0.0
      %439 = vmatprep.subr.mxu0 0.0
      %440 = vmatpush2.msra.mxu0 0.0
      %441 = vmatprep.subr.mxu0 0.0
      %442 = vmatpush2.msra.mxu0 0.0
      %443 = vmatprep.mubr.f32.mxu0 0.0
      %444 = vmatmul.mubr.f32.gmra.mxu0 %v280
      %v445 = vpop.f32.mrf.mxu0
      %v446 = vadd.f32 0.0, %v445
      %v447 = vpop.f32.mrf.mxu0
      %448 = vmatprep.mubr.f32.mxu0 0.0
      %449 = vmatmul.mubr.f32.gmra.mxu0 %v283
      %v450 = vpop.f32.mrf.mxu0
      %v451 = vadd.f32 0.0, %v450
      %v452 = vpop.f32.mrf.mxu0
      %453 = vmatprep.mubr.f32.mxu0 0.0
      %454 = vmatmul.mubr.f32.gmra.mxu0 %v286
      %v455 = vpop.f32.mrf.mxu0
      %v456 = vadd.f32 0.0, %v455
      %v457 = vpop.f32.mrf.mxu0
      %458 = vmatprep.mubr.f32.mxu0 0.0
      %459 = vmatmul.mubr.f32.gmra.mxu0 %v289
      %v460 = vpop.f32.mrf.mxu0
      %v461 = vadd.f32 0.0, %v460
      %v462 = vpop.f32.mrf.mxu0
      %463 = vmatprep.mubr.f32.mxu0 0.0
      %464 = vmatmul.mubr.f32.gmra.mxu0 %v292
      %v465 = vpop.f32.mrf.mxu0
      %v466 = vadd.f32 0.0, %v465
      %v467 = vpop.f32.mrf.mxu0
      %468 = vmatprep.mubr.f32.mxu0 0.0
      %469 = vmatmul.mubr.f32.gmra.mxu0 %v295
      %v470 = vpop.f32.mrf.mxu0
      %v471 = vadd.f32 0.0, %v470
      %v472 = vpop.f32.mrf.mxu0
      %473 = vmatprep.mubr.f32.mxu0 0.0
      %474 = vmatmul.mubr.f32.gmra.mxu0 %v298
      %v475 = vpop.f32.mrf.mxu0
      %v476 = vadd.f32 0.0, %v475
      %v477 = vpop.f32.mrf.mxu0
      %478 = vmatprep.mubr.f32.mxu0 0.0
      %479 = vmatmul.mubr.f32.gmra.mxu0 %v301
      %v480 = vpop.f32.mrf.mxu0
      %v481 = vadd.f32 0.0, %v480
      %v482 = vpop.f32.mrf.mxu0
      %483 = vmatprep.mubr.f32.mxu0 0.0
      %484 = vmatmul.mubr.f32.gmra.mxu0 %v304
      %v485 = vpop.f32.mrf.mxu0
      %v486 = vadd.f32 0.0, %v485
      %v487 = vpop.f32.mrf.mxu0
      %488 = vmatprep.mubr.f32.mxu0 0.0
      %489 = vmatmul.mubr.f32.gmra.mxu0 %v307
      %v490 = vpop.f32.mrf.mxu0
      %v491 = vadd.f32 0.0, %v490
      %v492 = vpop.f32.mrf.mxu0
      %493 = vmatprep.mubr.f32.mxu0 0.0
      %494 = vmatmul.mubr.f32.gmra.mxu0 %v310
      %v495 = vpop.f32.mrf.mxu0
      %v496 = vadd.f32 0.0, %v495
      %v497 = vpop.f32.mrf.mxu0
      %498 = vmatprep.mubr.f32.mxu0 0.0
      %499 = vmatmul.mubr.f32.gmra.mxu0 %v313
      %v500 = vpop.f32.mrf.mxu0
      %v501 = vadd.f32 0.0, %v500
      %v502 = vpop.f32.mrf.mxu0
      %503 = vmatprep.mubr.f32.mxu0 0.0
      %504 = vmatmul.mubr.f32.gmra.mxu0 %v316
      %v505 = vpop.f32.mrf.mxu0
      %v506 = vadd.f32 0.0, %v505
      %v507 = vpop.f32.mrf.mxu0
      %508 = vmatprep.mubr.f32.mxu0 0.0
      %509 = vmatmul.mubr.f32.gmra.mxu0 %v319
      %v510 = vpop.f32.mrf.mxu0
      %v511 = vadd.f32 0.0, %v510
      %v512 = vpop.f32.mrf.mxu0
      %513 = vmatprep.mubr.f32.mxu0 0.0
      %514 = vmatmul.mubr.f32.gmra.mxu0 %v322
      %v515 = vpop.f32.mrf.mxu0
      %v516 = vadd.f32 0.0, %v515
      %v517 = vpop.f32.mrf.mxu0
      %518 = vmatprep.mubr.f32.mxu0 0.0
      %519 = vmatmul.mubr.f32.gmra.mxu0 %v325
      %v520 = vpop.f32.mrf.mxu0
      %v521 = vadd.f32 0.0, %v520
      %v522 = vpop.f32.mrf.mxu0
      %523 = vmatprep.mubr.f32.mxu0 0.0
      %524 = vmatmul.mubr.f32.gmra.mxu0 %v328
      %v525 = vpop.f32.mrf.mxu0
      %v526 = vadd.f32 0.0, %v525
      %v527 = vpop.f32.mrf.mxu0
      %528 = vmatprep.mubr.f32.mxu0 0.0
      %529 = vmatmul.mubr.f32.gmra.mxu0 %v331
      %v530 = vpop.f32.mrf.mxu0
      %v531 = vadd.f32 0.0, %v530
      %v532 = vpop.f32.mrf.mxu0
      %533 = vmatprep.mubr.f32.mxu0 0.0
      %534 = vmatmul.mubr.f32.gmra.mxu0 %v334
      %v535 = vpop.f32.mrf.mxu0
      %v536 = vadd.f32 0.0, %v535
      %v537 = vpop.f32.mrf.mxu0
      %538 = vmatprep.mubr.f32.mxu0 0.0
      %539 = vmatmul.mubr.f32.gmra.mxu0 %v337
      %v540 = vpop.f32.mrf.mxu0
      %v541 = vadd.f32 0.0, %v540
      %v542 = vpop.f32.mrf.mxu0
      %543 = vmatprep.mubr.f32.mxu0 0.0
      %544 = vmatmul.mubr.f32.gmra.mxu0 %v340
      %v545 = vpop.f32.mrf.mxu0
      %v546 = vadd.f32 0.0, %v545
      %v547 = vpop.f32.mrf.mxu0
      %548 = vmatprep.mubr.f32.mxu0 0.0
      %549 = vmatmul.mubr.f32.gmra.mxu0 %v343
      %v550 = vpop.f32.mrf.mxu0
      %v551 = vadd.f32 0.0, %v550
      %v552 = vpop.f32.mrf.mxu0
      %553 = vmatprep.mubr.f32.mxu0 0.0
      %554 = vmatmul.mubr.f32.gmra.mxu0 %v346
      %v555 = vpop.f32.mrf.mxu0
      %v556 = vadd.f32 0.0, %v555
      %v557 = vpop.f32.mrf.mxu0
      %558 = vmatprep.mubr.f32.mxu0 0.0
      %559 = vmatmul.mubr.f32.gmra.mxu0 %v349
      %v560 = vpop.f32.mrf.mxu0
      %v561 = vadd.f32 0.0, %v560
      %v562 = vpop.f32.mrf.mxu0
      %563 = vmatprep.mubr.f32.mxu0 0.0
      %564 = vmatmul.mubr.f32.gmra.mxu0 %v352
      %v565 = vpop.f32.mrf.mxu0
      %v566 = vadd.f32 0.0, %v565
      %v567 = vpop.f32.mrf.mxu0
      %568 = vmatprep.mubr.f32.mxu0 0.0
      %569 = vmatmul.mubr.f32.gmra.mxu0 %v355
      %v570 = vpop.f32.mrf.mxu0
      %v571 = vadd.f32 0.0, %v570
      %v572 = vpop.f32.mrf.mxu0
      %573 = vmatprep.mubr.f32.mxu0 0.0
      %574 = vmatmul.mubr.f32.gmra.mxu0 %v358
      %v575 = vpop.f32.mrf.mxu0
      %v576 = vadd.f32 0.0, %v575
      %v577 = vpop.f32.mrf.mxu0
      %578 = vmatprep.mubr.f32.mxu0 0.0
      %579 = vmatmul.mubr.f32.gmra.mxu0 %v361
      %v580 = vpop.f32.mrf.mxu0
      %v581 = vadd.f32 0.0, %v580
      %v582 = vpop.f32.mrf.mxu0
      %583 = vmatprep.mubr.f32.mxu0 0.0
      %584 = vmatmul.mubr.f32.gmra.mxu0 %v364
      %v585 = vpop.f32.mrf.mxu0
      %v586 = vadd.f32 0.0, %v585
      %v587 = vpop.f32.mrf.mxu0
      %588 = vmatprep.mubr.f32.mxu0 0.0
      %589 = vmatmul.mubr.f32.gmra.mxu0 %v367
      %v590 = vpop.f32.mrf.mxu0
      %v591 = vadd.f32 0.0, %v590
      %v592 = vpop.f32.mrf.mxu0
      %593 = vmatprep.mubr.f32.mxu0 0.0
      %594 = vmatmul.mubr.f32.gmra.mxu0 %v370
      %v595 = vpop.f32.mrf.mxu0
      %v596 = vadd.f32 0.0, %v595
      %v597 = vpop.f32.mrf.mxu0
      %598 = vmatprep.mubr.f32.mxu0 0.0
      %599 = vmatmul.mubr.f32.gmra.mxu0 %v373
      %v600 = vpop.f32.mrf.mxu0
      %v601 = vadd.f32 0.0, %v600
      %v602 = vpop.f32.mrf.mxu0
      %603 = vdwg.mxu0
      %v605 = vsel %vm278, %v211, 0
      %v608 = vsel %vm278, %v212, 0
      %v611 = vsel %vm278, %v213, 0
      %v614 = vsel %vm278, %v214, 0
      %v617 = vsel %vm278, %v215, 0
      %v620 = vsel %vm278, %v216, 0
      %v623 = vsel %vm278, %v217, 0
      %v626 = vsel %vm278, %v218, 0
      %v629 = vsel %vm278, %v219, 0
      %v632 = vsel %vm278, %v220, 0
      %v635 = vsel %vm278, %v221, 0
      %v638 = vsel %vm278, %v222, 0
      %v641 = vsel %vm278, %v223, 0
      %v644 = vsel %vm278, %v224, 0
      %v647 = vsel %vm278, %v225, 0
      %v650 = vsel %vm278, %v226, 0
      %v653 = vsel %vm278, %v227, 0
      %v656 = vsel %vm278, %v228, 0
      %v659 = vsel %vm278, %v229, 0
      %v662 = vsel %vm278, %v230, 0
      %v665 = vsel %vm278, %v231, 0
      %v668 = vsel %vm278, %v232, 0
      %v671 = vsel %vm278, %v233, 0
      %v674 = vsel %vm278, %v234, 0
      %v677 = vsel %vm278, %v235, 0
      %v680 = vsel %vm278, %v236, 0
      %v683 = vsel %vm278, %v237, 0
      %v686 = vsel %vm278, %v238, 0
      %v689 = vsel %vm278, %v239, 0
      %v692 = vsel %vm278, %v240, 0
      %v695 = vsel %vm278, %v241, 0
      %v698 = vsel %vm278, %v242, 0
      %v701 = vsel %vm375, %v243, 0
      %703 = vmatprep.subr.mxu0 0.0
      %704 = vmatpush1.msra.mxu0 0.0
      %705 = vmatprep.subr.mxu0 0.0
      %706 = vmatpush1.msra.mxu0 0.0
      %707 = vmatprep.subr.mxu0 0.0
      %708 = vmatpush1.msra.mxu0 0.0
      %709 = vmatprep.subr.mxu0 0.0
      %710 = vmatpush1.msra.mxu0 0.0
      %711 = vmatprep.subr.mxu0 0.0
      %712 = vmatpush1.msra.mxu0 0.0
      %713 = vmatprep.subr.mxu0 0.0
      %714 = vmatpush1.msra.mxu0 0.0
      %715 = vmatprep.subr.mxu0 0.0
      %716 = vmatpush1.msra.mxu0 0.0
      %717 = vmatprep.subr.mxu0 0.0
      %718 = vmatpush1.msra.mxu0 0.0
      %719 = vmatprep.subr.mxu0 0.0
      %720 = vmatpush1.msra.mxu0 0.0
      %721 = vmatprep.subr.mxu0 0.0
      %722 = vmatpush1.msra.mxu0 0.0
      %723 = vmatprep.subr.mxu0 0.0
      %724 = vmatpush1.msra.mxu0 0.0
      %725 = vmatprep.subr.mxu0 0.0
      %726 = vmatpush1.msra.mxu0 0.0
      %727 = vmatprep.subr.mxu0 0.0
      %728 = vmatpush1.msra.mxu0 0.0
      %729 = vmatprep.subr.mxu0 0.0
      %730 = vmatpush1.msra.mxu0 0.0
      %731 = vmatprep.subr.mxu0 0.0
      %732 = vmatpush1.msra.mxu0 0.0
      %733 = vmatprep.subr.mxu0 0.0
      %734 = vmatpush1.msra.mxu0 %v701
      %735 = vmatprep.subr.mxu0 0.0
      %736 = vmatpush2.msra.mxu0 0.0
      %737 = vmatprep.subr.mxu0 0.0
      %738 = vmatpush2.msra.mxu0 0.0
      %739 = vmatprep.subr.mxu0 0.0
      %740 = vmatpush2.msra.mxu0 0.0
      %741 = vmatprep.subr.mxu0 0.0
      %742 = vmatpush2.msra.mxu0 0.0
      %743 = vmatprep.subr.mxu0 0.0
      %744 = vmatpush2.msra.mxu0 0.0
      %745 = vmatprep.subr.mxu0 0.0
      %746 = vmatpush2.msra.mxu0 0.0
      %747 = vmatprep.subr.mxu0 0.0
      %748 = vmatpush2.msra.mxu0 0.0
      %749 = vmatprep.subr.mxu0 0.0
      %750 = vmatpush2.msra.mxu0 0.0
      %751 = vmatprep.subr.mxu0 0.0
      %752 = vmatpush2.msra.mxu0 0.0
      %753 = vmatprep.subr.mxu0 0.0
      %754 = vmatpush2.msra.mxu0 0.0
      %755 = vmatprep.subr.mxu0 0.0
      %756 = vmatpush2.msra.mxu0 0.0
      %757 = vmatprep.subr.mxu0 0.0
      %758 = vmatpush2.msra.mxu0 0.0
      %759 = vmatprep.subr.mxu0 0.0
      %760 = vmatpush2.msra.mxu0 0.0
      %761 = vmatprep.subr.mxu0 0.0
      %762 = vmatpush2.msra.mxu0 0.0
      %763 = vmatprep.subr.mxu0 0.0
      %764 = vmatpush2.msra.mxu0 0.0
      %765 = vmatprep.subr.mxu0 0.0
      %766 = vmatpush2.msra.mxu0 0.0
      %767 = vmatprep.mubr.f32.mxu0 0.0
      %768 = vmatmul.mubr.f32.gmra.mxu0 %v605
      %v769 = vpop.f32.mrf.mxu0
      %v770 = vadd.f32 %v446, %v769
      %v771 = vpop.f32.mrf.mxu0
      %772 = vmatprep.mubr.f32.mxu0 0.0
      %773 = vmatmul.mubr.f32.gmra.mxu0 %v608
      %v774 = vpop.f32.mrf.mxu0
      %v775 = vadd.f32 %v451, %v774
      %v776 = vpop.f32.mrf.mxu0
      %777 = vmatprep.mubr.f32.mxu0 0.0
      %778 = vmatmul.mubr.f32.gmra.mxu0 %v611
      %v779 = vpop.f32.mrf.mxu0
      %v780 = vadd.f32 %v456, %v779
      %v781 = vpop.f32.mrf.mxu0
      %782 = vmatprep.mubr.f32.mxu0 0.0
      %783 = vmatmul.mubr.f32.gmra.mxu0 %v614
      %v784 = vpop.f32.mrf.mxu0
      %v785 = vadd.f32 %v461, %v784
      %v786 = vpop.f32.mrf.mxu0
      %787 = vmatprep.mubr.f32.mxu0 0.0
      %788 = vmatmul.mubr.f32.gmra.mxu0 %v617
      %v789 = vpop.f32.mrf.mxu0
      %v790 = vadd.f32 %v466, %v789
      %v791 = vpop.f32.mrf.mxu0
      %792 = vmatprep.mubr.f32.mxu0 0.0
      %793 = vmatmul.mubr.f32.gmra.mxu0 %v620
      %v794 = vpop.f32.mrf.mxu0
      %v795 = vadd.f32 %v471, %v794
      %v796 = vpop.f32.mrf.mxu0
      %797 = vmatprep.mubr.f32.mxu0 0.0
      %798 = vmatmul.mubr.f32.gmra.mxu0 %v623
      %v799 = vpop.f32.mrf.mxu0
      %v800 = vadd.f32 %v476, %v799
      %v801 = vpop.f32.mrf.mxu0
      %802 = vmatprep.mubr.f32.mxu0 0.0
      %803 = vmatmul.mubr.f32.gmra.mxu0 %v626
      %v804 = vpop.f32.mrf.mxu0
      %v805 = vadd.f32 %v481, %v804
      %v806 = vpop.f32.mrf.mxu0
      %807 = vmatprep.mubr.f32.mxu0 0.0
      %808 = vmatmul.mubr.f32.gmra.mxu0 %v629
      %v809 = vpop.f32.mrf.mxu0
      %v810 = vadd.f32 %v486, %v809
      %v811 = vpop.f32.mrf.mxu0
      %812 = vmatprep.mubr.f32.mxu0 0.0
      %813 = vmatmul.mubr.f32.gmra.mxu0 %v632
      %v814 = vpop.f32.mrf.mxu0
      %v815 = vadd.f32 %v491, %v814
      %v816 = vpop.f32.mrf.mxu0
      %817 = vmatprep.mubr.f32.mxu0 0.0
      %818 = vmatmul.mubr.f32.gmra.mxu0 %v635
      %v819 = vpop.f32.mrf.mxu0
      %v820 = vadd.f32 %v496, %v819
      %v821 = vpop.f32.mrf.mxu0
      %822 = vmatprep.mubr.f32.mxu0 0.0
      %823 = vmatmul.mubr.f32.gmra.mxu0 %v638
      %v824 = vpop.f32.mrf.mxu0
      %v825 = vadd.f32 %v501, %v824
      %v826 = vpop.f32.mrf.mxu0
      %827 = vmatprep.mubr.f32.mxu0 0.0
      %828 = vmatmul.mubr.f32.gmra.mxu0 %v641
      %v829 = vpop.f32.mrf.mxu0
      %v830 = vadd.f32 %v506, %v829
      %v831 = vpop.f32.mrf.mxu0
      %832 = vmatprep.mubr.f32.mxu0 0.0
      %833 = vmatmul.mubr.f32.gmra.mxu0 %v644
      %v834 = vpop.f32.mrf.mxu0
      %v835 = vadd.f32 %v511, %v834
      %v836 = vpop.f32.mrf.mxu0
      %837 = vmatprep.mubr.f32.mxu0 0.0
      %838 = vmatmul.mubr.f32.gmra.mxu0 %v647
      %v839 = vpop.f32.mrf.mxu0
      %v840 = vadd.f32 %v516, %v839
      %v841 = vpop.f32.mrf.mxu0
      %842 = vmatprep.mubr.f32.mxu0 0.0
      %843 = vmatmul.mubr.f32.gmra.mxu0 %v650
      %v844 = vpop.f32.mrf.mxu0
      %v845 = vadd.f32 %v521, %v844
      %v846 = vpop.f32.mrf.mxu0
      %847 = vmatprep.mubr.f32.mxu0 0.0
      %848 = vmatmul.mubr.f32.gmra.mxu0 %v653
      %v849 = vpop.f32.mrf.mxu0
      %v850 = vadd.f32 %v526, %v849
      %v851 = vpop.f32.mrf.mxu0
      %852 = vmatprep.mubr.f32.mxu0 0.0
      %853 = vmatmul.mubr.f32.gmra.mxu0 %v656
      %v854 = vpop.f32.mrf.mxu0
      %v855 = vadd.f32 %v531, %v854
      %v856 = vpop.f32.mrf.mxu0
      %857 = vmatprep.mubr.f32.mxu0 0.0
      %858 = vmatmul.mubr.f32.gmra.mxu0 %v659
      %v859 = vpop.f32.mrf.mxu0
      %v860 = vadd.f32 %v536, %v859
      %v861 = vpop.f32.mrf.mxu0
      %862 = vmatprep.mubr.f32.mxu0 0.0
      %863 = vmatmul.mubr.f32.gmra.mxu0 %v662
      %v864 = vpop.f32.mrf.mxu0
      %v865 = vadd.f32 %v541, %v864
      %v866 = vpop.f32.mrf.mxu0
      %867 = vmatprep.mubr.f32.mxu0 0.0
      %868 = vmatmul.mubr.f32.gmra.mxu0 %v665
      %v869 = vpop.f32.mrf.mxu0
      %v870 = vadd.f32 %v546, %v869
      %v871 = vpop.f32.mrf.mxu0
      %872 = vmatprep.mubr.f32.mxu0 0.0
      %873 = vmatmul.mubr.f32.gmra.mxu0 %v668
      %v874 = vpop.f32.mrf.mxu0
      %v875 = vadd.f32 %v551, %v874
      %v876 = vpop.f32.mrf.mxu0
      %877 = vmatprep.mubr.f32.mxu0 0.0
      %878 = vmatmul.mubr.f32.gmra.mxu0 %v671
      %v879 = vpop.f32.mrf.mxu0
      %v880 = vadd.f32 %v556, %v879
      %v881 = vpop.f32.mrf.mxu0
      %882 = vmatprep.mubr.f32.mxu0 0.0
      %883 = vmatmul.mubr.f32.gmra.mxu0 %v674
      %v884 = vpop.f32.mrf.mxu0
      %v885 = vadd.f32 %v561, %v884
      %v886 = vpop.f32.mrf.mxu0
      %887 = vmatprep.mubr.f32.mxu0 0.0
      %888 = vmatmul.mubr.f32.gmra.mxu0 %v677
      %v889 = vpop.f32.mrf.mxu0
      %v890 = vadd.f32 %v566, %v889
      %v891 = vpop.f32.mrf.mxu0
      %892 = vmatprep.mubr.f32.mxu0 0.0
      %893 = vmatmul.mubr.f32.gmra.mxu0 %v680
      %v894 = vpop.f32.mrf.mxu0
      %v895 = vadd.f32 %v571, %v894
      %v896 = vpop.f32.mrf.mxu0
      %897 = vmatprep.mubr.f32.mxu0 0.0
      %898 = vmatmul.mubr.f32.gmra.mxu0 %v683
      %v899 = vpop.f32.mrf.mxu0
      %v900 = vadd.f32 %v576, %v899
      %v901 = vpop.f32.mrf.mxu0
      %902 = vmatprep.mubr.f32.mxu0 0.0
      %903 = vmatmul.mubr.f32.gmra.mxu0 %v686
      %v904 = vpop.f32.mrf.mxu0
      %v905 = vadd.f32 %v581, %v904
      %v906 = vpop.f32.mrf.mxu0
      %907 = vmatprep.mubr.f32.mxu0 0.0
      %908 = vmatmul.mubr.f32.gmra.mxu0 %v689
      %v909 = vpop.f32.mrf.mxu0
      %v910 = vadd.f32 %v586, %v909
      %v911 = vpop.f32.mrf.mxu0
      %912 = vmatprep.mubr.f32.mxu0 0.0
      %913 = vmatmul.mubr.f32.gmra.mxu0 %v692
      %v914 = vpop.f32.mrf.mxu0
      %v915 = vadd.f32 %v591, %v914
      %v916 = vpop.f32.mrf.mxu0
      %917 = vmatprep.mubr.f32.mxu0 0.0
      %918 = vmatmul.mubr.f32.gmra.mxu0 %v695
      %v919 = vpop.f32.mrf.mxu0
      %v920 = vadd.f32 %v596, %v919
      %v921 = vpop.f32.mrf.mxu0
      %922 = vmatprep.mubr.f32.mxu0 0.0
      %923 = vmatmul.mubr.f32.gmra.mxu0 %v698
      %v924 = vpop.f32.mrf.mxu0
      %v925 = vadd.f32 %v601, %v924
      %v926 = vpop.f32.mrf.mxu0
      %927 = vdwg.mxu0
      %v928 = vld [vmem:[%s210 + $0x2] sm:$0xff]
      %v929 = vld [vmem:[%s210 + $0xa] sm:$0xff]
      %v930 = vld [vmem:[%s210 + $0x1a] sm:$0xff]
      %v931 = vld [vmem:[%s210 + $0x22] sm:$0xff]
      %v932 = vld [vmem:[%s210 + $0x32] sm:$0xff]
      %v933 = vld [vmem:[%s210 + $0x3a] sm:$0xff]
      %v934 = vld [vmem:[%s210 + $0x4a] sm:$0xff]
      %v935 = vld [vmem:[%s210 + $0x52] sm:$0xff]
      %v936 = vld [vmem:[%s210 + $0x62] sm:$0xff]
      %v937 = vld [vmem:[%s210 + $0x6a] sm:$0xff]
      %v938 = vld [vmem:[%s210 + $0x7a] sm:$0xff]
      %v939 = vld [vmem:[%s210 + $0x82] sm:$0xff]
      %v940 = vld [vmem:[%s210 + $0x92] sm:$0xff]
      %v941 = vld [vmem:[%s210 + $0x9a] sm:$0xff]
      %v942 = vld [vmem:[%s210 + $0xaa] sm:$0xff]
      %v943 = vld [vmem:[%s210 + $0xb2] sm:$0xff]
      %v944 = vld [vmem:[%s210 + $0xc2] sm:$0xff]
      %v945 = vld [vmem:[%s210 + $0xca] sm:$0xff]
      %v946 = vld [vmem:[%s210 + $0xda] sm:$0xff]
      %v947 = vld [vmem:[%s210 + $0xe2] sm:$0xff]
      %v948 = vld [vmem:[%s210 + $0xf2] sm:$0xff]
      %v949 = vld [vmem:[%s210 + $0xfa] sm:$0xff]
      %v950 = vld [vmem:[%s210 + $0x10a] sm:$0xff]
      %v951 = vld [vmem:[%s210 + $0x112] sm:$0xff]
      %v952 = vld [vmem:[%s210 + $0x122] sm:$0xff]
      %v953 = vld [vmem:[%s210 + $0x12a] sm:$0xff]
      %v954 = vld [vmem:[%s210 + $0x13a] sm:$0xff]
      %v955 = vld [vmem:[%s210 + $0x142] sm:$0xff]
      %v956 = vld [vmem:[%s210 + $0x152] sm:$0xff]
      %v957 = vld [vmem:[%s210 + $0x15a] sm:$0xff]
      %v958 = vld [vmem:[%s210 + $0x16a] sm:$0xff]
      %v959 = vld [vmem:[%s210 + $0x172] sm:$0xff]
      %s960 = scalar_lea.vmem %s1, 8
      %v961 = vld [vmem:[%s960] sm:$0xf]
      %v963 = vsel %vm278, %v928, 0
      %v966 = vsel %vm278, %v929, 0
      %v969 = vsel %vm278, %v930, 0
      %v972 = vsel %vm278, %v931, 0
      %v975 = vsel %vm278, %v932, 0
      %v978 = vsel %vm278, %v933, 0
      %v981 = vsel %vm278, %v934, 0
      %v984 = vsel %vm278, %v935, 0
      %v987 = vsel %vm278, %v936, 0
      %v990 = vsel %vm278, %v937, 0
      %v993 = vsel %vm278, %v938, 0
      %v996 = vsel %vm278, %v939, 0
      %v999 = vsel %vm278, %v940, 0
      %v1002 = vsel %vm278, %v941, 0
      %v1005 = vsel %vm278, %v942, 0
      %v1008 = vsel %vm278, %v943, 0
      %v1011 = vsel %vm278, %v944, 0
      %v1014 = vsel %vm278, %v945, 0
      %v1017 = vsel %vm278, %v946, 0
      %v1020 = vsel %vm278, %v947, 0
      %v1023 = vsel %vm278, %v948, 0
      %v1026 = vsel %vm278, %v949, 0
      %v1029 = vsel %vm278, %v950, 0
      %v1032 = vsel %vm278, %v951, 0
      %v1035 = vsel %vm278, %v952, 0
      %v1038 = vsel %vm278, %v953, 0
      %v1041 = vsel %vm278, %v954, 0
      %v1044 = vsel %vm278, %v955, 0
      %v1047 = vsel %vm278, %v956, 0
      %v1050 = vsel %vm278, %v957, 0
      %v1053 = vsel %vm278, %v958, 0
      %v1056 = vsel %vm278, %v959, 0
      %v1059 = vsel %vm375, %v961, 0
      %1061 = vmatprep.subr.mxu0 0.0
      %1062 = vmatpush1.msra.mxu0 0.0
      %1063 = vmatprep.subr.mxu0 0.0
      %1064 = vmatpush1.msra.mxu0 0.0
      %1065 = vmatprep.subr.mxu0 0.0
      %1066 = vmatpush1.msra.mxu0 0.0
      %1067 = vmatprep.subr.mxu0 0.0
      %1068 = vmatpush1.msra.mxu0 0.0
      %1069 = vmatprep.subr.mxu0 0.0
      %1070 = vmatpush1.msra.mxu0 0.0
      %1071 = vmatprep.subr.mxu0 0.0
      %1072 = vmatpush1.msra.mxu0 0.0
      %1073 = vmatprep.subr.mxu0 0.0
      %1074 = vmatpush1.msra.mxu0 0.0
      %1075 = vmatprep.subr.mxu0 0.0
      %1076 = vmatpush1.msra.mxu0 0.0
      %1077 = vmatprep.subr.mxu0 0.0
      %1078 = vmatpush1.msra.mxu0 0.0
      %1079 = vmatprep.subr.mxu0 0.0
      %1080 = vmatpush1.msra.mxu0 0.0
      %1081 = vmatprep.subr.mxu0 0.0
      %1082 = vmatpush1.msra.mxu0 0.0
      %1083 = vmatprep.subr.mxu0 0.0
      %1084 = vmatpush1.msra.mxu0 0.0
      %1085 = vmatprep.subr.mxu0 0.0
      %1086 = vmatpush1.msra.mxu0 0.0
      %1087 = vmatprep.subr.mxu0 0.0
      %1088 = vmatpush1.msra.mxu0 0.0
      %1089 = vmatprep.subr.mxu0 0.0
      %1090 = vmatpush1.msra.mxu0 0.0
      %1091 = vmatprep.subr.mxu0 0.0
      %1092 = vmatpush1.msra.mxu0 %v1059
      %1093 = vmatprep.subr.mxu0 0.0
      %1094 = vmatpush2.msra.mxu0 0.0
      %1095 = vmatprep.subr.mxu0 0.0
      %1096 = vmatpush2.msra.mxu0 0.0
      %1097 = vmatprep.subr.mxu0 0.0
      %1098 = vmatpush2.msra.mxu0 0.0
      %1099 = vmatprep.subr.mxu0 0.0
      %1100 = vmatpush2.msra.mxu0 0.0
      %1101 = vmatprep.subr.mxu0 0.0
      %1102 = vmatpush2.msra.mxu0 0.0
      %1103 = vmatprep.subr.mxu0 0.0
      %1104 = vmatpush2.msra.mxu0 0.0
      %1105 = vmatprep.subr.mxu0 0.0
      %1106 = vmatpush2.msra.mxu0 0.0
      %1107 = vmatprep.subr.mxu0 0.0
      %1108 = vmatpush2.msra.mxu0 0.0
      %1109 = vmatprep.subr.mxu0 0.0
      %1110 = vmatpush2.msra.mxu0 0.0
      %1111 = vmatprep.subr.mxu0 0.0
      %1112 = vmatpush2.msra.mxu0 0.0
      %1113 = vmatprep.subr.mxu0 0.0
      %1114 = vmatpush2.msra.mxu0 0.0
      %1115 = vmatprep.subr.mxu0 0.0
      %1116 = vmatpush2.msra.mxu0 0.0
      %1117 = vmatprep.subr.mxu0 0.0
      %1118 = vmatpush2.msra.mxu0 0.0
      %1119 = vmatprep.subr.mxu0 0.0
      %1120 = vmatpush2.msra.mxu0 0.0
      %1121 = vmatprep.subr.mxu0 0.0
      %1122 = vmatpush2.msra.mxu0 0.0
      %1123 = vmatprep.subr.mxu0 0.0
      %1124 = vmatpush2.msra.mxu0 0.0
      %1125 = vmatprep.mubr.f32.mxu0 0.0
      %1126 = vmatmul.mubr.f32.gmra.mxu0 %v963
      %v1127 = vpop.f32.mrf.mxu0
      %v1128 = vadd.f32 0.0, %v1127
      %v1129 = vpop.f32.mrf.mxu0
      %1130 = vmatprep.mubr.f32.mxu0 0.0
      %1131 = vmatmul.mubr.f32.gmra.mxu0 %v966
      %v1132 = vpop.f32.mrf.mxu0
      %v1133 = vadd.f32 0.0, %v1132
      %v1134 = vpop.f32.mrf.mxu0
      %1135 = vmatprep.mubr.f32.mxu0 0.0
      %1136 = vmatmul.mubr.f32.gmra.mxu0 %v969
      %v1137 = vpop.f32.mrf.mxu0
      %v1138 = vadd.f32 0.0, %v1137
      %v1139 = vpop.f32.mrf.mxu0
      %1140 = vmatprep.mubr.f32.mxu0 0.0
      %1141 = vmatmul.mubr.f32.gmra.mxu0 %v972
      %v1142 = vpop.f32.mrf.mxu0
      %v1143 = vadd.f32 0.0, %v1142
      %v1144 = vpop.f32.mrf.mxu0
      %1145 = vmatprep.mubr.f32.mxu0 0.0
      %1146 = vmatmul.mubr.f32.gmra.mxu0 %v975
      %v1147 = vpop.f32.mrf.mxu0
      %v1148 = vadd.f32 0.0, %v1147
      %v1149 = vpop.f32.mrf.mxu0
      %1150 = vmatprep.mubr.f32.mxu0 0.0
      %1151 = vmatmul.mubr.f32.gmra.mxu0 %v978
      %v1152 = vpop.f32.mrf.mxu0
      %v1153 = vadd.f32 0.0, %v1152
      %v1154 = vpop.f32.mrf.mxu0
      %1155 = vmatprep.mubr.f32.mxu0 0.0
      %1156 = vmatmul.mubr.f32.gmra.mxu0 %v981
      %v1157 = vpop.f32.mrf.mxu0
      %v1158 = vadd.f32 0.0, %v1157
      %v1159 = vpop.f32.mrf.mxu0
      %1160 = vmatprep.mubr.f32.mxu0 0.0
      %1161 = vmatmul.mubr.f32.gmra.mxu0 %v984
      %v1162 = vpop.f32.mrf.mxu0
      %v1163 = vadd.f32 0.0, %v1162
      %v1164 = vpop.f32.mrf.mxu0
      %1165 = vmatprep.mubr.f32.mxu0 0.0
      %1166 = vmatmul.mubr.f32.gmra.mxu0 %v987
      %v1167 = vpop.f32.mrf.mxu0
      %v1168 = vadd.f32 0.0, %v1167
      %v1169 = vpop.f32.mrf.mxu0
      %1170 = vmatprep.mubr.f32.mxu0 0.0
      %1171 = vmatmul.mubr.f32.gmra.mxu0 %v990
      %v1172 = vpop.f32.mrf.mxu0
      %v1173 = vadd.f32 0.0, %v1172
      %v1174 = vpop.f32.mrf.mxu0
      %1175 = vmatprep.mubr.f32.mxu0 0.0
      %1176 = vmatmul.mubr.f32.gmra.mxu0 %v993
      %v1177 = vpop.f32.mrf.mxu0
      %v1178 = vadd.f32 0.0, %v1177
      %v1179 = vpop.f32.mrf.mxu0
      %1180 = vmatprep.mubr.f32.mxu0 0.0
      %1181 = vmatmul.mubr.f32.gmra.mxu0 %v996
      %v1182 = vpop.f32.mrf.mxu0
      %v1183 = vadd.f32 0.0, %v1182
      %v1184 = vpop.f32.mrf.mxu0
      %1185 = vmatprep.mubr.f32.mxu0 0.0
      %1186 = vmatmul.mubr.f32.gmra.mxu0 %v999
      %v1187 = vpop.f32.mrf.mxu0
      %v1188 = vadd.f32 0.0, %v1187
      %v1189 = vpop.f32.mrf.mxu0
      %1190 = vmatprep.mubr.f32.mxu0 0.0
      %1191 = vmatmul.mubr.f32.gmra.mxu0 %v1002
      %v1192 = vpop.f32.mrf.mxu0
      %v1193 = vadd.f32 0.0, %v1192
      %v1194 = vpop.f32.mrf.mxu0
      %1195 = vmatprep.mubr.f32.mxu0 0.0
      %1196 = vmatmul.mubr.f32.gmra.mxu0 %v1005
      %v1197 = vpop.f32.mrf.mxu0
      %v1198 = vadd.f32 0.0, %v1197
      %v1199 = vpop.f32.mrf.mxu0
      %1200 = vmatprep.mubr.f32.mxu0 0.0
      %1201 = vmatmul.mubr.f32.gmra.mxu0 %v1008
      %v1202 = vpop.f32.mrf.mxu0
      %v1203 = vadd.f32 0.0, %v1202
      %v1204 = vpop.f32.mrf.mxu0
      %1205 = vmatprep.mubr.f32.mxu0 0.0
      %1206 = vmatmul.mubr.f32.gmra.mxu0 %v1011
      %v1207 = vpop.f32.mrf.mxu0
      %v1208 = vadd.f32 0.0, %v1207
      %v1209 = vpop.f32.mrf.mxu0
      %1210 = vmatprep.mubr.f32.mxu0 0.0
      %1211 = vmatmul.mubr.f32.gmra.mxu0 %v1014
      %v1212 = vpop.f32.mrf.mxu0
      %v1213 = vadd.f32 0.0, %v1212
      %v1214 = vpop.f32.mrf.mxu0
      %1215 = vmatprep.mubr.f32.mxu0 0.0
      %1216 = vmatmul.mubr.f32.gmra.mxu0 %v1017
      %v1217 = vpop.f32.mrf.mxu0
      %v1218 = vadd.f32 0.0, %v1217
      %v1219 = vpop.f32.mrf.mxu0
      %1220 = vmatprep.mubr.f32.mxu0 0.0
      %1221 = vmatmul.mubr.f32.gmra.mxu0 %v1020
      %v1222 = vpop.f32.mrf.mxu0
      %v1223 = vadd.f32 0.0, %v1222
      %v1224 = vpop.f32.mrf.mxu0
      %1225 = vmatprep.mubr.f32.mxu0 0.0
      %1226 = vmatmul.mubr.f32.gmra.mxu0 %v1023
      %v1227 = vpop.f32.mrf.mxu0
      %v1228 = vadd.f32 0.0, %v1227
      %v1229 = vpop.f32.mrf.mxu0
      %1230 = vmatprep.mubr.f32.mxu0 0.0
      %1231 = vmatmul.mubr.f32.gmra.mxu0 %v1026
      %v1232 = vpop.f32.mrf.mxu0
      %v1233 = vadd.f32 0.0, %v1232
      %v1234 = vpop.f32.mrf.mxu0
      %1235 = vmatprep.mubr.f32.mxu0 0.0
      %1236 = vmatmul.mubr.f32.gmra.mxu0 %v1029
      %v1237 = vpop.f32.mrf.mxu0
      %v1238 = vadd.f32 0.0, %v1237
      %v1239 = vpop.f32.mrf.mxu0
      %1240 = vmatprep.mubr.f32.mxu0 0.0
      %1241 = vmatmul.mubr.f32.gmra.mxu0 %v1032
      %v1242 = vpop.f32.mrf.mxu0
      %v1243 = vadd.f32 0.0, %v1242
      %v1244 = vpop.f32.mrf.mxu0
      %1245 = vmatprep.mubr.f32.mxu0 0.0
      %1246 = vmatmul.mubr.f32.gmra.mxu0 %v1035
      %v1247 = vpop.f32.mrf.mxu0
      %v1248 = vadd.f32 0.0, %v1247
      %v1249 = vpop.f32.mrf.mxu0
      %1250 = vmatprep.mubr.f32.mxu0 0.0
      %1251 = vmatmul.mubr.f32.gmra.mxu0 %v1038
      %v1252 = vpop.f32.mrf.mxu0
      %v1253 = vadd.f32 0.0, %v1252
      %v1254 = vpop.f32.mrf.mxu0
      %1255 = vmatprep.mubr.f32.mxu0 0.0
      %1256 = vmatmul.mubr.f32.gmra.mxu0 %v1041
      %v1257 = vpop.f32.mrf.mxu0
      %v1258 = vadd.f32 0.0, %v1257
      %v1259 = vpop.f32.mrf.mxu0
      %1260 = vmatprep.mubr.f32.mxu0 0.0
      %1261 = vmatmul.mubr.f32.gmra.mxu0 %v1044
      %v1262 = vpop.f32.mrf.mxu0
      %v1263 = vadd.f32 0.0, %v1262
      %v1264 = vpop.f32.mrf.mxu0
      %1265 = vmatprep.mubr.f32.mxu0 0.0
      %1266 = vmatmul.mubr.f32.gmra.mxu0 %v1047
      %v1267 = vpop.f32.mrf.mxu0
      %v1268 = vadd.f32 0.0, %v1267
      %v1269 = vpop.f32.mrf.mxu0
      %1270 = vmatprep.mubr.f32.mxu0 0.0
      %1271 = vmatmul.mubr.f32.gmra.mxu0 %v1050
      %v1272 = vpop.f32.mrf.mxu0
      %v1273 = vadd.f32 0.0, %v1272
      %v1274 = vpop.f32.mrf.mxu0
      %1275 = vmatprep.mubr.f32.mxu0 0.0
      %1276 = vmatmul.mubr.f32.gmra.mxu0 %v1053
      %v1277 = vpop.f32.mrf.mxu0
      %v1278 = vadd.f32 0.0, %v1277
      %v1279 = vpop.f32.mrf.mxu0
      %1280 = vmatprep.mubr.f32.mxu0 0.0
      %1281 = vmatmul.mubr.f32.gmra.mxu0 %v1056
      %v1282 = vpop.f32.mrf.mxu0
      %v1283 = vadd.f32 0.0, %v1282
      %v1284 = vpop.f32.mrf.mxu0
      %1285 = vdwg.mxu0
      %v1286 = vadd.f32 %v770, %v1128
      %v1287 = vadd.f32 %v775, %v1133
      %v1288 = vadd.f32 %v780, %v1138
      %v1289 = vadd.f32 %v785, %v1143
      %v1290 = vadd.f32 %v790, %v1148
      %v1291 = vadd.f32 %v795, %v1153
      %v1292 = vadd.f32 %v800, %v1158
      %v1293 = vadd.f32 %v805, %v1163
      %v1294 = vadd.f32 %v810, %v1168
      %v1295 = vadd.f32 %v815, %v1173
      %v1296 = vadd.f32 %v820, %v1178
      %v1297 = vadd.f32 %v825, %v1183
      %v1298 = vadd.f32 %v830, %v1188
      %v1299 = vadd.f32 %v835, %v1193
      %v1300 = vadd.f32 %v840, %v1198
      %v1301 = vadd.f32 %v845, %v1203
      %v1302 = vadd.f32 %v850, %v1208
      %v1303 = vadd.f32 %v855, %v1213
      %v1304 = vadd.f32 %v860, %v1218
      %v1305 = vadd.f32 %v865, %v1223
      %v1306 = vadd.f32 %v870, %v1228
      %v1307 = vadd.f32 %v875, %v1233
      %v1308 = vadd.f32 %v880, %v1238
      %v1309 = vadd.f32 %v885, %v1243
      %v1310 = vadd.f32 %v890, %v1248
      %v1311 = vadd.f32 %v895, %v1253
      %v1312 = vadd.f32 %v900, %v1258
      %v1313 = vadd.f32 %v905, %v1263
      %v1314 = vadd.f32 %v910, %v1268
      %v1315 = vadd.f32 %v915, %v1273
      %v1316 = vadd.f32 %v920, %v1278
      %v1317 = vadd.f32 %v925, %v1283
      %s1318 = sadd.s32 %s208, 1
      %s1319 = smul.u32 %s1318, 24
      %s1320 = scalar_lea.vmem %s192, %s1319
      %v1321 = vld [vmem:[%s1320] sm:$0xff]
      %v1322 = vld [vmem:[%s1320 + $0x8] sm:$0xff]
      %v1323 = vld [vmem:[%s1320 + $0x18] sm:$0xff]
      %v1324 = vld [vmem:[%s1320 + $0x20] sm:$0xff]
      %v1325 = vld [vmem:[%s1320 + $0x30] sm:$0xff]
      %v1326 = vld [vmem:[%s1320 + $0x38] sm:$0xff]
      %v1327 = vld [vmem:[%s1320 + $0x48] sm:$0xff]
      %v1328 = vld [vmem:[%s1320 + $0x50] sm:$0xff]
      %v1329 = vld [vmem:[%s1320 + $0x60] sm:$0xff]
      %v1330 = vld [vmem:[%s1320 + $0x68] sm:$0xff]
      %v1331 = vld [vmem:[%s1320 + $0x78] sm:$0xff]
      %v1332 = vld [vmem:[%s1320 + $0x80] sm:$0xff]
      %v1333 = vld [vmem:[%s1320 + $0x90] sm:$0xff]
      %v1334 = vld [vmem:[%s1320 + $0x98] sm:$0xff]
      %v1335 = vld [vmem:[%s1320 + $0xa8] sm:$0xff]
      %v1336 = vld [vmem:[%s1320 + $0xb0] sm:$0xff]
      %v1337 = vld [vmem:[%s1320 + $0xc0] sm:$0xff]
      %v1338 = vld [vmem:[%s1320 + $0xc8] sm:$0xff]
      %v1339 = vld [vmem:[%s1320 + $0xd8] sm:$0xff]
      %v1340 = vld [vmem:[%s1320 + $0xe0] sm:$0xff]
      %v1341 = vld [vmem:[%s1320 + $0xf0] sm:$0xff]
      %v1342 = vld [vmem:[%s1320 + $0xf8] sm:$0xff]
      %v1343 = vld [vmem:[%s1320 + $0x108] sm:$0xff]
      %v1344 = vld [vmem:[%s1320 + $0x110] sm:$0xff]
      %v1345 = vld [vmem:[%s1320 + $0x120] sm:$0xff]
      %v1346 = vld [vmem:[%s1320 + $0x128] sm:$0xff]
      %v1347 = vld [vmem:[%s1320 + $0x138] sm:$0xff]
      %v1348 = vld [vmem:[%s1320 + $0x140] sm:$0xff]
      %v1349 = vld [vmem:[%s1320 + $0x150] sm:$0xff]
      %v1350 = vld [vmem:[%s1320 + $0x158] sm:$0xff]
      %v1351 = vld [vmem:[%s1320 + $0x168] sm:$0xff]
      %v1352 = vld [vmem:[%s1320 + $0x170] sm:$0xff]
      %s1353 = scalar_lea.vmem %s1, 12
      %v1354 = vld [vmem:[%s1353] sm:$0xf]
      %v1356 = vsel %vm278, %v1321, 0
      %v1359 = vsel %vm278, %v1322, 0
      %v1362 = vsel %vm278, %v1323, 0
      %v1365 = vsel %vm278, %v1324, 0
      %v1368 = vsel %vm278, %v1325, 0
      %v1371 = vsel %vm278, %v1326, 0
      %v1374 = vsel %vm278, %v1327, 0
      %v1377 = vsel %vm278, %v1328, 0
      %v1380 = vsel %vm278, %v1329, 0
      %v1383 = vsel %vm278, %v1330, 0
      %v1386 = vsel %vm278, %v1331, 0
      %v1389 = vsel %vm278, %v1332, 0
      %v1392 = vsel %vm278, %v1333, 0
      %v1395 = vsel %vm278, %v1334, 0
      %v1398 = vsel %vm278, %v1335, 0
      %v1401 = vsel %vm278, %v1336, 0
      %v1404 = vsel %vm278, %v1337, 0
      %v1407 = vsel %vm278, %v1338, 0
      %v1410 = vsel %vm278, %v1339, 0
      %v1413 = vsel %vm278, %v1340, 0
      %v1416 = vsel %vm278, %v1341, 0
      %v1419 = vsel %vm278, %v1342, 0
      %v1422 = vsel %vm278, %v1343, 0
      %v1425 = vsel %vm278, %v1344, 0
      %v1428 = vsel %vm278, %v1345, 0
      %v1431 = vsel %vm278, %v1346, 0
      %v1434 = vsel %vm278, %v1347, 0
      %v1437 = vsel %vm278, %v1348, 0
      %v1440 = vsel %vm278, %v1349, 0
      %v1443 = vsel %vm278, %v1350, 0
      %v1446 = vsel %vm278, %v1351, 0
      %v1449 = vsel %vm278, %v1352, 0
      %v1452 = vsel %vm375, %v1354, 0
      %1454 = vmatprep.subr.mxu0 0.0
      %1455 = vmatpush1.msra.mxu0 0.0
      %1456 = vmatprep.subr.mxu0 0.0
      %1457 = vmatpush1.msra.mxu0 0.0
      %1458 = vmatprep.subr.mxu0 0.0
      %1459 = vmatpush1.msra.mxu0 0.0
      %1460 = vmatprep.subr.mxu0 0.0
      %1461 = vmatpush1.msra.mxu0 0.0
      %1462 = vmatprep.subr.mxu0 0.0
      %1463 = vmatpush1.msra.mxu0 0.0
      %1464 = vmatprep.subr.mxu0 0.0
      %1465 = vmatpush1.msra.mxu0 0.0
      %1466 = vmatprep.subr.mxu0 0.0
      %1467 = vmatpush1.msra.mxu0 0.0
      %1468 = vmatprep.subr.mxu0 0.0
      %1469 = vmatpush1.msra.mxu0 0.0
      %1470 = vmatprep.subr.mxu0 0.0
      %1471 = vmatpush1.msra.mxu0 0.0
      %1472 = vmatprep.subr.mxu0 0.0
      %1473 = vmatpush1.msra.mxu0 0.0
      %1474 = vmatprep.subr.mxu0 0.0
      %1475 = vmatpush1.msra.mxu0 0.0
      %1476 = vmatprep.subr.mxu0 0.0
      %1477 = vmatpush1.msra.mxu0 0.0
      %1478 = vmatprep.subr.mxu0 0.0
      %1479 = vmatpush1.msra.mxu0 0.0
      %1480 = vmatprep.subr.mxu0 0.0
      %1481 = vmatpush1.msra.mxu0 0.0
      %1482 = vmatprep.subr.mxu0 0.0
      %1483 = vmatpush1.msra.mxu0 0.0
      %1484 = vmatprep.subr.mxu0 0.0
      %1485 = vmatpush1.msra.mxu0 %v1452
      %1486 = vmatprep.subr.mxu0 0.0
      %1487 = vmatpush2.msra.mxu0 0.0
      %1488 = vmatprep.subr.mxu0 0.0
      %1489 = vmatpush2.msra.mxu0 0.0
      %1490 = vmatprep.subr.mxu0 0.0
      %1491 = vmatpush2.msra.mxu0 0.0
      %1492 = vmatprep.subr.mxu0 0.0
      %1493 = vmatpush2.msra.mxu0 0.0
      %1494 = vmatprep.subr.mxu0 0.0
      %1495 = vmatpush2.msra.mxu0 0.0
      %1496 = vmatprep.subr.mxu0 0.0
      %1497 = vmatpush2.msra.mxu0 0.0
      %1498 = vmatprep.subr.mxu0 0.0
      %1499 = vmatpush2.msra.mxu0 0.0
      %1500 = vmatprep.subr.mxu0 0.0
      %1501 = vmatpush2.msra.mxu0 0.0
      %1502 = vmatprep.subr.mxu0 0.0
      %1503 = vmatpush2.msra.mxu0 0.0
      %1504 = vmatprep.subr.mxu0 0.0
      %1505 = vmatpush2.msra.mxu0 0.0
      %1506 = vmatprep.subr.mxu0 0.0
      %1507 = vmatpush2.msra.mxu0 0.0
      %1508 = vmatprep.subr.mxu0 0.0
      %1509 = vmatpush2.msra.mxu0 0.0
      %1510 = vmatprep.subr.mxu0 0.0
      %1511 = vmatpush2.msra.mxu0 0.0
      %1512 = vmatprep.subr.mxu0 0.0
      %1513 = vmatpush2.msra.mxu0 0.0
      %1514 = vmatprep.subr.mxu0 0.0
      %1515 = vmatpush2.msra.mxu0 0.0
      %1516 = vmatprep.subr.mxu0 0.0
      %1517 = vmatpush2.msra.mxu0 0.0
      %1518 = vmatprep.mubr.f32.mxu0 0.0
      %1519 = vmatmul.mubr.f32.gmra.mxu0 %v1356
      %v1520 = vpop.f32.mrf.mxu0
      %v1521 = vadd.f32 0.0, %v1520
      %v1522 = vpop.f32.mrf.mxu0
      %1523 = vmatprep.mubr.f32.mxu0 0.0
      %1524 = vmatmul.mubr.f32.gmra.mxu0 %v1359
      %v1525 = vpop.f32.mrf.mxu0
      %v1526 = vadd.f32 0.0, %v1525
      %v1527 = vpop.f32.mrf.mxu0
      %1528 = vmatprep.mubr.f32.mxu0 0.0
      %1529 = vmatmul.mubr.f32.gmra.mxu0 %v1362
      %v1530 = vpop.f32.mrf.mxu0
      %v1531 = vadd.f32 0.0, %v1530
      %v1532 = vpop.f32.mrf.mxu0
      %1533 = vmatprep.mubr.f32.mxu0 0.0
      %1534 = vmatmul.mubr.f32.gmra.mxu0 %v1365
      %v1535 = vpop.f32.mrf.mxu0
      %v1536 = vadd.f32 0.0, %v1535
      %v1537 = vpop.f32.mrf.mxu0
      %1538 = vmatprep.mubr.f32.mxu0 0.0
      %1539 = vmatmul.mubr.f32.gmra.mxu0 %v1368
      %v1540 = vpop.f32.mrf.mxu0
      %v1541 = vadd.f32 0.0, %v1540
      %v1542 = vpop.f32.mrf.mxu0
      %1543 = vmatprep.mubr.f32.mxu0 0.0
      %1544 = vmatmul.mubr.f32.gmra.mxu0 %v1371
      %v1545 = vpop.f32.mrf.mxu0
      %v1546 = vadd.f32 0.0, %v1545
      %v1547 = vpop.f32.mrf.mxu0
      %1548 = vmatprep.mubr.f32.mxu0 0.0
      %1549 = vmatmul.mubr.f32.gmra.mxu0 %v1374
      %v1550 = vpop.f32.mrf.mxu0
      %v1551 = vadd.f32 0.0, %v1550
      %v1552 = vpop.f32.mrf.mxu0
      %1553 = vmatprep.mubr.f32.mxu0 0.0
      %1554 = vmatmul.mubr.f32.gmra.mxu0 %v1377
      %v1555 = vpop.f32.mrf.mxu0
      %v1556 = vadd.f32 0.0, %v1555
      %v1557 = vpop.f32.mrf.mxu0
      %1558 = vmatprep.mubr.f32.mxu0 0.0
      %1559 = vmatmul.mubr.f32.gmra.mxu0 %v1380
      %v1560 = vpop.f32.mrf.mxu0
      %v1561 = vadd.f32 0.0, %v1560
      %v1562 = vpop.f32.mrf.mxu0
      %1563 = vmatprep.mubr.f32.mxu0 0.0
      %1564 = vmatmul.mubr.f32.gmra.mxu0 %v1383
      %v1565 = vpop.f32.mrf.mxu0
      %v1566 = vadd.f32 0.0, %v1565
      %v1567 = vpop.f32.mrf.mxu0
      %1568 = vmatprep.mubr.f32.mxu0 0.0
      %1569 = vmatmul.mubr.f32.gmra.mxu0 %v1386
      %v1570 = vpop.f32.mrf.mxu0
      %v1571 = vadd.f32 0.0, %v1570
      %v1572 = vpop.f32.mrf.mxu0
      %1573 = vmatprep.mubr.f32.mxu0 0.0
      %1574 = vmatmul.mubr.f32.gmra.mxu0 %v1389
      %v1575 = vpop.f32.mrf.mxu0
      %v1576 = vadd.f32 0.0, %v1575
      %v1577 = vpop.f32.mrf.mxu0
      %1578 = vmatprep.mubr.f32.mxu0 0.0
      %1579 = vmatmul.mubr.f32.gmra.mxu0 %v1392
      %v1580 = vpop.f32.mrf.mxu0
      %v1581 = vadd.f32 0.0, %v1580
      %v1582 = vpop.f32.mrf.mxu0
      %1583 = vmatprep.mubr.f32.mxu0 0.0
      %1584 = vmatmul.mubr.f32.gmra.mxu0 %v1395
      %v1585 = vpop.f32.mrf.mxu0
      %v1586 = vadd.f32 0.0, %v1585
      %v1587 = vpop.f32.mrf.mxu0
      %1588 = vmatprep.mubr.f32.mxu0 0.0
      %1589 = vmatmul.mubr.f32.gmra.mxu0 %v1398
      %v1590 = vpop.f32.mrf.mxu0
      %v1591 = vadd.f32 0.0, %v1590
      %v1592 = vpop.f32.mrf.mxu0
      %1593 = vmatprep.mubr.f32.mxu0 0.0
      %1594 = vmatmul.mubr.f32.gmra.mxu0 %v1401
      %v1595 = vpop.f32.mrf.mxu0
      %v1596 = vadd.f32 0.0, %v1595
      %v1597 = vpop.f32.mrf.mxu0
      %1598 = vmatprep.mubr.f32.mxu0 0.0
      %1599 = vmatmul.mubr.f32.gmra.mxu0 %v1404
      %v1600 = vpop.f32.mrf.mxu0
      %v1601 = vadd.f32 0.0, %v1600
      %v1602 = vpop.f32.mrf.mxu0
      %1603 = vmatprep.mubr.f32.mxu0 0.0
      %1604 = vmatmul.mubr.f32.gmra.mxu0 %v1407
      %v1605 = vpop.f32.mrf.mxu0
      %v1606 = vadd.f32 0.0, %v1605
      %v1607 = vpop.f32.mrf.mxu0
      %1608 = vmatprep.mubr.f32.mxu0 0.0
      %1609 = vmatmul.mubr.f32.gmra.mxu0 %v1410
      %v1610 = vpop.f32.mrf.mxu0
      %v1611 = vadd.f32 0.0, %v1610
      %v1612 = vpop.f32.mrf.mxu0
      %1613 = vmatprep.mubr.f32.mxu0 0.0
      %1614 = vmatmul.mubr.f32.gmra.mxu0 %v1413
      %v1615 = vpop.f32.mrf.mxu0
      %v1616 = vadd.f32 0.0, %v1615
      %v1617 = vpop.f32.mrf.mxu0
      %1618 = vmatprep.mubr.f32.mxu0 0.0
      %1619 = vmatmul.mubr.f32.gmra.mxu0 %v1416
      %v1620 = vpop.f32.mrf.mxu0
      %v1621 = vadd.f32 0.0, %v1620
      %v1622 = vpop.f32.mrf.mxu0
      %1623 = vmatprep.mubr.f32.mxu0 0.0
      %1624 = vmatmul.mubr.f32.gmra.mxu0 %v1419
      %v1625 = vpop.f32.mrf.mxu0
      %v1626 = vadd.f32 0.0, %v1625
      %v1627 = vpop.f32.mrf.mxu0
      %1628 = vmatprep.mubr.f32.mxu0 0.0
      %1629 = vmatmul.mubr.f32.gmra.mxu0 %v1422
      %v1630 = vpop.f32.mrf.mxu0
      %v1631 = vadd.f32 0.0, %v1630
      %v1632 = vpop.f32.mrf.mxu0
      %1633 = vmatprep.mubr.f32.mxu0 0.0
      %1634 = vmatmul.mubr.f32.gmra.mxu0 %v1425
      %v1635 = vpop.f32.mrf.mxu0
      %v1636 = vadd.f32 0.0, %v1635
      %v1637 = vpop.f32.mrf.mxu0
      %1638 = vmatprep.mubr.f32.mxu0 0.0
      %1639 = vmatmul.mubr.f32.gmra.mxu0 %v1428
      %v1640 = vpop.f32.mrf.mxu0
      %v1641 = vadd.f32 0.0, %v1640
      %v1642 = vpop.f32.mrf.mxu0
      %1643 = vmatprep.mubr.f32.mxu0 0.0
      %1644 = vmatmul.mubr.f32.gmra.mxu0 %v1431
      %v1645 = vpop.f32.mrf.mxu0
      %v1646 = vadd.f32 0.0, %v1645
      %v1647 = vpop.f32.mrf.mxu0
      %1648 = vmatprep.mubr.f32.mxu0 0.0
      %1649 = vmatmul.mubr.f32.gmra.mxu0 %v1434
      %v1650 = vpop.f32.mrf.mxu0
      %v1651 = vadd.f32 0.0, %v1650
      %v1652 = vpop.f32.mrf.mxu0
      %1653 = vmatprep.mubr.f32.mxu0 0.0
      %1654 = vmatmul.mubr.f32.gmra.mxu0 %v1437
      %v1655 = vpop.f32.mrf.mxu0
      %v1656 = vadd.f32 0.0, %v1655
      %v1657 = vpop.f32.mrf.mxu0
      %1658 = vmatprep.mubr.f32.mxu0 0.0
      %1659 = vmatmul.mubr.f32.gmra.mxu0 %v1440
      %v1660 = vpop.f32.mrf.mxu0
      %v1661 = vadd.f32 0.0, %v1660
      %v1662 = vpop.f32.mrf.mxu0
      %1663 = vmatprep.mubr.f32.mxu0 0.0
      %1664 = vmatmul.mubr.f32.gmra.mxu0 %v1443
      %v1665 = vpop.f32.mrf.mxu0
      %v1666 = vadd.f32 0.0, %v1665
      %v1667 = vpop.f32.mrf.mxu0
      %1668 = vmatprep.mubr.f32.mxu0 0.0
      %1669 = vmatmul.mubr.f32.gmra.mxu0 %v1446
      %v1670 = vpop.f32.mrf.mxu0
      %v1671 = vadd.f32 0.0, %v1670
      %v1672 = vpop.f32.mrf.mxu0
      %1673 = vmatprep.mubr.f32.mxu0 0.0
      %1674 = vmatmul.mubr.f32.gmra.mxu0 %v1449
      %v1675 = vpop.f32.mrf.mxu0
      %v1676 = vadd.f32 0.0, %v1675
      %v1677 = vpop.f32.mrf.mxu0
      %1678 = vdwg.mxu0
      %v1679 = vadd.f32 %v1286, %v1521
      %v1680 = vadd.f32 %v1287, %v1526
      %v1681 = vadd.f32 %v1288, %v1531
      %v1682 = vadd.f32 %v1289, %v1536
      %v1683 = vadd.f32 %v1290, %v1541
      %v1684 = vadd.f32 %v1291, %v1546
      %v1685 = vadd.f32 %v1292, %v1551
      %v1686 = vadd.f32 %v1293, %v1556
      %v1687 = vadd.f32 %v1294, %v1561
      %v1688 = vadd.f32 %v1295, %v1566
      %v1689 = vadd.f32 %v1296, %v1571
      %v1690 = vadd.f32 %v1297, %v1576
      %v1691 = vadd.f32 %v1298, %v1581
      %v1692 = vadd.f32 %v1299, %v1586
      %v1693 = vadd.f32 %v1300, %v1591
      %v1694 = vadd.f32 %v1301, %v1596
      %v1695 = vadd.f32 %v1302, %v1601
      %v1696 = vadd.f32 %v1303, %v1606
      %v1697 = vadd.f32 %v1304, %v1611
      %v1698 = vadd.f32 %v1305, %v1616
      %v1699 = vadd.f32 %v1306, %v1621
      %v1700 = vadd.f32 %v1307, %v1626
      %v1701 = vadd.f32 %v1308, %v1631
      %v1702 = vadd.f32 %v1309, %v1636
      %v1703 = vadd.f32 %v1310, %v1641
      %v1704 = vadd.f32 %v1311, %v1646
      %v1705 = vadd.f32 %v1312, %v1651
      %v1706 = vadd.f32 %v1313, %v1656
      %v1707 = vadd.f32 %v1314, %v1661
      %v1708 = vadd.f32 %v1315, %v1666
      %v1709 = vadd.f32 %v1316, %v1671
      %v1710 = vadd.f32 %v1317, %v1676
      %v1711 = vld [vmem:[%s1320 + $0x1] sm:$0xff]
      %v1712 = vld [vmem:[%s1320 + $0x9] sm:$0xff]
      %v1713 = vld [vmem:[%s1320 + $0x19] sm:$0xff]
      %v1714 = vld [vmem:[%s1320 + $0x21] sm:$0xff]
      %v1715 = vld [vmem:[%s1320 + $0x31] sm:$0xff]
      %v1716 = vld [vmem:[%s1320 + $0x39] sm:$0xff]
      %v1717 = vld [vmem:[%s1320 + $0x49] sm:$0xff]
      %v1718 = vld [vmem:[%s1320 + $0x51] sm:$0xff]
      %v1719 = vld [vmem:[%s1320 + $0x61] sm:$0xff]
      %v1720 = vld [vmem:[%s1320 + $0x69] sm:$0xff]
      %v1721 = vld [vmem:[%s1320 + $0x79] sm:$0xff]
      %v1722 = vld [vmem:[%s1320 + $0x81] sm:$0xff]
      %v1723 = vld [vmem:[%s1320 + $0x91] sm:$0xff]
      %v1724 = vld [vmem:[%s1320 + $0x99] sm:$0xff]
      %v1725 = vld [vmem:[%s1320 + $0xa9] sm:$0xff]
      %v1726 = vld [vmem:[%s1320 + $0xb1] sm:$0xff]
      %v1727 = vld [vmem:[%s1320 + $0xc1] sm:$0xff]
      %v1728 = vld [vmem:[%s1320 + $0xc9] sm:$0xff]
      %v1729 = vld [vmem:[%s1320 + $0xd9] sm:$0xff]
      %v1730 = vld [vmem:[%s1320 + $0xe1] sm:$0xff]
      %v1731 = vld [vmem:[%s1320 + $0xf1] sm:$0xff]
      %v1732 = vld [vmem:[%s1320 + $0xf9] sm:$0xff]
      %v1733 = vld [vmem:[%s1320 + $0x109] sm:$0xff]
      %v1734 = vld [vmem:[%s1320 + $0x111] sm:$0xff]
      %v1735 = vld [vmem:[%s1320 + $0x121] sm:$0xff]
      %v1736 = vld [vmem:[%s1320 + $0x129] sm:$0xff]
      %v1737 = vld [vmem:[%s1320 + $0x139] sm:$0xff]
      %v1738 = vld [vmem:[%s1320 + $0x141] sm:$0xff]
      %v1739 = vld [vmem:[%s1320 + $0x151] sm:$0xff]
      %v1740 = vld [vmem:[%s1320 + $0x159] sm:$0xff]
      %v1741 = vld [vmem:[%s1320 + $0x169] sm:$0xff]
      %v1742 = vld [vmem:[%s1320 + $0x171] sm:$0xff]
      %s1743 = scalar_lea.vmem %s1, 16
      %v1744 = vld [vmem:[%s1743] sm:$0xf]
      %v1746 = vsel %vm278, %v1711, 0
      %v1749 = vsel %vm278, %v1712, 0
      %v1752 = vsel %vm278, %v1713, 0
      %v1755 = vsel %vm278, %v1714, 0
      %v1758 = vsel %vm278, %v1715, 0
      %v1761 = vsel %vm278, %v1716, 0
      %v1764 = vsel %vm278, %v1717, 0
      %v1767 = vsel %vm278, %v1718, 0
      %v1770 = vsel %vm278, %v1719, 0
      %v1773 = vsel %vm278, %v1720, 0
      %v1776 = vsel %vm278, %v1721, 0
      %v1779 = vsel %vm278, %v1722, 0
      %v1782 = vsel %vm278, %v1723, 0
      %v1785 = vsel %vm278, %v1724, 0
      %v1788 = vsel %vm278, %v1725, 0
      %v1791 = vsel %vm278, %v1726, 0
      %v1794 = vsel %vm278, %v1727, 0
      %v1797 = vsel %vm278, %v1728, 0
      %v1800 = vsel %vm278, %v1729, 0
      %v1803 = vsel %vm278, %v1730, 0
      %v1806 = vsel %vm278, %v1731, 0
      %v1809 = vsel %vm278, %v1732, 0
      %v1812 = vsel %vm278, %v1733, 0
      %v1815 = vsel %vm278, %v1734, 0
      %v1818 = vsel %vm278, %v1735, 0
      %v1821 = vsel %vm278, %v1736, 0
      %v1824 = vsel %vm278, %v1737, 0
      %v1827 = vsel %vm278, %v1738, 0
      %v1830 = vsel %vm278, %v1739, 0
      %v1833 = vsel %vm278, %v1740, 0
      %v1836 = vsel %vm278, %v1741, 0
      %v1839 = vsel %vm278, %v1742, 0
      %v1842 = vsel %vm375, %v1744, 0
      %1844 = vmatprep.subr.mxu0 0.0
      %1845 = vmatpush1.msra.mxu0 0.0
      %1846 = vmatprep.subr.mxu0 0.0
      %1847 = vmatpush1.msra.mxu0 0.0
      %1848 = vmatprep.subr.mxu0 0.0
      %1849 = vmatpush1.msra.mxu0 0.0
      %1850 = vmatprep.subr.mxu0 0.0
      %1851 = vmatpush1.msra.mxu0 0.0
      %1852 = vmatprep.subr.mxu0 0.0
      %1853 = vmatpush1.msra.mxu0 0.0
      %1854 = vmatprep.subr.mxu0 0.0
      %1855 = vmatpush1.msra.mxu0 0.0
      %1856 = vmatprep.subr.mxu0 0.0
      %1857 = vmatpush1.msra.mxu0 0.0
      %1858 = vmatprep.subr.mxu0 0.0
      %1859 = vmatpush1.msra.mxu0 0.0
      %1860 = vmatprep.subr.mxu0 0.0
      %1861 = vmatpush1.msra.mxu0 0.0
      %1862 = vmatprep.subr.mxu0 0.0
      %1863 = vmatpush1.msra.mxu0 0.0
      %1864 = vmatprep.subr.mxu0 0.0
      %1865 = vmatpush1.msra.mxu0 0.0
      %1866 = vmatprep.subr.mxu0 0.0
      %1867 = vmatpush1.msra.mxu0 0.0
      %1868 = vmatprep.subr.mxu0 0.0
      %1869 = vmatpush1.msra.mxu0 0.0
      %1870 = vmatprep.subr.mxu0 0.0
      %1871 = vmatpush1.msra.mxu0 0.0
      %1872 = vmatprep.subr.mxu0 0.0
      %1873 = vmatpush1.msra.mxu0 0.0
      %1874 = vmatprep.subr.mxu0 0.0
      %1875 = vmatpush1.msra.mxu0 %v1842
      %1876 = vmatprep.subr.mxu0 0.0
      %1877 = vmatpush2.msra.mxu0 0.0
      %1878 = vmatprep.subr.mxu0 0.0
      %1879 = vmatpush2.msra.mxu0 0.0
      %1880 = vmatprep.subr.mxu0 0.0
      %1881 = vmatpush2.msra.mxu0 0.0
      %1882 = vmatprep.subr.mxu0 0.0
      %1883 = vmatpush2.msra.mxu0 0.0
      %1884 = vmatprep.subr.mxu0 0.0
      %1885 = vmatpush2.msra.mxu0 0.0
      %1886 = vmatprep.subr.mxu0 0.0
      %1887 = vmatpush2.msra.mxu0 0.0
      %1888 = vmatprep.subr.mxu0 0.0
      %1889 = vmatpush2.msra.mxu0 0.0
      %1890 = vmatprep.subr.mxu0 0.0
      %1891 = vmatpush2.msra.mxu0 0.0
      %1892 = vmatprep.subr.mxu0 0.0
      %1893 = vmatpush2.msra.mxu0 0.0
      %1894 = vmatprep.subr.mxu0 0.0
      %1895 = vmatpush2.msra.mxu0 0.0
      %1896 = vmatprep.subr.mxu0 0.0
      %1897 = vmatpush2.msra.mxu0 0.0
      %1898 = vmatprep.subr.mxu0 0.0
      %1899 = vmatpush2.msra.mxu0 0.0
      %1900 = vmatprep.subr.mxu0 0.0
      %1901 = vmatpush2.msra.mxu0 0.0
      %1902 = vmatprep.subr.mxu0 0.0
      %1903 = vmatpush2.msra.mxu0 0.0
      %1904 = vmatprep.subr.mxu0 0.0
      %1905 = vmatpush2.msra.mxu0 0.0
      %1906 = vmatprep.subr.mxu0 0.0
      %1907 = vmatpush2.msra.mxu0 0.0
      %1908 = vmatprep.mubr.f32.mxu0 0.0
      %1909 = vmatmul.mubr.f32.gmra.mxu0 %v1746
      %v1910 = vpop.f32.mrf.mxu0
      %v1911 = vadd.f32 0.0, %v1910
      %v1912 = vpop.f32.mrf.mxu0
      %1913 = vmatprep.mubr.f32.mxu0 0.0
      %1914 = vmatmul.mubr.f32.gmra.mxu0 %v1749
      %v1915 = vpop.f32.mrf.mxu0
      %v1916 = vadd.f32 0.0, %v1915
      %v1917 = vpop.f32.mrf.mxu0
      %1918 = vmatprep.mubr.f32.mxu0 0.0
      %1919 = vmatmul.mubr.f32.gmra.mxu0 %v1752
      %v1920 = vpop.f32.mrf.mxu0
      %v1921 = vadd.f32 0.0, %v1920
      %v1922 = vpop.f32.mrf.mxu0
      %1923 = vmatprep.mubr.f32.mxu0 0.0
      %1924 = vmatmul.mubr.f32.gmra.mxu0 %v1755
      %v1925 = vpop.f32.mrf.mxu0
      %v1926 = vadd.f32 0.0, %v1925
      %v1927 = vpop.f32.mrf.mxu0
      %1928 = vmatprep.mubr.f32.mxu0 0.0
      %1929 = vmatmul.mubr.f32.gmra.mxu0 %v1758
      %v1930 = vpop.f32.mrf.mxu0
      %v1931 = vadd.f32 0.0, %v1930
      %v1932 = vpop.f32.mrf.mxu0
      %1933 = vmatprep.mubr.f32.mxu0 0.0
      %1934 = vmatmul.mubr.f32.gmra.mxu0 %v1761
      %v1935 = vpop.f32.mrf.mxu0
      %v1936 = vadd.f32 0.0, %v1935
      %v1937 = vpop.f32.mrf.mxu0
      %1938 = vmatprep.mubr.f32.mxu0 0.0
      %1939 = vmatmul.mubr.f32.gmra.mxu0 %v1764
      %v1940 = vpop.f32.mrf.mxu0
      %v1941 = vadd.f32 0.0, %v1940
      %v1942 = vpop.f32.mrf.mxu0
      %1943 = vmatprep.mubr.f32.mxu0 0.0
      %1944 = vmatmul.mubr.f32.gmra.mxu0 %v1767
      %v1945 = vpop.f32.mrf.mxu0
      %v1946 = vadd.f32 0.0, %v1945
      %v1947 = vpop.f32.mrf.mxu0
      %1948 = vmatprep.mubr.f32.mxu0 0.0
      %1949 = vmatmul.mubr.f32.gmra.mxu0 %v1770
      %v1950 = vpop.f32.mrf.mxu0
      %v1951 = vadd.f32 0.0, %v1950
      %v1952 = vpop.f32.mrf.mxu0
      %1953 = vmatprep.mubr.f32.mxu0 0.0
      %1954 = vmatmul.mubr.f32.gmra.mxu0 %v1773
      %v1955 = vpop.f32.mrf.mxu0
      %v1956 = vadd.f32 0.0, %v1955
      %v1957 = vpop.f32.mrf.mxu0
      %1958 = vmatprep.mubr.f32.mxu0 0.0
      %1959 = vmatmul.mubr.f32.gmra.mxu0 %v1776
      %v1960 = vpop.f32.mrf.mxu0
      %v1961 = vadd.f32 0.0, %v1960
      %v1962 = vpop.f32.mrf.mxu0
      %1963 = vmatprep.mubr.f32.mxu0 0.0
      %1964 = vmatmul.mubr.f32.gmra.mxu0 %v1779
      %v1965 = vpop.f32.mrf.mxu0
      %v1966 = vadd.f32 0.0, %v1965
      %v1967 = vpop.f32.mrf.mxu0
      %1968 = vmatprep.mubr.f32.mxu0 0.0
      %1969 = vmatmul.mubr.f32.gmra.mxu0 %v1782
      %v1970 = vpop.f32.mrf.mxu0
      %v1971 = vadd.f32 0.0, %v1970
      %v1972 = vpop.f32.mrf.mxu0
      %1973 = vmatprep.mubr.f32.mxu0 0.0
      %1974 = vmatmul.mubr.f32.gmra.mxu0 %v1785
      %v1975 = vpop.f32.mrf.mxu0
      %v1976 = vadd.f32 0.0, %v1975
      %v1977 = vpop.f32.mrf.mxu0
      %1978 = vmatprep.mubr.f32.mxu0 0.0
      %1979 = vmatmul.mubr.f32.gmra.mxu0 %v1788
      %v1980 = vpop.f32.mrf.mxu0
      %v1981 = vadd.f32 0.0, %v1980
      %v1982 = vpop.f32.mrf.mxu0
      %1983 = vmatprep.mubr.f32.mxu0 0.0
      %1984 = vmatmul.mubr.f32.gmra.mxu0 %v1791
      %v1985 = vpop.f32.mrf.mxu0
      %v1986 = vadd.f32 0.0, %v1985
      %v1987 = vpop.f32.mrf.mxu0
      %1988 = vmatprep.mubr.f32.mxu0 0.0
      %1989 = vmatmul.mubr.f32.gmra.mxu0 %v1794
      %v1990 = vpop.f32.mrf.mxu0
      %v1991 = vadd.f32 0.0, %v1990
      %v1992 = vpop.f32.mrf.mxu0
      %1993 = vmatprep.mubr.f32.mxu0 0.0
      %1994 = vmatmul.mubr.f32.gmra.mxu0 %v1797
      %v1995 = vpop.f32.mrf.mxu0
      %v1996 = vadd.f32 0.0, %v1995
      %v1997 = vpop.f32.mrf.mxu0
      %1998 = vmatprep.mubr.f32.mxu0 0.0
      %1999 = vmatmul.mubr.f32.gmra.mxu0 %v1800
      %v2000 = vpop.f32.mrf.mxu0
      %v2001 = vadd.f32 0.0, %v2000
      %v2002 = vpop.f32.mrf.mxu0
      %2003 = vmatprep.mubr.f32.mxu0 0.0
      %2004 = vmatmul.mubr.f32.gmra.mxu0 %v1803
      %v2005 = vpop.f32.mrf.mxu0
      %v2006 = vadd.f32 0.0, %v2005
      %v2007 = vpop.f32.mrf.mxu0
      %2008 = vmatprep.mubr.f32.mxu0 0.0
      %2009 = vmatmul.mubr.f32.gmra.mxu0 %v1806
      %v2010 = vpop.f32.mrf.mxu0
      %v2011 = vadd.f32 0.0, %v2010
      %v2012 = vpop.f32.mrf.mxu0
      %2013 = vmatprep.mubr.f32.mxu0 0.0
      %2014 = vmatmul.mubr.f32.gmra.mxu0 %v1809
      %v2015 = vpop.f32.mrf.mxu0
      %v2016 = vadd.f32 0.0, %v2015
      %v2017 = vpop.f32.mrf.mxu0
      %2018 = vmatprep.mubr.f32.mxu0 0.0
      %2019 = vmatmul.mubr.f32.gmra.mxu0 %v1812
      %v2020 = vpop.f32.mrf.mxu0
      %v2021 = vadd.f32 0.0, %v2020
      %v2022 = vpop.f32.mrf.mxu0
      %2023 = vmatprep.mubr.f32.mxu0 0.0
      %2024 = vmatmul.mubr.f32.gmra.mxu0 %v1815
      %v2025 = vpop.f32.mrf.mxu0
      %v2026 = vadd.f32 0.0, %v2025
      %v2027 = vpop.f32.mrf.mxu0
      %2028 = vmatprep.mubr.f32.mxu0 0.0
      %2029 = vmatmul.mubr.f32.gmra.mxu0 %v1818
      %v2030 = vpop.f32.mrf.mxu0
      %v2031 = vadd.f32 0.0, %v2030
      %v2032 = vpop.f32.mrf.mxu0
      %2033 = vmatprep.mubr.f32.mxu0 0.0
      %2034 = vmatmul.mubr.f32.gmra.mxu0 %v1821
      %v2035 = vpop.f32.mrf.mxu0
      %v2036 = vadd.f32 0.0, %v2035
      %v2037 = vpop.f32.mrf.mxu0
      %2038 = vmatprep.mubr.f32.mxu0 0.0
      %2039 = vmatmul.mubr.f32.gmra.mxu0 %v1824
      %v2040 = vpop.f32.mrf.mxu0
      %v2041 = vadd.f32 0.0, %v2040
      %v2042 = vpop.f32.mrf.mxu0
      %2043 = vmatprep.mubr.f32.mxu0 0.0
      %2044 = vmatmul.mubr.f32.gmra.mxu0 %v1827
      %v2045 = vpop.f32.mrf.mxu0
      %v2046 = vadd.f32 0.0, %v2045
      %v2047 = vpop.f32.mrf.mxu0
      %2048 = vmatprep.mubr.f32.mxu0 0.0
      %2049 = vmatmul.mubr.f32.gmra.mxu0 %v1830
      %v2050 = vpop.f32.mrf.mxu0
      %v2051 = vadd.f32 0.0, %v2050
      %v2052 = vpop.f32.mrf.mxu0
      %2053 = vmatprep.mubr.f32.mxu0 0.0
      %2054 = vmatmul.mubr.f32.gmra.mxu0 %v1833
      %v2055 = vpop.f32.mrf.mxu0
      %v2056 = vadd.f32 0.0, %v2055
      %v2057 = vpop.f32.mrf.mxu0
      %2058 = vmatprep.mubr.f32.mxu0 0.0
      %2059 = vmatmul.mubr.f32.gmra.mxu0 %v1836
      %v2060 = vpop.f32.mrf.mxu0
      %v2061 = vadd.f32 0.0, %v2060
      %v2062 = vpop.f32.mrf.mxu0
      %2063 = vmatprep.mubr.f32.mxu0 0.0
      %2064 = vmatmul.mubr.f32.gmra.mxu0 %v1839
      %v2065 = vpop.f32.mrf.mxu0
      %v2066 = vadd.f32 0.0, %v2065
      %v2067 = vpop.f32.mrf.mxu0
      %2068 = vdwg.mxu0
      %v2069 = vadd.f32 %v1679, %v1911
      %v2070 = vadd.f32 %v1680, %v1916
      %v2071 = vadd.f32 %v1681, %v1921
      %v2072 = vadd.f32 %v1682, %v1926
      %v2073 = vadd.f32 %v1683, %v1931
      %v2074 = vadd.f32 %v1684, %v1936
      %v2075 = vadd.f32 %v1685, %v1941
      %v2076 = vadd.f32 %v1686, %v1946
      %v2077 = vadd.f32 %v1687, %v1951
      %v2078 = vadd.f32 %v1688, %v1956
      %v2079 = vadd.f32 %v1689, %v1961
      %v2080 = vadd.f32 %v1690, %v1966
      %v2081 = vadd.f32 %v1691, %v1971
      %v2082 = vadd.f32 %v1692, %v1976
      %v2083 = vadd.f32 %v1693, %v1981
      %v2084 = vadd.f32 %v1694, %v1986
      %v2085 = vadd.f32 %v1695, %v1991
      %v2086 = vadd.f32 %v1696, %v1996
      %v2087 = vadd.f32 %v1697, %v2001
      %v2088 = vadd.f32 %v1698, %v2006
      %v2089 = vadd.f32 %v1699, %v2011
      %v2090 = vadd.f32 %v1700, %v2016
      %v2091 = vadd.f32 %v1701, %v2021
      %v2092 = vadd.f32 %v1702, %v2026
      %v2093 = vadd.f32 %v1703, %v2031
      %v2094 = vadd.f32 %v1704, %v2036
      %v2095 = vadd.f32 %v1705, %v2041
      %v2096 = vadd.f32 %v1706, %v2046
      %v2097 = vadd.f32 %v1707, %v2051
      %v2098 = vadd.f32 %v1708, %v2056
      %v2099 = vadd.f32 %v1709, %v2061
      %v2100 = vadd.f32 %v1710, %v2066
      %v2101 = vld [vmem:[%s1320 + $0x2] sm:$0xff]
      %v2102 = vld [vmem:[%s1320 + $0xa] sm:$0xff]
      %v2103 = vld [vmem:[%s1320 + $0x1a] sm:$0xff]
      %v2104 = vld [vmem:[%s1320 + $0x22] sm:$0xff]
      %v2105 = vld [vmem:[%s1320 + $0x32] sm:$0xff]
      %v2106 = vld [vmem:[%s1320 + $0x3a] sm:$0xff]
      %v2107 = vld [vmem:[%s1320 + $0x4a] sm:$0xff]
      %v2108 = vld [vmem:[%s1320 + $0x52] sm:$0xff]
      %v2109 = vld [vmem:[%s1320 + $0x62] sm:$0xff]
      %v2110 = vld [vmem:[%s1320 + $0x6a] sm:$0xff]
      %v2111 = vld [vmem:[%s1320 + $0x7a] sm:$0xff]
      %v2112 = vld [vmem:[%s1320 + $0x82] sm:$0xff]
      %v2113 = vld [vmem:[%s1320 + $0x92] sm:$0xff]
      %v2114 = vld [vmem:[%s1320 + $0x9a] sm:$0xff]
      %v2115 = vld [vmem:[%s1320 + $0xaa] sm:$0xff]
      %v2116 = vld [vmem:[%s1320 + $0xb2] sm:$0xff]
      %v2117 = vld [vmem:[%s1320 + $0xc2] sm:$0xff]
      %v2118 = vld [vmem:[%s1320 + $0xca] sm:$0xff]
      %v2119 = vld [vmem:[%s1320 + $0xda] sm:$0xff]
      %v2120 = vld [vmem:[%s1320 + $0xe2] sm:$0xff]
      %v2121 = vld [vmem:[%s1320 + $0xf2] sm:$0xff]
      %v2122 = vld [vmem:[%s1320 + $0xfa] sm:$0xff]
      %v2123 = vld [vmem:[%s1320 + $0x10a] sm:$0xff]
      %v2124 = vld [vmem:[%s1320 + $0x112] sm:$0xff]
      %v2125 = vld [vmem:[%s1320 + $0x122] sm:$0xff]
      %v2126 = vld [vmem:[%s1320 + $0x12a] sm:$0xff]
      %v2127 = vld [vmem:[%s1320 + $0x13a] sm:$0xff]
      %v2128 = vld [vmem:[%s1320 + $0x142] sm:$0xff]
      %v2129 = vld [vmem:[%s1320 + $0x152] sm:$0xff]
      %v2130 = vld [vmem:[%s1320 + $0x15a] sm:$0xff]
      %v2131 = vld [vmem:[%s1320 + $0x16a] sm:$0xff]
      %v2132 = vld [vmem:[%s1320 + $0x172] sm:$0xff]
      %s2133 = scalar_lea.vmem %s1, 20
      %v2134 = vld [vmem:[%s2133] sm:$0xf]
      %v2136 = vsel %vm278, %v2101, 0
      %v2139 = vsel %vm278, %v2102, 0
      %v2142 = vsel %vm278, %v2103, 0
      %v2145 = vsel %vm278, %v2104, 0
      %v2148 = vsel %vm278, %v2105, 0
      %v2151 = vsel %vm278, %v2106, 0
      %v2154 = vsel %vm278, %v2107, 0
      %v2157 = vsel %vm278, %v2108, 0
      %v2160 = vsel %vm278, %v2109, 0
      %v2163 = vsel %vm278, %v2110, 0
      %v2166 = vsel %vm278, %v2111, 0
      %v2169 = vsel %vm278, %v2112, 0
      %v2172 = vsel %vm278, %v2113, 0
      %v2175 = vsel %vm278, %v2114, 0
      %v2178 = vsel %vm278, %v2115, 0
      %v2181 = vsel %vm278, %v2116, 0
      %v2184 = vsel %vm278, %v2117, 0
      %v2187 = vsel %vm278, %v2118, 0
      %v2190 = vsel %vm278, %v2119, 0
      %v2193 = vsel %vm278, %v2120, 0
      %v2196 = vsel %vm278, %v2121, 0
      %v2199 = vsel %vm278, %v2122, 0
      %v2202 = vsel %vm278, %v2123, 0
      %v2205 = vsel %vm278, %v2124, 0
      %v2208 = vsel %vm278, %v2125, 0
      %v2211 = vsel %vm278, %v2126, 0
      %v2214 = vsel %vm278, %v2127, 0
      %v2217 = vsel %vm278, %v2128, 0
      %v2220 = vsel %vm278, %v2129, 0
      %v2223 = vsel %vm278, %v2130, 0
      %v2226 = vsel %vm278, %v2131, 0
      %v2229 = vsel %vm278, %v2132, 0
      %v2232 = vsel %vm375, %v2134, 0
      %2234 = vmatprep.subr.mxu0 0.0
      %2235 = vmatpush1.msra.mxu0 0.0
      %2236 = vmatprep.subr.mxu0 0.0
      %2237 = vmatpush1.msra.mxu0 0.0
      %2238 = vmatprep.subr.mxu0 0.0
      %2239 = vmatpush1.msra.mxu0 0.0
      %2240 = vmatprep.subr.mxu0 0.0
      %2241 = vmatpush1.msra.mxu0 0.0
      %2242 = vmatprep.subr.mxu0 0.0
      %2243 = vmatpush1.msra.mxu0 0.0
      %2244 = vmatprep.subr.mxu0 0.0
      %2245 = vmatpush1.msra.mxu0 0.0
      %2246 = vmatprep.subr.mxu0 0.0
      %2247 = vmatpush1.msra.mxu0 0.0
      %2248 = vmatprep.subr.mxu0 0.0
      %2249 = vmatpush1.msra.mxu0 0.0
      %2250 = vmatprep.subr.mxu0 0.0
      %2251 = vmatpush1.msra.mxu0 0.0
      %2252 = vmatprep.subr.mxu0 0.0
      %2253 = vmatpush1.msra.mxu0 0.0
      %2254 = vmatprep.subr.mxu0 0.0
      %2255 = vmatpush1.msra.mxu0 0.0
      %2256 = vmatprep.subr.mxu0 0.0
      %2257 = vmatpush1.msra.mxu0 0.0
      %2258 = vmatprep.subr.mxu0 0.0
      %2259 = vmatpush1.msra.mxu0 0.0
      %2260 = vmatprep.subr.mxu0 0.0
      %2261 = vmatpush1.msra.mxu0 0.0
      %2262 = vmatprep.subr.mxu0 0.0
      %2263 = vmatpush1.msra.mxu0 0.0
      %2264 = vmatprep.subr.mxu0 0.0
      %2265 = vmatpush1.msra.mxu0 %v2232
      %2266 = vmatprep.subr.mxu0 0.0
      %2267 = vmatpush2.msra.mxu0 0.0
      %2268 = vmatprep.subr.mxu0 0.0
      %2269 = vmatpush2.msra.mxu0 0.0
      %2270 = vmatprep.subr.mxu0 0.0
      %2271 = vmatpush2.msra.mxu0 0.0
      %2272 = vmatprep.subr.mxu0 0.0
      %2273 = vmatpush2.msra.mxu0 0.0
      %2274 = vmatprep.subr.mxu0 0.0
      %2275 = vmatpush2.msra.mxu0 0.0
      %2276 = vmatprep.subr.mxu0 0.0
      %2277 = vmatpush2.msra.mxu0 0.0
      %2278 = vmatprep.subr.mxu0 0.0
      %2279 = vmatpush2.msra.mxu0 0.0
      %2280 = vmatprep.subr.mxu0 0.0
      %2281 = vmatpush2.msra.mxu0 0.0
      %2282 = vmatprep.subr.mxu0 0.0
      %2283 = vmatpush2.msra.mxu0 0.0
      %2284 = vmatprep.subr.mxu0 0.0
      %2285 = vmatpush2.msra.mxu0 0.0
      %2286 = vmatprep.subr.mxu0 0.0
      %2287 = vmatpush2.msra.mxu0 0.0
      %2288 = vmatprep.subr.mxu0 0.0
      %2289 = vmatpush2.msra.mxu0 0.0
      %2290 = vmatprep.subr.mxu0 0.0
      %2291 = vmatpush2.msra.mxu0 0.0
      %2292 = vmatprep.subr.mxu0 0.0
      %2293 = vmatpush2.msra.mxu0 0.0
      %2294 = vmatprep.subr.mxu0 0.0
      %2295 = vmatpush2.msra.mxu0 0.0
      %2296 = vmatprep.subr.mxu0 0.0
      %2297 = vmatpush2.msra.mxu0 0.0
      %2298 = vmatprep.mubr.f32.mxu0 0.0
      %2299 = vmatmul.mubr.f32.gmra.mxu0 %v2136
      %v2300 = vpop.f32.mrf.mxu0
      %v2301 = vadd.f32 0.0, %v2300
      %v2302 = vpop.f32.mrf.mxu0
      %2303 = vmatprep.mubr.f32.mxu0 0.0
      %2304 = vmatmul.mubr.f32.gmra.mxu0 %v2139
      %v2305 = vpop.f32.mrf.mxu0
      %v2306 = vadd.f32 0.0, %v2305
      %v2307 = vpop.f32.mrf.mxu0
      %2308 = vmatprep.mubr.f32.mxu0 0.0
      %2309 = vmatmul.mubr.f32.gmra.mxu0 %v2142
      %v2310 = vpop.f32.mrf.mxu0
      %v2311 = vadd.f32 0.0, %v2310
      %v2312 = vpop.f32.mrf.mxu0
      %2313 = vmatprep.mubr.f32.mxu0 0.0
      %2314 = vmatmul.mubr.f32.gmra.mxu0 %v2145
      %v2315 = vpop.f32.mrf.mxu0
      %v2316 = vadd.f32 0.0, %v2315
      %v2317 = vpop.f32.mrf.mxu0
      %2318 = vmatprep.mubr.f32.mxu0 0.0
      %2319 = vmatmul.mubr.f32.gmra.mxu0 %v2148
      %v2320 = vpop.f32.mrf.mxu0
      %v2321 = vadd.f32 0.0, %v2320
      %v2322 = vpop.f32.mrf.mxu0
      %2323 = vmatprep.mubr.f32.mxu0 0.0
      %2324 = vmatmul.mubr.f32.gmra.mxu0 %v2151
      %v2325 = vpop.f32.mrf.mxu0
      %v2326 = vadd.f32 0.0, %v2325
      %v2327 = vpop.f32.mrf.mxu0
      %2328 = vmatprep.mubr.f32.mxu0 0.0
      %2329 = vmatmul.mubr.f32.gmra.mxu0 %v2154
      %v2330 = vpop.f32.mrf.mxu0
      %v2331 = vadd.f32 0.0, %v2330
      %v2332 = vpop.f32.mrf.mxu0
      %2333 = vmatprep.mubr.f32.mxu0 0.0
      %2334 = vmatmul.mubr.f32.gmra.mxu0 %v2157
      %v2335 = vpop.f32.mrf.mxu0
      %v2336 = vadd.f32 0.0, %v2335
      %v2337 = vpop.f32.mrf.mxu0
      %2338 = vmatprep.mubr.f32.mxu0 0.0
      %2339 = vmatmul.mubr.f32.gmra.mxu0 %v2160
      %v2340 = vpop.f32.mrf.mxu0
      %v2341 = vadd.f32 0.0, %v2340
      %v2342 = vpop.f32.mrf.mxu0
      %2343 = vmatprep.mubr.f32.mxu0 0.0
      %2344 = vmatmul.mubr.f32.gmra.mxu0 %v2163
      %v2345 = vpop.f32.mrf.mxu0
      %v2346 = vadd.f32 0.0, %v2345
      %v2347 = vpop.f32.mrf.mxu0
      %2348 = vmatprep.mubr.f32.mxu0 0.0
      %2349 = vmatmul.mubr.f32.gmra.mxu0 %v2166
      %v2350 = vpop.f32.mrf.mxu0
      %v2351 = vadd.f32 0.0, %v2350
      %v2352 = vpop.f32.mrf.mxu0
      %2353 = vmatprep.mubr.f32.mxu0 0.0
      %2354 = vmatmul.mubr.f32.gmra.mxu0 %v2169
      %v2355 = vpop.f32.mrf.mxu0
      %v2356 = vadd.f32 0.0, %v2355
      %v2357 = vpop.f32.mrf.mxu0
      %2358 = vmatprep.mubr.f32.mxu0 0.0
      %2359 = vmatmul.mubr.f32.gmra.mxu0 %v2172
      %v2360 = vpop.f32.mrf.mxu0
      %v2361 = vadd.f32 0.0, %v2360
      %v2362 = vpop.f32.mrf.mxu0
      %2363 = vmatprep.mubr.f32.mxu0 0.0
      %2364 = vmatmul.mubr.f32.gmra.mxu0 %v2175
      %v2365 = vpop.f32.mrf.mxu0
      %v2366 = vadd.f32 0.0, %v2365
      %v2367 = vpop.f32.mrf.mxu0
      %2368 = vmatprep.mubr.f32.mxu0 0.0
      %2369 = vmatmul.mubr.f32.gmra.mxu0 %v2178
      %v2370 = vpop.f32.mrf.mxu0
      %v2371 = vadd.f32 0.0, %v2370
      %v2372 = vpop.f32.mrf.mxu0
      %2373 = vmatprep.mubr.f32.mxu0 0.0
      %2374 = vmatmul.mubr.f32.gmra.mxu0 %v2181
      %v2375 = vpop.f32.mrf.mxu0
      %v2376 = vadd.f32 0.0, %v2375
      %v2377 = vpop.f32.mrf.mxu0
      %2378 = vmatprep.mubr.f32.mxu0 0.0
      %2379 = vmatmul.mubr.f32.gmra.mxu0 %v2184
      %v2380 = vpop.f32.mrf.mxu0
      %v2381 = vadd.f32 0.0, %v2380
      %v2382 = vpop.f32.mrf.mxu0
      %2383 = vmatprep.mubr.f32.mxu0 0.0
      %2384 = vmatmul.mubr.f32.gmra.mxu0 %v2187
      %v2385 = vpop.f32.mrf.mxu0
      %v2386 = vadd.f32 0.0, %v2385
      %v2387 = vpop.f32.mrf.mxu0
      %2388 = vmatprep.mubr.f32.mxu0 0.0
      %2389 = vmatmul.mubr.f32.gmra.mxu0 %v2190
      %v2390 = vpop.f32.mrf.mxu0
      %v2391 = vadd.f32 0.0, %v2390
      %v2392 = vpop.f32.mrf.mxu0
      %2393 = vmatprep.mubr.f32.mxu0 0.0
      %2394 = vmatmul.mubr.f32.gmra.mxu0 %v2193
      %v2395 = vpop.f32.mrf.mxu0
      %v2396 = vadd.f32 0.0, %v2395
      %v2397 = vpop.f32.mrf.mxu0
      %2398 = vmatprep.mubr.f32.mxu0 0.0
      %2399 = vmatmul.mubr.f32.gmra.mxu0 %v2196
      %v2400 = vpop.f32.mrf.mxu0
      %v2401 = vadd.f32 0.0, %v2400
      %v2402 = vpop.f32.mrf.mxu0
      %2403 = vmatprep.mubr.f32.mxu0 0.0
      %2404 = vmatmul.mubr.f32.gmra.mxu0 %v2199
      %v2405 = vpop.f32.mrf.mxu0
      %v2406 = vadd.f32 0.0, %v2405
      %v2407 = vpop.f32.mrf.mxu0
      %2408 = vmatprep.mubr.f32.mxu0 0.0
      %2409 = vmatmul.mubr.f32.gmra.mxu0 %v2202
      %v2410 = vpop.f32.mrf.mxu0
      %v2411 = vadd.f32 0.0, %v2410
      %v2412 = vpop.f32.mrf.mxu0
      %2413 = vmatprep.mubr.f32.mxu0 0.0
      %2414 = vmatmul.mubr.f32.gmra.mxu0 %v2205
      %v2415 = vpop.f32.mrf.mxu0
      %v2416 = vadd.f32 0.0, %v2415
      %v2417 = vpop.f32.mrf.mxu0
      %2418 = vmatprep.mubr.f32.mxu0 0.0
      %2419 = vmatmul.mubr.f32.gmra.mxu0 %v2208
      %v2420 = vpop.f32.mrf.mxu0
      %v2421 = vadd.f32 0.0, %v2420
      %v2422 = vpop.f32.mrf.mxu0
      %2423 = vmatprep.mubr.f32.mxu0 0.0
      %2424 = vmatmul.mubr.f32.gmra.mxu0 %v2211
      %v2425 = vpop.f32.mrf.mxu0
      %v2426 = vadd.f32 0.0, %v2425
      %v2427 = vpop.f32.mrf.mxu0
      %2428 = vmatprep.mubr.f32.mxu0 0.0
      %2429 = vmatmul.mubr.f32.gmra.mxu0 %v2214
      %v2430 = vpop.f32.mrf.mxu0
      %v2431 = vadd.f32 0.0, %v2430
      %v2432 = vpop.f32.mrf.mxu0
      %2433 = vmatprep.mubr.f32.mxu0 0.0
      %2434 = vmatmul.mubr.f32.gmra.mxu0 %v2217
      %v2435 = vpop.f32.mrf.mxu0
      %v2436 = vadd.f32 0.0, %v2435
      %v2437 = vpop.f32.mrf.mxu0
      %2438 = vmatprep.mubr.f32.mxu0 0.0
      %2439 = vmatmul.mubr.f32.gmra.mxu0 %v2220
      %v2440 = vpop.f32.mrf.mxu0
      %v2441 = vadd.f32 0.0, %v2440
      %v2442 = vpop.f32.mrf.mxu0
      %2443 = vmatprep.mubr.f32.mxu0 0.0
      %2444 = vmatmul.mubr.f32.gmra.mxu0 %v2223
      %v2445 = vpop.f32.mrf.mxu0
      %v2446 = vadd.f32 0.0, %v2445
      %v2447 = vpop.f32.mrf.mxu0
      %2448 = vmatprep.mubr.f32.mxu0 0.0
      %2449 = vmatmul.mubr.f32.gmra.mxu0 %v2226
      %v2450 = vpop.f32.mrf.mxu0
      %v2451 = vadd.f32 0.0, %v2450
      %v2452 = vpop.f32.mrf.mxu0
      %2453 = vmatprep.mubr.f32.mxu0 0.0
      %2454 = vmatmul.mubr.f32.gmra.mxu0 %v2229
      %v2455 = vpop.f32.mrf.mxu0
      %v2456 = vadd.f32 0.0, %v2455
      %v2457 = vpop.f32.mrf.mxu0
      %2458 = vdwg.mxu0
      %v2459 = vadd.f32 %v2069, %v2301
      %v2460 = vadd.f32 %v2070, %v2306
      %v2461 = vadd.f32 %v2071, %v2311
      %v2462 = vadd.f32 %v2072, %v2316
      %v2463 = vadd.f32 %v2073, %v2321
      %v2464 = vadd.f32 %v2074, %v2326
      %v2465 = vadd.f32 %v2075, %v2331
      %v2466 = vadd.f32 %v2076, %v2336
      %v2467 = vadd.f32 %v2077, %v2341
      %v2468 = vadd.f32 %v2078, %v2346
      %v2469 = vadd.f32 %v2079, %v2351
      %v2470 = vadd.f32 %v2080, %v2356
      %v2471 = vadd.f32 %v2081, %v2361
      %v2472 = vadd.f32 %v2082, %v2366
      %v2473 = vadd.f32 %v2083, %v2371
      %v2474 = vadd.f32 %v2084, %v2376
      %v2475 = vadd.f32 %v2085, %v2381
      %v2476 = vadd.f32 %v2086, %v2386
      %v2477 = vadd.f32 %v2087, %v2391
      %v2478 = vadd.f32 %v2088, %v2396
      %v2479 = vadd.f32 %v2089, %v2401
      %v2480 = vadd.f32 %v2090, %v2406
      %v2481 = vadd.f32 %v2091, %v2411
      %v2482 = vadd.f32 %v2092, %v2416
      %v2483 = vadd.f32 %v2093, %v2421
      %v2484 = vadd.f32 %v2094, %v2426
      %v2485 = vadd.f32 %v2095, %v2431
      %v2486 = vadd.f32 %v2096, %v2436
      %v2487 = vadd.f32 %v2097, %v2441
      %v2488 = vadd.f32 %v2098, %v2446
      %v2489 = vadd.f32 %v2099, %v2451
      %v2490 = vadd.f32 %v2100, %v2456
      %s2491 = sadd.s32 %s208, 2
      %s2492 = smul.u32 %s2491, 24
      %s2493 = scalar_lea.vmem %s192, %s2492
      %v2494 = vld [vmem:[%s2493] sm:$0xff]
      %v2495 = vld [vmem:[%s2493 + $0x8] sm:$0xff]
      %v2496 = vld [vmem:[%s2493 + $0x18] sm:$0xff]
      %v2497 = vld [vmem:[%s2493 + $0x20] sm:$0xff]
      %v2498 = vld [vmem:[%s2493 + $0x30] sm:$0xff]
      %v2499 = vld [vmem:[%s2493 + $0x38] sm:$0xff]
      %v2500 = vld [vmem:[%s2493 + $0x48] sm:$0xff]
      %v2501 = vld [vmem:[%s2493 + $0x50] sm:$0xff]
      %v2502 = vld [vmem:[%s2493 + $0x60] sm:$0xff]
      %v2503 = vld [vmem:[%s2493 + $0x68] sm:$0xff]
      %v2504 = vld [vmem:[%s2493 + $0x78] sm:$0xff]
      %v2505 = vld [vmem:[%s2493 + $0x80] sm:$0xff]
      %v2506 = vld [vmem:[%s2493 + $0x90] sm:$0xff]
      %v2507 = vld [vmem:[%s2493 + $0x98] sm:$0xff]
      %v2508 = vld [vmem:[%s2493 + $0xa8] sm:$0xff]
      %v2509 = vld [vmem:[%s2493 + $0xb0] sm:$0xff]
      %v2510 = vld [vmem:[%s2493 + $0xc0] sm:$0xff]
      %v2511 = vld [vmem:[%s2493 + $0xc8] sm:$0xff]
      %v2512 = vld [vmem:[%s2493 + $0xd8] sm:$0xff]
      %v2513 = vld [vmem:[%s2493 + $0xe0] sm:$0xff]
      %v2514 = vld [vmem:[%s2493 + $0xf0] sm:$0xff]
      %v2515 = vld [vmem:[%s2493 + $0xf8] sm:$0xff]
      %v2516 = vld [vmem:[%s2493 + $0x108] sm:$0xff]
      %v2517 = vld [vmem:[%s2493 + $0x110] sm:$0xff]
      %v2518 = vld [vmem:[%s2493 + $0x120] sm:$0xff]
      %v2519 = vld [vmem:[%s2493 + $0x128] sm:$0xff]
      %v2520 = vld [vmem:[%s2493 + $0x138] sm:$0xff]
      %v2521 = vld [vmem:[%s2493 + $0x140] sm:$0xff]
      %v2522 = vld [vmem:[%s2493 + $0x150] sm:$0xff]
      %v2523 = vld [vmem:[%s2493 + $0x158] sm:$0xff]
      %v2524 = vld [vmem:[%s2493 + $0x168] sm:$0xff]
      %v2525 = vld [vmem:[%s2493 + $0x170] sm:$0xff]
      %s2526 = scalar_lea.vmem %s1, 24
      %v2527 = vld [vmem:[%s2526] sm:$0xf]
      %v2529 = vsel %vm278, %v2494, 0
      %v2532 = vsel %vm278, %v2495, 0
      %v2535 = vsel %vm278, %v2496, 0
      %v2538 = vsel %vm278, %v2497, 0
      %v2541 = vsel %vm278, %v2498, 0
      %v2544 = vsel %vm278, %v2499, 0
      %v2547 = vsel %vm278, %v2500, 0
      %v2550 = vsel %vm278, %v2501, 0
      %v2553 = vsel %vm278, %v2502, 0
      %v2556 = vsel %vm278, %v2503, 0
      %v2559 = vsel %vm278, %v2504, 0
      %v2562 = vsel %vm278, %v2505, 0
      %v2565 = vsel %vm278, %v2506, 0
      %v2568 = vsel %vm278, %v2507, 0
      %v2571 = vsel %vm278, %v2508, 0
      %v2574 = vsel %vm278, %v2509, 0
      %v2577 = vsel %vm278, %v2510, 0
      %v2580 = vsel %vm278, %v2511, 0
      %v2583 = vsel %vm278, %v2512, 0
      %v2586 = vsel %vm278, %v2513, 0
      %v2589 = vsel %vm278, %v2514, 0
      %v2592 = vsel %vm278, %v2515, 0
      %v2595 = vsel %vm278, %v2516, 0
      %v2598 = vsel %vm278, %v2517, 0
      %v2601 = vsel %vm278, %v2518, 0
      %v2604 = vsel %vm278, %v2519, 0
      %v2607 = vsel %vm278, %v2520, 0
      %v2610 = vsel %vm278, %v2521, 0
      %v2613 = vsel %vm278, %v2522, 0
      %v2616 = vsel %vm278, %v2523, 0
      %v2619 = vsel %vm278, %v2524, 0
      %v2622 = vsel %vm278, %v2525, 0
      %v2625 = vsel %vm375, %v2527, 0
      %2627 = vmatprep.subr.mxu0 0.0
      %2628 = vmatpush1.msra.mxu0 0.0
      %2629 = vmatprep.subr.mxu0 0.0
      %2630 = vmatpush1.msra.mxu0 0.0
      %2631 = vmatprep.subr.mxu0 0.0
      %2632 = vmatpush1.msra.mxu0 0.0
      %2633 = vmatprep.subr.mxu0 0.0
      %2634 = vmatpush1.msra.mxu0 0.0
      %2635 = vmatprep.subr.mxu0 0.0
      %2636 = vmatpush1.msra.mxu0 0.0
      %2637 = vmatprep.subr.mxu0 0.0
      %2638 = vmatpush1.msra.mxu0 0.0
      %2639 = vmatprep.subr.mxu0 0.0
      %2640 = vmatpush1.msra.mxu0 0.0
      %2641 = vmatprep.subr.mxu0 0.0
      %2642 = vmatpush1.msra.mxu0 0.0
      %2643 = vmatprep.subr.mxu0 0.0
      %2644 = vmatpush1.msra.mxu0 0.0
      %2645 = vmatprep.subr.mxu0 0.0
      %2646 = vmatpush1.msra.mxu0 0.0
      %2647 = vmatprep.subr.mxu0 0.0
      %2648 = vmatpush1.msra.mxu0 0.0
      %2649 = vmatprep.subr.mxu0 0.0
      %2650 = vmatpush1.msra.mxu0 0.0
      %2651 = vmatprep.subr.mxu0 0.0
      %2652 = vmatpush1.msra.mxu0 0.0
      %2653 = vmatprep.subr.mxu0 0.0
      %2654 = vmatpush1.msra.mxu0 0.0
      %2655 = vmatprep.subr.mxu0 0.0
      %2656 = vmatpush1.msra.mxu0 0.0
      %2657 = vmatprep.subr.mxu0 0.0
      %2658 = vmatpush1.msra.mxu0 %v2625
      %2659 = vmatprep.subr.mxu0 0.0
      %2660 = vmatpush2.msra.mxu0 0.0
      %2661 = vmatprep.subr.mxu0 0.0
      %2662 = vmatpush2.msra.mxu0 0.0
      %2663 = vmatprep.subr.mxu0 0.0
      %2664 = vmatpush2.msra.mxu0 0.0
      %2665 = vmatprep.subr.mxu0 0.0
      %2666 = vmatpush2.msra.mxu0 0.0
      %2667 = vmatprep.subr.mxu0 0.0
      %2668 = vmatpush2.msra.mxu0 0.0
      %2669 = vmatprep.subr.mxu0 0.0
      %2670 = vmatpush2.msra.mxu0 0.0
      %2671 = vmatprep.subr.mxu0 0.0
      %2672 = vmatpush2.msra.mxu0 0.0
      %2673 = vmatprep.subr.mxu0 0.0
      %2674 = vmatpush2.msra.mxu0 0.0
      %2675 = vmatprep.subr.mxu0 0.0
      %2676 = vmatpush2.msra.mxu0 0.0
      %2677 = vmatprep.subr.mxu0 0.0
      %2678 = vmatpush2.msra.mxu0 0.0
      %2679 = vmatprep.subr.mxu0 0.0
      %2680 = vmatpush2.msra.mxu0 0.0
      %2681 = vmatprep.subr.mxu0 0.0
      %2682 = vmatpush2.msra.mxu0 0.0
      %2683 = vmatprep.subr.mxu0 0.0
      %2684 = vmatpush2.msra.mxu0 0.0
      %2685 = vmatprep.subr.mxu0 0.0
      %2686 = vmatpush2.msra.mxu0 0.0
      %2687 = vmatprep.subr.mxu0 0.0
      %2688 = vmatpush2.msra.mxu0 0.0
      %2689 = vmatprep.subr.mxu0 0.0
      %2690 = vmatpush2.msra.mxu0 0.0
      %2691 = vmatprep.mubr.f32.mxu0 0.0
      %2692 = vmatmul.mubr.f32.gmra.mxu0 %v2529
      %v2693 = vpop.f32.mrf.mxu0
      %v2694 = vadd.f32 0.0, %v2693
      %v2695 = vpop.f32.mrf.mxu0
      %2696 = vmatprep.mubr.f32.mxu0 0.0
      %2697 = vmatmul.mubr.f32.gmra.mxu0 %v2532
      %v2698 = vpop.f32.mrf.mxu0
      %v2699 = vadd.f32 0.0, %v2698
      %v2700 = vpop.f32.mrf.mxu0
      %2701 = vmatprep.mubr.f32.mxu0 0.0
      %2702 = vmatmul.mubr.f32.gmra.mxu0 %v2535
      %v2703 = vpop.f32.mrf.mxu0
      %v2704 = vadd.f32 0.0, %v2703
      %v2705 = vpop.f32.mrf.mxu0
      %2706 = vmatprep.mubr.f32.mxu0 0.0
      %2707 = vmatmul.mubr.f32.gmra.mxu0 %v2538
      %v2708 = vpop.f32.mrf.mxu0
      %v2709 = vadd.f32 0.0, %v2708
      %v2710 = vpop.f32.mrf.mxu0
      %2711 = vmatprep.mubr.f32.mxu0 0.0
      %2712 = vmatmul.mubr.f32.gmra.mxu0 %v2541
      %v2713 = vpop.f32.mrf.mxu0
      %v2714 = vadd.f32 0.0, %v2713
      %v2715 = vpop.f32.mrf.mxu0
      %2716 = vmatprep.mubr.f32.mxu0 0.0
      %2717 = vmatmul.mubr.f32.gmra.mxu0 %v2544
      %v2718 = vpop.f32.mrf.mxu0
      %v2719 = vadd.f32 0.0, %v2718
      %v2720 = vpop.f32.mrf.mxu0
      %2721 = vmatprep.mubr.f32.mxu0 0.0
      %2722 = vmatmul.mubr.f32.gmra.mxu0 %v2547
      %v2723 = vpop.f32.mrf.mxu0
      %v2724 = vadd.f32 0.0, %v2723
      %v2725 = vpop.f32.mrf.mxu0
      %2726 = vmatprep.mubr.f32.mxu0 0.0
      %2727 = vmatmul.mubr.f32.gmra.mxu0 %v2550
      %v2728 = vpop.f32.mrf.mxu0
      %v2729 = vadd.f32 0.0, %v2728
      %v2730 = vpop.f32.mrf.mxu0
      %2731 = vmatprep.mubr.f32.mxu0 0.0
      %2732 = vmatmul.mubr.f32.gmra.mxu0 %v2553
      %v2733 = vpop.f32.mrf.mxu0
      %v2734 = vadd.f32 0.0, %v2733
      %v2735 = vpop.f32.mrf.mxu0
      %2736 = vmatprep.mubr.f32.mxu0 0.0
      %2737 = vmatmul.mubr.f32.gmra.mxu0 %v2556
      %v2738 = vpop.f32.mrf.mxu0
      %v2739 = vadd.f32 0.0, %v2738
      %v2740 = vpop.f32.mrf.mxu0
      %2741 = vmatprep.mubr.f32.mxu0 0.0
      %2742 = vmatmul.mubr.f32.gmra.mxu0 %v2559
      %v2743 = vpop.f32.mrf.mxu0
      %v2744 = vadd.f32 0.0, %v2743
      %v2745 = vpop.f32.mrf.mxu0
      %2746 = vmatprep.mubr.f32.mxu0 0.0
      %2747 = vmatmul.mubr.f32.gmra.mxu0 %v2562
      %v2748 = vpop.f32.mrf.mxu0
      %v2749 = vadd.f32 0.0, %v2748
      %v2750 = vpop.f32.mrf.mxu0
      %2751 = vmatprep.mubr.f32.mxu0 0.0
      %2752 = vmatmul.mubr.f32.gmra.mxu0 %v2565
      %v2753 = vpop.f32.mrf.mxu0
      %v2754 = vadd.f32 0.0, %v2753
      %v2755 = vpop.f32.mrf.mxu0
      %2756 = vmatprep.mubr.f32.mxu0 0.0
      %2757 = vmatmul.mubr.f32.gmra.mxu0 %v2568
      %v2758 = vpop.f32.mrf.mxu0
      %v2759 = vadd.f32 0.0, %v2758
      %v2760 = vpop.f32.mrf.mxu0
      %2761 = vmatprep.mubr.f32.mxu0 0.0
      %2762 = vmatmul.mubr.f32.gmra.mxu0 %v2571
      %v2763 = vpop.f32.mrf.mxu0
      %v2764 = vadd.f32 0.0, %v2763
      %v2765 = vpop.f32.mrf.mxu0
      %2766 = vmatprep.mubr.f32.mxu0 0.0
      %2767 = vmatmul.mubr.f32.gmra.mxu0 %v2574
      %v2768 = vpop.f32.mrf.mxu0
      %v2769 = vadd.f32 0.0, %v2768
      %v2770 = vpop.f32.mrf.mxu0
      %2771 = vmatprep.mubr.f32.mxu0 0.0
      %2772 = vmatmul.mubr.f32.gmra.mxu0 %v2577
      %v2773 = vpop.f32.mrf.mxu0
      %v2774 = vadd.f32 0.0, %v2773
      %v2775 = vpop.f32.mrf.mxu0
      %2776 = vmatprep.mubr.f32.mxu0 0.0
      %2777 = vmatmul.mubr.f32.gmra.mxu0 %v2580
      %v2778 = vpop.f32.mrf.mxu0
      %v2779 = vadd.f32 0.0, %v2778
      %v2780 = vpop.f32.mrf.mxu0
      %2781 = vmatprep.mubr.f32.mxu0 0.0
      %2782 = vmatmul.mubr.f32.gmra.mxu0 %v2583
      %v2783 = vpop.f32.mrf.mxu0
      %v2784 = vadd.f32 0.0, %v2783
      %v2785 = vpop.f32.mrf.mxu0
      %2786 = vmatprep.mubr.f32.mxu0 0.0
      %2787 = vmatmul.mubr.f32.gmra.mxu0 %v2586
      %v2788 = vpop.f32.mrf.mxu0
      %v2789 = vadd.f32 0.0, %v2788
      %v2790 = vpop.f32.mrf.mxu0
      %2791 = vmatprep.mubr.f32.mxu0 0.0
      %2792 = vmatmul.mubr.f32.gmra.mxu0 %v2589
      %v2793 = vpop.f32.mrf.mxu0
      %v2794 = vadd.f32 0.0, %v2793
      %v2795 = vpop.f32.mrf.mxu0
      %2796 = vmatprep.mubr.f32.mxu0 0.0
      %2797 = vmatmul.mubr.f32.gmra.mxu0 %v2592
      %v2798 = vpop.f32.mrf.mxu0
      %v2799 = vadd.f32 0.0, %v2798
      %v2800 = vpop.f32.mrf.mxu0
      %2801 = vmatprep.mubr.f32.mxu0 0.0
      %2802 = vmatmul.mubr.f32.gmra.mxu0 %v2595
      %v2803 = vpop.f32.mrf.mxu0
      %v2804 = vadd.f32 0.0, %v2803
      %v2805 = vpop.f32.mrf.mxu0
      %2806 = vmatprep.mubr.f32.mxu0 0.0
      %2807 = vmatmul.mubr.f32.gmra.mxu0 %v2598
      %v2808 = vpop.f32.mrf.mxu0
      %v2809 = vadd.f32 0.0, %v2808
      %v2810 = vpop.f32.mrf.mxu0
      %2811 = vmatprep.mubr.f32.mxu0 0.0
      %2812 = vmatmul.mubr.f32.gmra.mxu0 %v2601
      %v2813 = vpop.f32.mrf.mxu0
      %v2814 = vadd.f32 0.0, %v2813
      %v2815 = vpop.f32.mrf.mxu0
      %2816 = vmatprep.mubr.f32.mxu0 0.0
      %2817 = vmatmul.mubr.f32.gmra.mxu0 %v2604
      %v2818 = vpop.f32.mrf.mxu0
      %v2819 = vadd.f32 0.0, %v2818
      %v2820 = vpop.f32.mrf.mxu0
      %2821 = vmatprep.mubr.f32.mxu0 0.0
      %2822 = vmatmul.mubr.f32.gmra.mxu0 %v2607
      %v2823 = vpop.f32.mrf.mxu0
      %v2824 = vadd.f32 0.0, %v2823
      %v2825 = vpop.f32.mrf.mxu0
      %2826 = vmatprep.mubr.f32.mxu0 0.0
      %2827 = vmatmul.mubr.f32.gmra.mxu0 %v2610
      %v2828 = vpop.f32.mrf.mxu0
      %v2829 = vadd.f32 0.0, %v2828
      %v2830 = vpop.f32.mrf.mxu0
      %2831 = vmatprep.mubr.f32.mxu0 0.0
      %2832 = vmatmul.mubr.f32.gmra.mxu0 %v2613
      %v2833 = vpop.f32.mrf.mxu0
      %v2834 = vadd.f32 0.0, %v2833
      %v2835 = vpop.f32.mrf.mxu0
      %2836 = vmatprep.mubr.f32.mxu0 0.0
      %2837 = vmatmul.mubr.f32.gmra.mxu0 %v2616
      %v2838 = vpop.f32.mrf.mxu0
      %v2839 = vadd.f32 0.0, %v2838
      %v2840 = vpop.f32.mrf.mxu0
      %2841 = vmatprep.mubr.f32.mxu0 0.0
      %2842 = vmatmul.mubr.f32.gmra.mxu0 %v2619
      %v2843 = vpop.f32.mrf.mxu0
      %v2844 = vadd.f32 0.0, %v2843
      %v2845 = vpop.f32.mrf.mxu0
      %2846 = vmatprep.mubr.f32.mxu0 0.0
      %2847 = vmatmul.mubr.f32.gmra.mxu0 %v2622
      %v2848 = vpop.f32.mrf.mxu0
      %v2849 = vadd.f32 0.0, %v2848
      %v2850 = vpop.f32.mrf.mxu0
      %2851 = vdwg.mxu0
      %v2852 = vadd.f32 %v2459, %v2694
      %v2853 = vadd.f32 %v2460, %v2699
      %v2854 = vadd.f32 %v2461, %v2704
      %v2855 = vadd.f32 %v2462, %v2709
      %v2856 = vadd.f32 %v2463, %v2714
      %v2857 = vadd.f32 %v2464, %v2719
      %v2858 = vadd.f32 %v2465, %v2724
      %v2859 = vadd.f32 %v2466, %v2729
      %v2860 = vadd.f32 %v2467, %v2734
      %v2861 = vadd.f32 %v2468, %v2739
      %v2862 = vadd.f32 %v2469, %v2744
      %v2863 = vadd.f32 %v2470, %v2749
      %v2864 = vadd.f32 %v2471, %v2754
      %v2865 = vadd.f32 %v2472, %v2759
      %v2866 = vadd.f32 %v2473, %v2764
      %v2867 = vadd.f32 %v2474, %v2769
      %v2868 = vadd.f32 %v2475, %v2774
      %v2869 = vadd.f32 %v2476, %v2779
      %v2870 = vadd.f32 %v2477, %v2784
      %v2871 = vadd.f32 %v2478, %v2789
      %v2872 = vadd.f32 %v2479, %v2794
      %v2873 = vadd.f32 %v2480, %v2799
      %v2874 = vadd.f32 %v2481, %v2804
      %v2875 = vadd.f32 %v2482, %v2809
      %v2876 = vadd.f32 %v2483, %v2814
      %v2877 = vadd.f32 %v2484, %v2819
      %v2878 = vadd.f32 %v2485, %v2824
      %v2879 = vadd.f32 %v2486, %v2829
      %v2880 = vadd.f32 %v2487, %v2834
      %v2881 = vadd.f32 %v2488, %v2839
      %v2882 = vadd.f32 %v2489, %v2844
      %v2883 = vadd.f32 %v2490, %v2849
      %v2884 = vld [vmem:[%s2493 + $0x1] sm:$0xff]
      %v2885 = vld [vmem:[%s2493 + $0x9] sm:$0xff]
      %v2886 = vld [vmem:[%s2493 + $0x19] sm:$0xff]
      %v2887 = vld [vmem:[%s2493 + $0x21] sm:$0xff]
      %v2888 = vld [vmem:[%s2493 + $0x31] sm:$0xff]
      %v2889 = vld [vmem:[%s2493 + $0x39] sm:$0xff]
      %v2890 = vld [vmem:[%s2493 + $0x49] sm:$0xff]
      %v2891 = vld [vmem:[%s2493 + $0x51] sm:$0xff]
      %v2892 = vld [vmem:[%s2493 + $0x61] sm:$0xff]
      %v2893 = vld [vmem:[%s2493 + $0x69] sm:$0xff]
      %v2894 = vld [vmem:[%s2493 + $0x79] sm:$0xff]
      %v2895 = vld [vmem:[%s2493 + $0x81] sm:$0xff]
      %v2896 = vld [vmem:[%s2493 + $0x91] sm:$0xff]
      %v2897 = vld [vmem:[%s2493 + $0x99] sm:$0xff]
      %v2898 = vld [vmem:[%s2493 + $0xa9] sm:$0xff]
      %v2899 = vld [vmem:[%s2493 + $0xb1] sm:$0xff]
      %v2900 = vld [vmem:[%s2493 + $0xc1] sm:$0xff]
      %v2901 = vld [vmem:[%s2493 + $0xc9] sm:$0xff]
      %v2902 = vld [vmem:[%s2493 + $0xd9] sm:$0xff]
      %v2903 = vld [vmem:[%s2493 + $0xe1] sm:$0xff]
      %v2904 = vld [vmem:[%s2493 + $0xf1] sm:$0xff]
      %v2905 = vld [vmem:[%s2493 + $0xf9] sm:$0xff]
      %v2906 = vld [vmem:[%s2493 + $0x109] sm:$0xff]
      %v2907 = vld [vmem:[%s2493 + $0x111] sm:$0xff]
      %v2908 = vld [vmem:[%s2493 + $0x121] sm:$0xff]
      %v2909 = vld [vmem:[%s2493 + $0x129] sm:$0xff]
      %v2910 = vld [vmem:[%s2493 + $0x139] sm:$0xff]
      %v2911 = vld [vmem:[%s2493 + $0x141] sm:$0xff]
      %v2912 = vld [vmem:[%s2493 + $0x151] sm:$0xff]
      %v2913 = vld [vmem:[%s2493 + $0x159] sm:$0xff]
      %v2914 = vld [vmem:[%s2493 + $0x169] sm:$0xff]
      %v2915 = vld [vmem:[%s2493 + $0x171] sm:$0xff]
      %s2916 = scalar_lea.vmem %s1, 28
      %v2917 = vld [vmem:[%s2916] sm:$0xf]
      %v2919 = vsel %vm278, %v2884, 0
      %v2922 = vsel %vm278, %v2885, 0
      %v2925 = vsel %vm278, %v2886, 0
      %v2928 = vsel %vm278, %v2887, 0
      %v2931 = vsel %vm278, %v2888, 0
      %v2934 = vsel %vm278, %v2889, 0
      %v2937 = vsel %vm278, %v2890, 0
      %v2940 = vsel %vm278, %v2891, 0
      %v2943 = vsel %vm278, %v2892, 0
      %v2946 = vsel %vm278, %v2893, 0
      %v2949 = vsel %vm278, %v2894, 0
      %v2952 = vsel %vm278, %v2895, 0
      %v2955 = vsel %vm278, %v2896, 0
      %v2958 = vsel %vm278, %v2897, 0
      %v2961 = vsel %vm278, %v2898, 0
      %v2964 = vsel %vm278, %v2899, 0
      %v2967 = vsel %vm278, %v2900, 0
      %v2970 = vsel %vm278, %v2901, 0
      %v2973 = vsel %vm278, %v2902, 0
      %v2976 = vsel %vm278, %v2903, 0
      %v2979 = vsel %vm278, %v2904, 0
      %v2982 = vsel %vm278, %v2905, 0
      %v2985 = vsel %vm278, %v2906, 0
      %v2988 = vsel %vm278, %v2907, 0
      %v2991 = vsel %vm278, %v2908, 0
      %v2994 = vsel %vm278, %v2909, 0
      %v2997 = vsel %vm278, %v2910, 0
      %v3000 = vsel %vm278, %v2911, 0
      %v3003 = vsel %vm278, %v2912, 0
      %v3006 = vsel %vm278, %v2913, 0
      %v3009 = vsel %vm278, %v2914, 0
      %v3012 = vsel %vm278, %v2915, 0
      %v3015 = vsel %vm375, %v2917, 0
      %3017 = vmatprep.subr.mxu0 0.0
      %3018 = vmatpush1.msra.mxu0 0.0
      %3019 = vmatprep.subr.mxu0 0.0
      %3020 = vmatpush1.msra.mxu0 0.0
      %3021 = vmatprep.subr.mxu0 0.0
      %3022 = vmatpush1.msra.mxu0 0.0
      %3023 = vmatprep.subr.mxu0 0.0
      %3024 = vmatpush1.msra.mxu0 0.0
      %3025 = vmatprep.subr.mxu0 0.0
      %3026 = vmatpush1.msra.mxu0 0.0
      %3027 = vmatprep.subr.mxu0 0.0
      %3028 = vmatpush1.msra.mxu0 0.0
      %3029 = vmatprep.subr.mxu0 0.0
      %3030 = vmatpush1.msra.mxu0 0.0
      %3031 = vmatprep.subr.mxu0 0.0
      %3032 = vmatpush1.msra.mxu0 0.0
      %3033 = vmatprep.subr.mxu0 0.0
      %3034 = vmatpush1.msra.mxu0 0.0
      %3035 = vmatprep.subr.mxu0 0.0
      %3036 = vmatpush1.msra.mxu0 0.0
      %3037 = vmatprep.subr.mxu0 0.0
      %3038 = vmatpush1.msra.mxu0 0.0
      %3039 = vmatprep.subr.mxu0 0.0
      %3040 = vmatpush1.msra.mxu0 0.0
      %3041 = vmatprep.subr.mxu0 0.0
      %3042 = vmatpush1.msra.mxu0 0.0
      %3043 = vmatprep.subr.mxu0 0.0
      %3044 = vmatpush1.msra.mxu0 0.0
      %3045 = vmatprep.subr.mxu0 0.0
      %3046 = vmatpush1.msra.mxu0 0.0
      %3047 = vmatprep.subr.mxu0 0.0
      %3048 = vmatpush1.msra.mxu0 %v3015
      %3049 = vmatprep.subr.mxu0 0.0
      %3050 = vmatpush2.msra.mxu0 0.0
      %3051 = vmatprep.subr.mxu0 0.0
      %3052 = vmatpush2.msra.mxu0 0.0
      %3053 = vmatprep.subr.mxu0 0.0
      %3054 = vmatpush2.msra.mxu0 0.0
      %3055 = vmatprep.subr.mxu0 0.0
      %3056 = vmatpush2.msra.mxu0 0.0
      %3057 = vmatprep.subr.mxu0 0.0
      %3058 = vmatpush2.msra.mxu0 0.0
      %3059 = vmatprep.subr.mxu0 0.0
      %3060 = vmatpush2.msra.mxu0 0.0
      %3061 = vmatprep.subr.mxu0 0.0
      %3062 = vmatpush2.msra.mxu0 0.0
      %3063 = vmatprep.subr.mxu0 0.0
      %3064 = vmatpush2.msra.mxu0 0.0
      %3065 = vmatprep.subr.mxu0 0.0
      %3066 = vmatpush2.msra.mxu0 0.0
      %3067 = vmatprep.subr.mxu0 0.0
      %3068 = vmatpush2.msra.mxu0 0.0
      %3069 = vmatprep.subr.mxu0 0.0
      %3070 = vmatpush2.msra.mxu0 0.0
      %3071 = vmatprep.subr.mxu0 0.0
      %3072 = vmatpush2.msra.mxu0 0.0
      %3073 = vmatprep.subr.mxu0 0.0
      %3074 = vmatpush2.msra.mxu0 0.0
      %3075 = vmatprep.subr.mxu0 0.0
      %3076 = vmatpush2.msra.mxu0 0.0
      %3077 = vmatprep.subr.mxu0 0.0
      %3078 = vmatpush2.msra.mxu0 0.0
      %3079 = vmatprep.subr.mxu0 0.0
      %3080 = vmatpush2.msra.mxu0 0.0
      %3081 = vmatprep.mubr.f32.mxu0 0.0
      %3082 = vmatmul.mubr.f32.gmra.mxu0 %v2919
      %v3083 = vpop.f32.mrf.mxu0
      %v3084 = vadd.f32 0.0, %v3083
      %v3085 = vpop.f32.mrf.mxu0
      %3086 = vmatprep.mubr.f32.mxu0 0.0
      %3087 = vmatmul.mubr.f32.gmra.mxu0 %v2922
      %v3088 = vpop.f32.mrf.mxu0
      %v3089 = vadd.f32 0.0, %v3088
      %v3090 = vpop.f32.mrf.mxu0
      %3091 = vmatprep.mubr.f32.mxu0 0.0
      %3092 = vmatmul.mubr.f32.gmra.mxu0 %v2925
      %v3093 = vpop.f32.mrf.mxu0
      %v3094 = vadd.f32 0.0, %v3093
      %v3095 = vpop.f32.mrf.mxu0
      %3096 = vmatprep.mubr.f32.mxu0 0.0
      %3097 = vmatmul.mubr.f32.gmra.mxu0 %v2928
      %v3098 = vpop.f32.mrf.mxu0
      %v3099 = vadd.f32 0.0, %v3098
      %v3100 = vpop.f32.mrf.mxu0
      %3101 = vmatprep.mubr.f32.mxu0 0.0
      %3102 = vmatmul.mubr.f32.gmra.mxu0 %v2931
      %v3103 = vpop.f32.mrf.mxu0
      %v3104 = vadd.f32 0.0, %v3103
      %v3105 = vpop.f32.mrf.mxu0
      %3106 = vmatprep.mubr.f32.mxu0 0.0
      %3107 = vmatmul.mubr.f32.gmra.mxu0 %v2934
      %v3108 = vpop.f32.mrf.mxu0
      %v3109 = vadd.f32 0.0, %v3108
      %v3110 = vpop.f32.mrf.mxu0
      %3111 = vmatprep.mubr.f32.mxu0 0.0
      %3112 = vmatmul.mubr.f32.gmra.mxu0 %v2937
      %v3113 = vpop.f32.mrf.mxu0
      %v3114 = vadd.f32 0.0, %v3113
      %v3115 = vpop.f32.mrf.mxu0
      %3116 = vmatprep.mubr.f32.mxu0 0.0
      %3117 = vmatmul.mubr.f32.gmra.mxu0 %v2940
      %v3118 = vpop.f32.mrf.mxu0
      %v3119 = vadd.f32 0.0, %v3118
      %v3120 = vpop.f32.mrf.mxu0
      %3121 = vmatprep.mubr.f32.mxu0 0.0
      %3122 = vmatmul.mubr.f32.gmra.mxu0 %v2943
      %v3123 = vpop.f32.mrf.mxu0
      %v3124 = vadd.f32 0.0, %v3123
      %v3125 = vpop.f32.mrf.mxu0
      %3126 = vmatprep.mubr.f32.mxu0 0.0
      %3127 = vmatmul.mubr.f32.gmra.mxu0 %v2946
      %v3128 = vpop.f32.mrf.mxu0
      %v3129 = vadd.f32 0.0, %v3128
      %v3130 = vpop.f32.mrf.mxu0
      %3131 = vmatprep.mubr.f32.mxu0 0.0
      %3132 = vmatmul.mubr.f32.gmra.mxu0 %v2949
      %v3133 = vpop.f32.mrf.mxu0
      %v3134 = vadd.f32 0.0, %v3133
      %v3135 = vpop.f32.mrf.mxu0
      %3136 = vmatprep.mubr.f32.mxu0 0.0
      %3137 = vmatmul.mubr.f32.gmra.mxu0 %v2952
      %v3138 = vpop.f32.mrf.mxu0
      %v3139 = vadd.f32 0.0, %v3138
      %v3140 = vpop.f32.mrf.mxu0
      %3141 = vmatprep.mubr.f32.mxu0 0.0
      %3142 = vmatmul.mubr.f32.gmra.mxu0 %v2955
      %v3143 = vpop.f32.mrf.mxu0
      %v3144 = vadd.f32 0.0, %v3143
      %v3145 = vpop.f32.mrf.mxu0
      %3146 = vmatprep.mubr.f32.mxu0 0.0
      %3147 = vmatmul.mubr.f32.gmra.mxu0 %v2958
      %v3148 = vpop.f32.mrf.mxu0
      %v3149 = vadd.f32 0.0, %v3148
      %v3150 = vpop.f32.mrf.mxu0
      %3151 = vmatprep.mubr.f32.mxu0 0.0
      %3152 = vmatmul.mubr.f32.gmra.mxu0 %v2961
      %v3153 = vpop.f32.mrf.mxu0
      %v3154 = vadd.f32 0.0, %v3153
      %v3155 = vpop.f32.mrf.mxu0
      %3156 = vmatprep.mubr.f32.mxu0 0.0
      %3157 = vmatmul.mubr.f32.gmra.mxu0 %v2964
      %v3158 = vpop.f32.mrf.mxu0
      %v3159 = vadd.f32 0.0, %v3158
      %v3160 = vpop.f32.mrf.mxu0
      %3161 = vmatprep.mubr.f32.mxu0 0.0
      %3162 = vmatmul.mubr.f32.gmra.mxu0 %v2967
      %v3163 = vpop.f32.mrf.mxu0
      %v3164 = vadd.f32 0.0, %v3163
      %v3165 = vpop.f32.mrf.mxu0
      %3166 = vmatprep.mubr.f32.mxu0 0.0
      %3167 = vmatmul.mubr.f32.gmra.mxu0 %v2970
      %v3168 = vpop.f32.mrf.mxu0
      %v3169 = vadd.f32 0.0, %v3168
      %v3170 = vpop.f32.mrf.mxu0
      %3171 = vmatprep.mubr.f32.mxu0 0.0
      %3172 = vmatmul.mubr.f32.gmra.mxu0 %v2973
      %v3173 = vpop.f32.mrf.mxu0
      %v3174 = vadd.f32 0.0, %v3173
      %v3175 = vpop.f32.mrf.mxu0
      %3176 = vmatprep.mubr.f32.mxu0 0.0
      %3177 = vmatmul.mubr.f32.gmra.mxu0 %v2976
      %v3178 = vpop.f32.mrf.mxu0
      %v3179 = vadd.f32 0.0, %v3178
      %v3180 = vpop.f32.mrf.mxu0
      %3181 = vmatprep.mubr.f32.mxu0 0.0
      %3182 = vmatmul.mubr.f32.gmra.mxu0 %v2979
      %v3183 = vpop.f32.mrf.mxu0
      %v3184 = vadd.f32 0.0, %v3183
      %v3185 = vpop.f32.mrf.mxu0
      %3186 = vmatprep.mubr.f32.mxu0 0.0
      %3187 = vmatmul.mubr.f32.gmra.mxu0 %v2982
      %v3188 = vpop.f32.mrf.mxu0
      %v3189 = vadd.f32 0.0, %v3188
      %v3190 = vpop.f32.mrf.mxu0
      %3191 = vmatprep.mubr.f32.mxu0 0.0
      %3192 = vmatmul.mubr.f32.gmra.mxu0 %v2985
      %v3193 = vpop.f32.mrf.mxu0
      %v3194 = vadd.f32 0.0, %v3193
      %v3195 = vpop.f32.mrf.mxu0
      %3196 = vmatprep.mubr.f32.mxu0 0.0
      %3197 = vmatmul.mubr.f32.gmra.mxu0 %v2988
      %v3198 = vpop.f32.mrf.mxu0
      %v3199 = vadd.f32 0.0, %v3198
      %v3200 = vpop.f32.mrf.mxu0
      %3201 = vmatprep.mubr.f32.mxu0 0.0
      %3202 = vmatmul.mubr.f32.gmra.mxu0 %v2991
      %v3203 = vpop.f32.mrf.mxu0
      %v3204 = vadd.f32 0.0, %v3203
      %v3205 = vpop.f32.mrf.mxu0
      %3206 = vmatprep.mubr.f32.mxu0 0.0
      %3207 = vmatmul.mubr.f32.gmra.mxu0 %v2994
      %v3208 = vpop.f32.mrf.mxu0
      %v3209 = vadd.f32 0.0, %v3208
      %v3210 = vpop.f32.mrf.mxu0
      %3211 = vmatprep.mubr.f32.mxu0 0.0
      %3212 = vmatmul.mubr.f32.gmra.mxu0 %v2997
      %v3213 = vpop.f32.mrf.mxu0
      %v3214 = vadd.f32 0.0, %v3213
      %v3215 = vpop.f32.mrf.mxu0
      %3216 = vmatprep.mubr.f32.mxu0 0.0
      %3217 = vmatmul.mubr.f32.gmra.mxu0 %v3000
      %v3218 = vpop.f32.mrf.mxu0
      %v3219 = vadd.f32 0.0, %v3218
      %v3220 = vpop.f32.mrf.mxu0
      %3221 = vmatprep.mubr.f32.mxu0 0.0
      %3222 = vmatmul.mubr.f32.gmra.mxu0 %v3003
      %v3223 = vpop.f32.mrf.mxu0
      %v3224 = vadd.f32 0.0, %v3223
      %v3225 = vpop.f32.mrf.mxu0
      %3226 = vmatprep.mubr.f32.mxu0 0.0
      %3227 = vmatmul.mubr.f32.gmra.mxu0 %v3006
      %v3228 = vpop.f32.mrf.mxu0
      %v3229 = vadd.f32 0.0, %v3228
      %v3230 = vpop.f32.mrf.mxu0
      %3231 = vmatprep.mubr.f32.mxu0 0.0
      %3232 = vmatmul.mubr.f32.gmra.mxu0 %v3009
      %v3233 = vpop.f32.mrf.mxu0
      %v3234 = vadd.f32 0.0, %v3233
      %v3235 = vpop.f32.mrf.mxu0
      %3236 = vmatprep.mubr.f32.mxu0 0.0
      %3237 = vmatmul.mubr.f32.gmra.mxu0 %v3012
      %v3238 = vpop.f32.mrf.mxu0
      %v3239 = vadd.f32 0.0, %v3238
      %v3240 = vpop.f32.mrf.mxu0
      %3241 = vdwg.mxu0
      %v3242 = vadd.f32 %v2852, %v3084
      %v3243 = vadd.f32 %v2853, %v3089
      %v3244 = vadd.f32 %v2854, %v3094
      %v3245 = vadd.f32 %v2855, %v3099
      %v3246 = vadd.f32 %v2856, %v3104
      %v3247 = vadd.f32 %v2857, %v3109
      %v3248 = vadd.f32 %v2858, %v3114
      %v3249 = vadd.f32 %v2859, %v3119
      %v3250 = vadd.f32 %v2860, %v3124
      %v3251 = vadd.f32 %v2861, %v3129
      %v3252 = vadd.f32 %v2862, %v3134
      %v3253 = vadd.f32 %v2863, %v3139
      %v3254 = vadd.f32 %v2864, %v3144
      %v3255 = vadd.f32 %v2865, %v3149
      %v3256 = vadd.f32 %v2866, %v3154
      %v3257 = vadd.f32 %v2867, %v3159
      %v3258 = vadd.f32 %v2868, %v3164
      %v3259 = vadd.f32 %v2869, %v3169
      %v3260 = vadd.f32 %v2870, %v3174
      %v3261 = vadd.f32 %v2871, %v3179
      %v3262 = vadd.f32 %v2872, %v3184
      %v3263 = vadd.f32 %v2873, %v3189
      %v3264 = vadd.f32 %v2874, %v3194
      %v3265 = vadd.f32 %v2875, %v3199
      %v3266 = vadd.f32 %v2876, %v3204
      %v3267 = vadd.f32 %v2877, %v3209
      %v3268 = vadd.f32 %v2878, %v3214
      %v3269 = vadd.f32 %v2879, %v3219
      %v3270 = vadd.f32 %v2880, %v3224
      %v3271 = vadd.f32 %v2881, %v3229
      %v3272 = vadd.f32 %v2882, %v3234
      %v3273 = vadd.f32 %v2883, %v3239
      %v3274 = vld [vmem:[%s2493 + $0x2] sm:$0xff]
      %v3275 = vld [vmem:[%s2493 + $0xa] sm:$0xff]
      %v3276 = vld [vmem:[%s2493 + $0x1a] sm:$0xff]
      %v3277 = vld [vmem:[%s2493 + $0x22] sm:$0xff]
      %v3278 = vld [vmem:[%s2493 + $0x32] sm:$0xff]
      %v3279 = vld [vmem:[%s2493 + $0x3a] sm:$0xff]
      %v3280 = vld [vmem:[%s2493 + $0x4a] sm:$0xff]
      %v3281 = vld [vmem:[%s2493 + $0x52] sm:$0xff]
      %v3282 = vld [vmem:[%s2493 + $0x62] sm:$0xff]
      %v3283 = vld [vmem:[%s2493 + $0x6a] sm:$0xff]
      %v3284 = vld [vmem:[%s2493 + $0x7a] sm:$0xff]
      %v3285 = vld [vmem:[%s2493 + $0x82] sm:$0xff]
      %v3286 = vld [vmem:[%s2493 + $0x92] sm:$0xff]
      %v3287 = vld [vmem:[%s2493 + $0x9a] sm:$0xff]
      %v3288 = vld [vmem:[%s2493 + $0xaa] sm:$0xff]
      %v3289 = vld [vmem:[%s2493 + $0xb2] sm:$0xff]
      %v3290 = vld [vmem:[%s2493 + $0xc2] sm:$0xff]
      %v3291 = vld [vmem:[%s2493 + $0xca] sm:$0xff]
      %v3292 = vld [vmem:[%s2493 + $0xda] sm:$0xff]
      %v3293 = vld [vmem:[%s2493 + $0xe2] sm:$0xff]
      %v3294 = vld [vmem:[%s2493 + $0xf2] sm:$0xff]
      %v3295 = vld [vmem:[%s2493 + $0xfa] sm:$0xff]
      %v3296 = vld [vmem:[%s2493 + $0x10a] sm:$0xff]
      %v3297 = vld [vmem:[%s2493 + $0x112] sm:$0xff]
      %v3298 = vld [vmem:[%s2493 + $0x122] sm:$0xff]
      %v3299 = vld [vmem:[%s2493 + $0x12a] sm:$0xff]
      %v3300 = vld [vmem:[%s2493 + $0x13a] sm:$0xff]
      %v3301 = vld [vmem:[%s2493 + $0x142] sm:$0xff]
      %v3302 = vld [vmem:[%s2493 + $0x152] sm:$0xff]
      %v3303 = vld [vmem:[%s2493 + $0x15a] sm:$0xff]
      %v3304 = vld [vmem:[%s2493 + $0x16a] sm:$0xff]
      %v3305 = vld [vmem:[%s2493 + $0x172] sm:$0xff]
      %s3306 = scalar_lea.vmem %s1, 32
      %v3307 = vld [vmem:[%s3306] sm:$0xf]
      %v3309 = vsel %vm278, %v3274, 0
      %v3312 = vsel %vm278, %v3275, 0
      %v3315 = vsel %vm278, %v3276, 0
      %v3318 = vsel %vm278, %v3277, 0
      %v3321 = vsel %vm278, %v3278, 0
      %v3324 = vsel %vm278, %v3279, 0
      %v3327 = vsel %vm278, %v3280, 0
      %v3330 = vsel %vm278, %v3281, 0
      %v3333 = vsel %vm278, %v3282, 0
      %v3336 = vsel %vm278, %v3283, 0
      %v3339 = vsel %vm278, %v3284, 0
      %v3342 = vsel %vm278, %v3285, 0
      %v3345 = vsel %vm278, %v3286, 0
      %v3348 = vsel %vm278, %v3287, 0
      %v3351 = vsel %vm278, %v3288, 0
      %v3354 = vsel %vm278, %v3289, 0
      %v3357 = vsel %vm278, %v3290, 0
      %v3360 = vsel %vm278, %v3291, 0
      %v3363 = vsel %vm278, %v3292, 0
      %v3366 = vsel %vm278, %v3293, 0
      %v3369 = vsel %vm278, %v3294, 0
      %v3372 = vsel %vm278, %v3295, 0
      %v3375 = vsel %vm278, %v3296, 0
      %v3378 = vsel %vm278, %v3297, 0
      %v3381 = vsel %vm278, %v3298, 0
      %v3384 = vsel %vm278, %v3299, 0
      %v3387 = vsel %vm278, %v3300, 0
      %v3390 = vsel %vm278, %v3301, 0
      %v3393 = vsel %vm278, %v3302, 0
      %v3396 = vsel %vm278, %v3303, 0
      %v3399 = vsel %vm278, %v3304, 0
      %v3402 = vsel %vm278, %v3305, 0
      %v3405 = vsel %vm375, %v3307, 0
      %3407 = vmatprep.subr.mxu0 0.0
      %3408 = vmatpush1.msra.mxu0 0.0
      %3409 = vmatprep.subr.mxu0 0.0
      %3410 = vmatpush1.msra.mxu0 0.0
      %3411 = vmatprep.subr.mxu0 0.0
      %3412 = vmatpush1.msra.mxu0 0.0
      %3413 = vmatprep.subr.mxu0 0.0
      %3414 = vmatpush1.msra.mxu0 0.0
      %3415 = vmatprep.subr.mxu0 0.0
      %3416 = vmatpush1.msra.mxu0 0.0
      %3417 = vmatprep.subr.mxu0 0.0
      %3418 = vmatpush1.msra.mxu0 0.0
      %3419 = vmatprep.subr.mxu0 0.0
      %3420 = vmatpush1.msra.mxu0 0.0
      %3421 = vmatprep.subr.mxu0 0.0
      %3422 = vmatpush1.msra.mxu0 0.0
      %3423 = vmatprep.subr.mxu0 0.0
      %3424 = vmatpush1.msra.mxu0 0.0
      %3425 = vmatprep.subr.mxu0 0.0
      %3426 = vmatpush1.msra.mxu0 0.0
      %3427 = vmatprep.subr.mxu0 0.0
      %3428 = vmatpush1.msra.mxu0 0.0
      %3429 = vmatprep.subr.mxu0 0.0
      %3430 = vmatpush1.msra.mxu0 0.0
      %3431 = vmatprep.subr.mxu0 0.0
      %3432 = vmatpush1.msra.mxu0 0.0
      %3433 = vmatprep.subr.mxu0 0.0
      %3434 = vmatpush1.msra.mxu0 0.0
      %3435 = vmatprep.subr.mxu0 0.0
      %3436 = vmatpush1.msra.mxu0 0.0
      %3437 = vmatprep.subr.mxu0 0.0
      %3438 = vmatpush1.msra.mxu0 %v3405
      %3439 = vmatprep.subr.mxu0 0.0
      %3440 = vmatpush2.msra.mxu0 0.0
      %3441 = vmatprep.subr.mxu0 0.0
      %3442 = vmatpush2.msra.mxu0 0.0
      %3443 = vmatprep.subr.mxu0 0.0
      %3444 = vmatpush2.msra.mxu0 0.0
      %3445 = vmatprep.subr.mxu0 0.0
      %3446 = vmatpush2.msra.mxu0 0.0
      %3447 = vmatprep.subr.mxu0 0.0
      %3448 = vmatpush2.msra.mxu0 0.0
      %3449 = vmatprep.subr.mxu0 0.0
      %3450 = vmatpush2.msra.mxu0 0.0
      %3451 = vmatprep.subr.mxu0 0.0
      %3452 = vmatpush2.msra.mxu0 0.0
      %3453 = vmatprep.subr.mxu0 0.0
      %3454 = vmatpush2.msra.mxu0 0.0
      %3455 = vmatprep.subr.mxu0 0.0
      %3456 = vmatpush2.msra.mxu0 0.0
      %3457 = vmatprep.subr.mxu0 0.0
      %3458 = vmatpush2.msra.mxu0 0.0
      %3459 = vmatprep.subr.mxu0 0.0
      %3460 = vmatpush2.msra.mxu0 0.0
      %3461 = vmatprep.subr.mxu0 0.0
      %3462 = vmatpush2.msra.mxu0 0.0
      %3463 = vmatprep.subr.mxu0 0.0
      %3464 = vmatpush2.msra.mxu0 0.0
      %3465 = vmatprep.subr.mxu0 0.0
      %3466 = vmatpush2.msra.mxu0 0.0
      %3467 = vmatprep.subr.mxu0 0.0
      %3468 = vmatpush2.msra.mxu0 0.0
      %3469 = vmatprep.subr.mxu0 0.0
      %3470 = vmatpush2.msra.mxu0 0.0
      %3471 = vmatprep.mubr.f32.mxu0 0.0
      %3472 = vmatmul.mubr.f32.gmra.mxu0 %v3309
      %v3473 = vpop.f32.mrf.mxu0
      %v3474 = vadd.f32 0.0, %v3473
      %v3475 = vpop.f32.mrf.mxu0
      %3476 = vmatprep.mubr.f32.mxu0 0.0
      %3477 = vmatmul.mubr.f32.gmra.mxu0 %v3312
      %v3478 = vpop.f32.mrf.mxu0
      %v3479 = vadd.f32 0.0, %v3478
      %v3480 = vpop.f32.mrf.mxu0
      %3481 = vmatprep.mubr.f32.mxu0 0.0
      %3482 = vmatmul.mubr.f32.gmra.mxu0 %v3315
      %v3483 = vpop.f32.mrf.mxu0
      %v3484 = vadd.f32 0.0, %v3483
      %v3485 = vpop.f32.mrf.mxu0
      %3486 = vmatprep.mubr.f32.mxu0 0.0
      %3487 = vmatmul.mubr.f32.gmra.mxu0 %v3318
      %v3488 = vpop.f32.mrf.mxu0
      %v3489 = vadd.f32 0.0, %v3488
      %v3490 = vpop.f32.mrf.mxu0
      %3491 = vmatprep.mubr.f32.mxu0 0.0
      %3492 = vmatmul.mubr.f32.gmra.mxu0 %v3321
      %v3493 = vpop.f32.mrf.mxu0
      %v3494 = vadd.f32 0.0, %v3493
      %v3495 = vpop.f32.mrf.mxu0
      %3496 = vmatprep.mubr.f32.mxu0 0.0
      %3497 = vmatmul.mubr.f32.gmra.mxu0 %v3324
      %v3498 = vpop.f32.mrf.mxu0
      %v3499 = vadd.f32 0.0, %v3498
      %v3500 = vpop.f32.mrf.mxu0
      %3501 = vmatprep.mubr.f32.mxu0 0.0
      %3502 = vmatmul.mubr.f32.gmra.mxu0 %v3327
      %v3503 = vpop.f32.mrf.mxu0
      %v3504 = vadd.f32 0.0, %v3503
      %v3505 = vpop.f32.mrf.mxu0
      %3506 = vmatprep.mubr.f32.mxu0 0.0
      %3507 = vmatmul.mubr.f32.gmra.mxu0 %v3330
      %v3508 = vpop.f32.mrf.mxu0
      %v3509 = vadd.f32 0.0, %v3508
      %v3510 = vpop.f32.mrf.mxu0
      %3511 = vmatprep.mubr.f32.mxu0 0.0
      %3512 = vmatmul.mubr.f32.gmra.mxu0 %v3333
      %v3513 = vpop.f32.mrf.mxu0
      %v3514 = vadd.f32 0.0, %v3513
      %v3515 = vpop.f32.mrf.mxu0
      %3516 = vmatprep.mubr.f32.mxu0 0.0
      %3517 = vmatmul.mubr.f32.gmra.mxu0 %v3336
      %v3518 = vpop.f32.mrf.mxu0
      %v3519 = vadd.f32 0.0, %v3518
      %v3520 = vpop.f32.mrf.mxu0
      %3521 = vmatprep.mubr.f32.mxu0 0.0
      %3522 = vmatmul.mubr.f32.gmra.mxu0 %v3339
      %v3523 = vpop.f32.mrf.mxu0
      %v3524 = vadd.f32 0.0, %v3523
      %v3525 = vpop.f32.mrf.mxu0
      %3526 = vmatprep.mubr.f32.mxu0 0.0
      %3527 = vmatmul.mubr.f32.gmra.mxu0 %v3342
      %v3528 = vpop.f32.mrf.mxu0
      %v3529 = vadd.f32 0.0, %v3528
      %v3530 = vpop.f32.mrf.mxu0
      %3531 = vmatprep.mubr.f32.mxu0 0.0
      %3532 = vmatmul.mubr.f32.gmra.mxu0 %v3345
      %v3533 = vpop.f32.mrf.mxu0
      %v3534 = vadd.f32 0.0, %v3533
      %v3535 = vpop.f32.mrf.mxu0
      %3536 = vmatprep.mubr.f32.mxu0 0.0
      %3537 = vmatmul.mubr.f32.gmra.mxu0 %v3348
      %v3538 = vpop.f32.mrf.mxu0
      %v3539 = vadd.f32 0.0, %v3538
      %v3540 = vpop.f32.mrf.mxu0
      %3541 = vmatprep.mubr.f32.mxu0 0.0
      %3542 = vmatmul.mubr.f32.gmra.mxu0 %v3351
      %v3543 = vpop.f32.mrf.mxu0
      %v3544 = vadd.f32 0.0, %v3543
      %v3545 = vpop.f32.mrf.mxu0
      %3546 = vmatprep.mubr.f32.mxu0 0.0
      %3547 = vmatmul.mubr.f32.gmra.mxu0 %v3354
      %v3548 = vpop.f32.mrf.mxu0
      %v3549 = vadd.f32 0.0, %v3548
      %v3550 = vpop.f32.mrf.mxu0
      %3551 = vmatprep.mubr.f32.mxu0 0.0
      %3552 = vmatmul.mubr.f32.gmra.mxu0 %v3357
      %v3553 = vpop.f32.mrf.mxu0
      %v3554 = vadd.f32 0.0, %v3553
      %v3555 = vpop.f32.mrf.mxu0
      %3556 = vmatprep.mubr.f32.mxu0 0.0
      %3557 = vmatmul.mubr.f32.gmra.mxu0 %v3360
      %v3558 = vpop.f32.mrf.mxu0
      %v3559 = vadd.f32 0.0, %v3558
      %v3560 = vpop.f32.mrf.mxu0
      %3561 = vmatprep.mubr.f32.mxu0 0.0
      %3562 = vmatmul.mubr.f32.gmra.mxu0 %v3363
      %v3563 = vpop.f32.mrf.mxu0
      %v3564 = vadd.f32 0.0, %v3563
      %v3565 = vpop.f32.mrf.mxu0
      %3566 = vmatprep.mubr.f32.mxu0 0.0
      %3567 = vmatmul.mubr.f32.gmra.mxu0 %v3366
      %v3568 = vpop.f32.mrf.mxu0
      %v3569 = vadd.f32 0.0, %v3568
      %v3570 = vpop.f32.mrf.mxu0
      %3571 = vmatprep.mubr.f32.mxu0 0.0
      %3572 = vmatmul.mubr.f32.gmra.mxu0 %v3369
      %v3573 = vpop.f32.mrf.mxu0
      %v3574 = vadd.f32 0.0, %v3573
      %v3575 = vpop.f32.mrf.mxu0
      %3576 = vmatprep.mubr.f32.mxu0 0.0
      %3577 = vmatmul.mubr.f32.gmra.mxu0 %v3372
      %v3578 = vpop.f32.mrf.mxu0
      %v3579 = vadd.f32 0.0, %v3578
      %v3580 = vpop.f32.mrf.mxu0
      %3581 = vmatprep.mubr.f32.mxu0 0.0
      %3582 = vmatmul.mubr.f32.gmra.mxu0 %v3375
      %v3583 = vpop.f32.mrf.mxu0
      %v3584 = vadd.f32 0.0, %v3583
      %v3585 = vpop.f32.mrf.mxu0
      %3586 = vmatprep.mubr.f32.mxu0 0.0
      %3587 = vmatmul.mubr.f32.gmra.mxu0 %v3378
      %v3588 = vpop.f32.mrf.mxu0
      %v3589 = vadd.f32 0.0, %v3588
      %v3590 = vpop.f32.mrf.mxu0
      %3591 = vmatprep.mubr.f32.mxu0 0.0
      %3592 = vmatmul.mubr.f32.gmra.mxu0 %v3381
      %v3593 = vpop.f32.mrf.mxu0
      %v3594 = vadd.f32 0.0, %v3593
      %v3595 = vpop.f32.mrf.mxu0
      %3596 = vmatprep.mubr.f32.mxu0 0.0
      %3597 = vmatmul.mubr.f32.gmra.mxu0 %v3384
      %v3598 = vpop.f32.mrf.mxu0
      %v3599 = vadd.f32 0.0, %v3598
      %v3600 = vpop.f32.mrf.mxu0
      %3601 = vmatprep.mubr.f32.mxu0 0.0
      %3602 = vmatmul.mubr.f32.gmra.mxu0 %v3387
      %v3603 = vpop.f32.mrf.mxu0
      %v3604 = vadd.f32 0.0, %v3603
      %v3605 = vpop.f32.mrf.mxu0
      %3606 = vmatprep.mubr.f32.mxu0 0.0
      %3607 = vmatmul.mubr.f32.gmra.mxu0 %v3390
      %v3608 = vpop.f32.mrf.mxu0
      %v3609 = vadd.f32 0.0, %v3608
      %v3610 = vpop.f32.mrf.mxu0
      %3611 = vmatprep.mubr.f32.mxu0 0.0
      %3612 = vmatmul.mubr.f32.gmra.mxu0 %v3393
      %v3613 = vpop.f32.mrf.mxu0
      %v3614 = vadd.f32 0.0, %v3613
      %v3615 = vpop.f32.mrf.mxu0
      %3616 = vmatprep.mubr.f32.mxu0 0.0
      %3617 = vmatmul.mubr.f32.gmra.mxu0 %v3396
      %v3618 = vpop.f32.mrf.mxu0
      %v3619 = vadd.f32 0.0, %v3618
      %v3620 = vpop.f32.mrf.mxu0
      %3621 = vmatprep.mubr.f32.mxu0 0.0
      %3622 = vmatmul.mubr.f32.gmra.mxu0 %v3399
      %v3623 = vpop.f32.mrf.mxu0
      %v3624 = vadd.f32 0.0, %v3623
      %v3625 = vpop.f32.mrf.mxu0
      %3626 = vmatprep.mubr.f32.mxu0 0.0
      %3627 = vmatmul.mubr.f32.gmra.mxu0 %v3402
      %v3628 = vpop.f32.mrf.mxu0
      %v3629 = vadd.f32 0.0, %v3628
      %v3630 = vpop.f32.mrf.mxu0
      %3631 = vdwg.mxu0
      %v3632 = vadd.f32 %v3242, %v3474
      %v3633 = vadd.f32 %v3243, %v3479
      %v3634 = vadd.f32 %v3244, %v3484
      %v3635 = vadd.f32 %v3245, %v3489
      %v3636 = vadd.f32 %v3246, %v3494
      %v3637 = vadd.f32 %v3247, %v3499
      %v3638 = vadd.f32 %v3248, %v3504
      %v3639 = vadd.f32 %v3249, %v3509
      %v3640 = vadd.f32 %v3250, %v3514
      %v3641 = vadd.f32 %v3251, %v3519
      %v3642 = vadd.f32 %v3252, %v3524
      %v3643 = vadd.f32 %v3253, %v3529
      %v3644 = vadd.f32 %v3254, %v3534
      %v3645 = vadd.f32 %v3255, %v3539
      %v3646 = vadd.f32 %v3256, %v3544
      %v3647 = vadd.f32 %v3257, %v3549
      %v3648 = vadd.f32 %v3258, %v3554
      %v3649 = vadd.f32 %v3259, %v3559
      %v3650 = vadd.f32 %v3260, %v3564
      %v3651 = vadd.f32 %v3261, %v3569
      %v3652 = vadd.f32 %v3262, %v3574
      %v3653 = vadd.f32 %v3263, %v3579
      %v3654 = vadd.f32 %v3264, %v3584
      %v3655 = vadd.f32 %v3265, %v3589
      %v3656 = vadd.f32 %v3266, %v3594
      %v3657 = vadd.f32 %v3267, %v3599
      %v3658 = vadd.f32 %v3268, %v3604
      %v3659 = vadd.f32 %v3269, %v3609
      %v3660 = vadd.f32 %v3270, %v3614
      %v3661 = vadd.f32 %v3271, %v3619
      %v3662 = vadd.f32 %v3272, %v3624
      %v3663 = vadd.f32 %v3273, %v3629
      %3664 = vst [vmem:[%s198] sm:$0xff] %v3632
      %3665 = vst [vmem:[%s198 + $0x8] sm:$0xff] %v3633
      %3666 = vst [vmem:[%s198 + $0x10] sm:$0xff] %v3634
      %3667 = vst [vmem:[%s198 + $0x18] sm:$0xff] %v3635
      %3668 = vst [vmem:[%s198 + $0x20] sm:$0xff] %v3636
      %3669 = vst [vmem:[%s198 + $0x28] sm:$0xff] %v3637
      %3670 = vst [vmem:[%s198 + $0x30] sm:$0xff] %v3638
      %3671 = vst [vmem:[%s198 + $0x38] sm:$0xff] %v3639
      %3672 = vst [vmem:[%s198 + $0x40] sm:$0xff] %v3640
      %3673 = vst [vmem:[%s198 + $0x48] sm:$0xff] %v3641
      %3674 = vst [vmem:[%s198 + $0x50] sm:$0xff] %v3642
      %3675 = vst [vmem:[%s198 + $0x58] sm:$0xff] %v3643
      %3676 = vst [vmem:[%s198 + $0x60] sm:$0xff] %v3644
      %3677 = vst [vmem:[%s198 + $0x68] sm:$0xff] %v3645
      %3678 = vst [vmem:[%s198 + $0x70] sm:$0xff] %v3646
      %3679 = vst [vmem:[%s198 + $0x78] sm:$0xff] %v3647
      %3680 = vst [vmem:[%s198 + $0x80] sm:$0xff] %v3648
      %3681 = vst [vmem:[%s198 + $0x88] sm:$0xff] %v3649
      %3682 = vst [vmem:[%s198 + $0x90] sm:$0xff] %v3650
      %3683 = vst [vmem:[%s198 + $0x98] sm:$0xff] %v3651
      %3684 = vst [vmem:[%s198 + $0xa0] sm:$0xff] %v3652
      %3685 = vst [vmem:[%s198 + $0xa8] sm:$0xff] %v3653
      %3686 = vst [vmem:[%s198 + $0xb0] sm:$0xff] %v3654
      %3687 = vst [vmem:[%s198 + $0xb8] sm:$0xff] %v3655
      %3688 = vst [vmem:[%s198 + $0xc0] sm:$0xff] %v3656
      %3689 = vst [vmem:[%s198 + $0xc8] sm:$0xff] %v3657
      %3690 = vst [vmem:[%s198 + $0xd0] sm:$0xff] %v3658
      %3691 = vst [vmem:[%s198 + $0xd8] sm:$0xff] %v3659
      %3692 = vst [vmem:[%s198 + $0xe0] sm:$0xff] %v3660
      %3693 = vst [vmem:[%s198 + $0xe8] sm:$0xff] %v3661
      %3694 = vst [vmem:[%s198 + $0xf0] sm:$0xff] %v3662
      %3695 = vst [vmem:[%s198 + $0xf8] sm:$0xff] %v3663
      %v3696 = vadd.f32 %v3632, %v3633
      %v3697 = vadd.f32 %v3696, %v3634
      %v3698 = vadd.f32 %v3697, %v3635
      %v3699 = vadd.f32 %v3698, %v3636
      %v3700 = vadd.f32 %v3699, %v3637
      %v3701 = vadd.f32 %v3700, %v3638
      %v3702 = vadd.f32 %v3701, %v3639
      %v3703 = vadd.f32 %v3702, %v3640
      %v3704 = vadd.f32 %v3703, %v3641
      %v3705 = vadd.f32 %v3704, %v3642
      %v3706 = vadd.f32 %v3705, %v3643
      %v3707 = vadd.f32 %v3706, %v3644
      %v3708 = vadd.f32 %v3707, %v3645
      %v3709 = vadd.f32 %v3708, %v3646
      %v3710 = vadd.f32 %v3709, %v3647
      %v3711 = vadd.f32 %v3710, %v3648
      %v3712 = vadd.f32 %v3711, %v3649
      %v3713 = vadd.f32 %v3712, %v3650
      %v3714 = vadd.f32 %v3713, %v3651
      %v3715 = vadd.f32 %v3714, %v3652
      %v3716 = vadd.f32 %v3715, %v3653
      %v3717 = vadd.f32 %v3716, %v3654
      %v3718 = vadd.f32 %v3717, %v3655
      %v3719 = vadd.f32 %v3718, %v3656
      %v3720 = vadd.f32 %v3719, %v3657
      %v3721 = vadd.f32 %v3720, %v3658
      %v3722 = vadd.f32 %v3721, %v3659
      %v3723 = vadd.f32 %v3722, %v3660
      %v3724 = vadd.f32 %v3723, %v3661
      %v3725 = vadd.f32 %v3724, %v3662
      %v3726 = vadd.f32 %v3725, %v3663
      %v3727 = vrot.slane %v3726, 4
      %v3728 = vadd.f32 %v3726, %v3727
      %v3729 = vrot.slane %v3728, 2
      %v3730 = vadd.f32 %v3728, %v3729
      %v3731 = vrot.slane %v3730, 1
      %v3732 = vadd.f32 %v3730, %v3731
      %3733 = vst [vmem:[%s207] sm:$0x1] %v3732
      %v3734 = vmul.f32 %v3632, %v3632
      %v3735 = vmul.f32 %v3633, %v3633
      %v3736 = vmul.f32 %v3634, %v3634
      %v3737 = vmul.f32 %v3635, %v3635
      %v3738 = vmul.f32 %v3636, %v3636
      %v3739 = vmul.f32 %v3637, %v3637
      %v3740 = vmul.f32 %v3638, %v3638
      %v3741 = vmul.f32 %v3639, %v3639
      %v3742 = vmul.f32 %v3640, %v3640
      %v3743 = vmul.f32 %v3641, %v3641
      %v3744 = vmul.f32 %v3642, %v3642
      %v3745 = vmul.f32 %v3643, %v3643
      %v3746 = vmul.f32 %v3644, %v3644
      %v3747 = vmul.f32 %v3645, %v3645
      %v3748 = vmul.f32 %v3646, %v3646
      %v3749 = vmul.f32 %v3647, %v3647
      %v3750 = vmul.f32 %v3648, %v3648
      %v3751 = vmul.f32 %v3649, %v3649
      %v3752 = vmul.f32 %v3650, %v3650
      %v3753 = vmul.f32 %v3651, %v3651
      %v3754 = vmul.f32 %v3652, %v3652
      %v3755 = vmul.f32 %v3653, %v3653
      %v3756 = vmul.f32 %v3654, %v3654
      %v3757 = vmul.f32 %v3655, %v3655
      %v3758 = vmul.f32 %v3656, %v3656
      %v3759 = vmul.f32 %v3657, %v3657
      %v3760 = vmul.f32 %v3658, %v3658
      %v3761 = vmul.f32 %v3659, %v3659
      %v3762 = vmul.f32 %v3660, %v3660
      %v3763 = vmul.f32 %v3661, %v3661
      %v3764 = vmul.f32 %v3662, %v3662
      %v3765 = vmul.f32 %v3663, %v3663
      %v3766 = vadd.f32 %v3734, %v3735
      %v3767 = vadd.f32 %v3766, %v3736
      %v3768 = vadd.f32 %v3767, %v3737
      %v3769 = vadd.f32 %v3768, %v3738
      %v3770 = vadd.f32 %v3769, %v3739
      %v3771 = vadd.f32 %v3770, %v3740
      %v3772 = vadd.f32 %v3771, %v3741
      %v3773 = vadd.f32 %v3772, %v3742
      %v3774 = vadd.f32 %v3773, %v3743
      %v3775 = vadd.f32 %v3774, %v3744
      %v3776 = vadd.f32 %v3775, %v3745
      %v3777 = vadd.f32 %v3776, %v3746
      %v3778 = vadd.f32 %v3777, %v3747
      %v3779 = vadd.f32 %v3778, %v3748
      %v3780 = vadd.f32 %v3779, %v3749
      %v3781 = vadd.f32 %v3780, %v3750
      %v3782 = vadd.f32 %v3781, %v3751
      %v3783 = vadd.f32 %v3782, %v3752
      %v3784 = vadd.f32 %v3783, %v3753
      %v3785 = vadd.f32 %v3784, %v3754
      %v3786 = vadd.f32 %v3785, %v3755
      %v3787 = vadd.f32 %v3786, %v3756
      %v3788 = vadd.f32 %v3787, %v3757
      %v3789 = vadd.f32 %v3788, %v3758
      %v3790 = vadd.f32 %v3789, %v3759
      %v3791 = vadd.f32 %v3790, %v3760
      %v3792 = vadd.f32 %v3791, %v3761
      %v3793 = vadd.f32 %v3792, %v3762
      %v3794 = vadd.f32 %v3793, %v3763
      %v3795 = vadd.f32 %v3794, %v3764
      %v3796 = vadd.f32 %v3795, %v3765
      %v3797 = vrot.slane %v3796, 4
      %v3798 = vadd.f32 %v3796, %v3797
      %v3799 = vrot.slane %v3798, 2
      %v3800 = vadd.f32 %v3798, %v3799
      %v3801 = vrot.slane %v3800, 1
      %v3802 = vadd.f32 %v3800, %v3801
      %3803 = vst [vmem:[%s207 + $0x1] sm:$0x1] %v3802
      %s3804 = sadd.s32 %s19, %s20
      %s3805 = smul.u32 32, %s3804
      %p3806 = scmp.lt.s32.totalorder %s3805, 63
      %s3807 = scalar_select %p3806, %s3805, 63
      %s3808 = smul.addr %s3807, 8
      %s3809 = scalar_lea.vmem %s2, %s3808
      %p3810 = scmp.lt.s32.totalorder %s19, 1
      %s3811 = scalar_select %p3810, %s19, 1
      %p3812 = scmp.lt.s32.totalorder %s20, 0
      %s3813 = scalar_select %p3812, %s20, 0
      %s3814 = sadd.s32 %s3813, %s3811
      %s3815 = smul.addr %s3814, 2
      %s3816 = scalar_lea.vmem %s3, %s3815
      // Predicated region
      $region29: #{conv_block_forward.2} parent=27 // pred_check
        %p3817 = pneg %p94
      $region30: #{conv_block_forward.2} parent=27 // pred_check_branch
        %3819 = sbr.rel (%p3817) target = $region32
      $region31: #{conv_block_forward.2} parent=27 // pred_region
        %s3820 = sadd.s32 %s19, %s20
        %s3821 = smul.u32 32, %s3820
      $region32: #{conv_block_forward.2} parent=27 // pred_fallthru
        _
      // Predicated region
      $region33: #{conv_block_forward.2} parent=27 // pred_check
        %p3822 = pneg %p122
      $region34: #{conv_block_forward.2} parent=27 // pred_check_branch
        %3824 = sbr.rel (%p3822) target = $region36
      $region35: #{conv_block_forward.2} parent=27 // pred_region
        _
      $region36: #{conv_block_forward.2} parent=27 // pred_fallthru
        _
    $region28: #{conv_block_forward.2} parent=5 // pred_fallthru
      _
    %p3825 = scmp.le.s32.totalorder 2, %s10
    // Predicated region
    $region37: #{conv_block_forward.2} parent=5 // pred_check
      %p3826 = pneg %p3825
    $region38: #{conv_block_forward.2} parent=5 // pred_check_branch
      %3828 = sbr.rel (%p3826) target = $region40
    $region39: #{conv_block_forward.2} parent=5 // pred_region
      %s3829 = ssub.s32 %s10, 2
      // Predicated region
      $region41: #{conv_block_forward.2} parent=39 // pred_check
        %p3830 = pneg %p100
      $region42: #{conv_block_forward.2} parent=39 // pred_check_branch
        %3832 = sbr.rel (%p3830) target = $region44
      $region43: #{conv_block_forward.2} parent=39 // pred_region
        %s3833 = sadd.s32 %s21, %s22
        %s3834 = smul.u32 32, %s3833
        %p3835 = scmp.lt.s32.totalorder %s3834, 63
        %s3836 = scalar_select %p3835, %s3834, 63
        %s3837 = smul.addr %s3836, 8
        %s3838 = scalar_lea.vmem %s2, %s3837
      $region44: #{conv_block_forward.2} parent=39 // pred_fallthru
        _
      // Predicated region
      $region45: #{conv_block_forward.2} parent=39 // pred_check
        %p3839 = pneg %p128
      $region46: #{conv_block_forward.2} parent=39 // pred_check_branch
        %3841 = sbr.rel (%p3839) target = $region48
      $region47: #{conv_block_forward.2} parent=39 // pred_region
        %p3842 = scmp.lt.s32.totalorder %s21, 1
        %s3843 = scalar_select %p3842, %s21, 1
        %p3844 = scmp.lt.s32.totalorder %s22, 0
        %s3845 = scalar_select %p3844, %s22, 0
        %s3846 = sadd.s32 %s3845, %s3843
        %s3847 = smul.addr %s3846, 2
        %s3848 = scalar_lea.vmem %s3, %s3847
      $region48: #{conv_block_forward.2} parent=39 // pred_fallthru
        _
    $region40: #{conv_block_forward.2} parent=5 // pred_fallthru
      _
  $region6: #{conv_block_forward.2} parent=0 // loop_footer
    %s14 = sadd.s32 1, %s10
  $region7: #{conv_block_forward.2} parent=0 // loop_footer_branch
    %9 = sbr.rel target = $region3
  $region8: #{conv_block_forward.2} parent=0 // loop_exit
    _

</llo_original>
